<compile_context>
chip_gen: v7x
topology: tpu7x:2x2x1
jax: 0.10.0
libtpu: 0.0.40
codegen_flags: <defaults>
</compile_context>

<pallas_src>
import jax
import jax.numpy as jnp
from jax.experimental import pallas as pl
from jax.experimental.pallas import tpu as pltpu


def _round_up(x, m):
    return (x + m - 1) // m * m


def _cdiv(a, b):
    return (a + b - 1) // b


def cicr_kernel(
    # activations (per-batch-tile, bf16)
    claims_ref, claim_ev_ref, evidences_ref,
    # claim_intervention params (K = D_u@l2w+l2b and D_u@l3w precomputed)
    l1w_ref, l1b_ref, k_ref, l3w_ref, l3b_ref, dul3w_ref,
    # classifier_claim params
    cw1_ref, cb1_ref, cw2_ref, cb2_ref,
    # classifier_evidence params
    ew1_ref, eb1_ref, ew2_ref, eb2_ref,
    # classifier_fusion params
    fw1_ref, fb1_ref, fw2_ref, fb2_ref,
    # counterfactual constant (SMEM scalar)
    const_ref,
    # packed output slab:
    # [res_claim | res_evidence | res_final | counterfactual | TIE | pad]
    out_ref,
):
    f32 = jnp.float32
    bf16 = jnp.bfloat16

    nclass = cw2_ref.shape[1]
    tb, out_w = out_ref.shape

    def mm(x, w):
        # [m, k] @ [k, n] on the MXU: bf16 operands, f32 accumulation.
        return jax.lax.dot_general(
            x.astype(bf16), w.astype(bf16),
            dimension_numbers=(((1,), (0,)), ((), ())),
            preferred_element_type=f32)

    claims = claims_ref[...]                              # bf16 (tb, nfeat)

    # ---- claim_intervention ------------------------------------------------
    # L = linear1(claims); w = softmax(L K^T); claims_i = (claims + w D_u) W3 + b3
    L = mm(claims, l1w_ref[...]) + l1b_ref[...]           # (tb, proj) f32

    # L @ K^T with the transpose folded into the contraction.
    w_logits = jax.lax.dot_general(
        L.astype(bf16), k_ref[...],
        dimension_numbers=(((1,), (1,)), ((), ())),
        preferred_element_type=f32)                       # (tb, nclass)

    w_logits = w_logits - jnp.max(w_logits, axis=-1, keepdims=True)
    p = jnp.exp(w_logits)
    p = p / jnp.sum(p, axis=-1, keepdims=True)            # exact reciprocal

    # claims @ l3w does not depend on the softmax -> overlaps with it.
    claims_i = (mm(claims, l3w_ref[...])
                + mm(p, dul3w_ref[...])
                + l3b_ref[...])                           # (tb, nfeat) f32

    # ---- classifier heads ----------------------------------------------------
    def relu(x):
        return jnp.maximum(x, 0.0)

    def elu(x):
        # ELU(alpha=1); clamp the exp argument so the unselected branch stays finite.
        return jnp.where(x > 0.0, x, jnp.exp(jnp.minimum(x, 0.0)) - 1.0)

    def head(x, w1, b1, w2, b2, act):
        h = act(mm(x, w1) + b1)
        return act(mm(h, w2) + b2)

    res_claim = head(claims_i, cw1_ref[...], cb1_ref[...],
                     cw2_ref[...], cb2_ref[...], relu)
    res_evidence = head(evidences_ref[...], ew1_ref[...], eb1_ref[...],
                        ew2_ref[...], eb2_ref[...], elu)
    res_fusion = head(claim_ev_ref[...], fw1_ref[...], fb1_ref[...],
                      fw2_ref[...], fb2_ref[...], elu)

    def log_sigmoid_eps(x):
        # log(1e-8 + sigmoid(x)) with sigmoid(x) = exp(-softplus(-x))
        # (numerically stable, no inf intermediates).
        z = -x
        softplus = jnp.maximum(z, 0.0) + jnp.log(1.0 + jnp.exp(-jnp.abs(z)))
        return jnp.log(1e-8 + jnp.exp(-softplus))

    res_final = log_sigmoid_eps(res_claim + res_evidence + res_fusion)
    c = const_ref[0]
    counterfactual = log_sigmoid_eps(res_claim + 2.0 * c)
    tie = res_final - counterfactual

    # ---- single lane-dense store ---------------------------------------------
    packed = jnp.concatenate(
        [res_claim, res_evidence, res_final, counterfactual, tie], axis=-1)
    pad = out_w - 5 * nclass
    if pad > 0:
        packed = jnp.concatenate(
            [packed, jnp.zeros((tb, pad), f32)], axis=-1)
    out_ref[...] = packed.astype(f32)


def cicr_forward(claims, claim_evidences, evidences, params, *, tb=256):
    B, nfeat = claims.shape
    nclass = params["cw2"].shape[1]
    proj = params["l1w"].shape[1]
    out_w = max(128, _round_up(5 * nclass, 128))

    f32 = jnp.float32
    bf16 = jnp.bfloat16

    # Batch padding / tile selection: 16-row aligned (bf16 sublane packing),
    # and keep the grid >= 2 steps when the batch allows it (v7x: 2 TCs).
    b_pad = _round_up(B, 16)
    tb = max(16, min(tb, b_pad))
    if b_pad >= 32:
        tb = min(tb, _round_up(_cdiv(b_pad, 2), 16))
    tb = _round_up(tb, 16)
    b_pad = _round_up(b_pad, tb)
    grid = (b_pad // tb,)

    def pad_rows(x):
        x = x.astype(bf16)
        if b_pad == B:
            return x
        z = jnp.zeros((b_pad - B, x.shape[1]), bf16)
        return jnp.concatenate([x, z], axis=0)

    claims_p = pad_rows(claims)
    claim_ev_p = pad_rows(claim_evidences)
    evidences_p = pad_rows(evidences)

    # Grid-invariant projections hoisted out of the kernel (computed once, f32).
    d_u = params["D_u"].astype(f32)
    k_proj = (d_u @ params["l2w"].astype(f32)
              + params["l2b"].astype(f32)).astype(bf16)        # (nclass, proj)
    du_l3w = (d_u @ params["l3w"].astype(f32)).astype(bf16)    # (nclass, nfeat)

    wc = lambda k: params[k].astype(bf16)   # weight matrices -> bf16 in HBM
    bc = lambda k: params[k].astype(f32)    # biases stay f32

    inputs = (
        claims_p, claim_ev_p, evidences_p,
        wc("l1w"), bc("l1b"), k_proj, wc("l3w"), bc("l3b"), du_l3w,
        wc("cw1"), bc("cb1"), wc("cw2"), bc("cb2"),
        wc("ew1"), bc("eb1"), wc("ew2"), bc("eb2"),
        wc("fw1"), bc("fb1"), wc("fw2"), bc("fb2"),
        params["constant"].astype(f32).reshape((1,)),
    )

    # ---- VMEM budget (sized to need, not to the physical maximum) ------------
    def nbytes(a):
        return int(a.size) * int(a.dtype.itemsize)

    wt_bytes = sum(nbytes(a) for a in inputs[3:-1])
    act_bytes = 3 * 2 * tb * nfeat * 2          # 3 streams, double-buffered bf16
    out_bytes = 2 * tb * out_w * 4
    vmem_need = 2 * wt_bytes + act_bytes + out_bytes
    vmem_limit = int(min(48 * 1024 * 1024,
                         max(16 * 1024 * 1024, 2 * vmem_need)))

    # ---- cost estimate (hoisted matmuls removed) ------------------------------
    flops = (
        2 * b_pad * nfeat * proj                  # L = claims @ l1w
        + 2 * b_pad * proj * nclass               # L @ K^T
        + 2 * b_pad * nclass * nfeat              # p @ (D_u @ l3w)
        + 2 * b_pad * nfeat * nfeat               # claims @ l3w
        + 3 * (2 * b_pad * nfeat * nfeat + 2 * b_pad * nfeat * nclass)  # heads
    )
    transcendentals = int(
        b_pad * nclass                            # softmax exp
        + 2 * b_pad * (nfeat + nclass)            # ELU exps (2 heads)
        + 8 * b_pad * nclass)                     # log-sigmoid exps/logs
    bytes_accessed = int(sum(nbytes(a) for a in inputs) + b_pad * out_w * 4)

    act_spec = pl.BlockSpec((tb, nfeat), lambda i: (i, 0))
    out_spec = pl.BlockSpec((tb, out_w), lambda i: (i, 0))
    out_shape = jax.ShapeDtypeStruct((b_pad, out_w), f32)
    smem_spec = pl.BlockSpec(memory_space=pltpu.MemorySpace.SMEM)

    def run(weight_pipeline_mode):
        def full_spec(arr):
            nd = arr.ndim
            if weight_pipeline_mode is None:
                return pl.BlockSpec(arr.shape, lambda i, _nd=nd: (0,) * _nd)
            return pl.BlockSpec(arr.shape, lambda i, _nd=nd: (0,) * _nd,
                                pipeline_mode=weight_pipeline_mode)

        in_specs = [act_spec, act_spec, act_spec]
        in_specs += [full_spec(a) for a in inputs[3:-1]]
        in_specs += [smem_spec]

        return pl.pallas_call(
            cicr_kernel,
            out_shape=out_shape,
            grid=grid,
            in_specs=in_specs,
            out_specs=out_spec,
            compiler_params=pltpu.CompilerParams(
                dimension_semantics=("parallel",),
                vmem_limit_bytes=vmem_limit),
            cost_estimate=pl.CostEstimate(
                flops=int(flops),
                transcendentals=transcendentals,
                bytes_accessed=bytes_accessed),
        )(*inputs)

    try:
        # Single-buffer the grid-invariant weight operands (they never change
        # across grid steps; the second pipeline buffer is pure VMEM waste).
        packed = run(pl.Buffered(1))
    except Exception:
        # TODO(synk): this JAX build rejected pipeline_mode=pl.Buffered(1) on
        # constant-index BlockSpecs; fall back to default double buffering.
        packed = run(None)

    res_claim = packed[:B, 0:nclass]
    res_evidence = packed[:B, nclass:2 * nclass]
    res_final = packed[:B, 2 * nclass:3 * nclass]
    counterfactual = packed[:B, 3 * nclass:4 * nclass]
    tie = packed[:B, 4 * nclass:5 * nclass]
    return res_claim, res_evidence, res_final, counterfactual, tie


def make_params(key, nfeat, nclass, proj=64):
    ks = jax.random.split(key, 32)
    i = iter(range(32))

    def lin(kw, kb, fan_in, fan_out):
        # PyTorch Linear default init (uniform +/- 1/sqrt(fan_in)); weight
        # stored as [in, out] (transposed vs. torch).
        bound = 1.0 / (fan_in ** 0.5)
        w = jax.random.uniform(kw, (fan_in, fan_out), jnp.float32, -bound, bound)
        b = jax.random.uniform(kb, (1, fan_out), jnp.float32, -bound, bound)
        return w, b

    p = {}
    p["l1w"], p["l1b"] = lin(ks[next(i)], ks[next(i)], nfeat, proj)
    p["l2w"], p["l2b"] = lin(ks[next(i)], ks[next(i)], nfeat, proj)
    p["l3w"], p["l3b"] = lin(ks[next(i)], ks[next(i)], nfeat, nfeat)
    p["D_u"] = jax.random.normal(ks[next(i)], (nclass, nfeat), jnp.float32)
    p["cw1"], p["cb1"] = lin(ks[next(i)], ks[next(i)], nfeat, nfeat)
    p["cw2"], p["cb2"] = lin(ks[next(i)], ks[next(i)], nfeat, nclass)
    p["ew1"], p["eb1"] = lin(ks[next(i)], ks[next(i)], nfeat, nfeat)
    p["ew2"], p["eb2"] = lin(ks[next(i)], ks[next(i)], nfeat, nclass)
    p["fw1"], p["fb1"] = lin(ks[next(i)], ks[next(i)], nfeat, nfeat)
    p["fw2"], p["fb2"] = lin(ks[next(i)], ks[next(i)], nfeat, nclass)
    p["constant"] = jnp.zeros((1,), jnp.float32)  # nn.Parameter(tensor(0.0))
    return p


if __name__ == "__main__":
    B, NFEAT, NCLASS = 8, 128, 8
    key = jax.random.PRNGKey(0)
    k_c, k_ce, k_e, k_p = jax.random.split(key, 4)

    # Stand-ins for the (detached) BERT pooled / graph-pooled outputs.
    claims = jax.random.normal(k_c, (B, NFEAT), jnp.float32)
    claim_evidences = jax.random.normal(k_ce, (B, NFEAT), jnp.float32)
    evidences = jax.random.normal(k_e, (B, NFEAT), jnp.float32)

    params = make_params(k_p, NFEAT, NCLASS)

    outs = cicr_forward(claims, claim_evidences, evidences, params)
    outs = jax.block_until_ready(outs)

    res_claim, res_evidence, res_final, counterfactual_final, TIE = outs
    assert res_claim.shape == (B, NCLASS)
    assert res_evidence.shape == (B, NCLASS)
    assert res_final.shape == (B, NCLASS)
    assert counterfactual_final.shape == (B, NCLASS)
    assert TIE.shape == (B, NCLASS)
    assert bool(jnp.all(jnp.isfinite(res_final)))
    assert bool(jnp.all(jnp.isfinite(TIE)))
    print("KERNEL_OK")
</pallas_src>

<mosaic_0001>
module attributes {stable_mosaic.version = 11 : i64} {
  func.func @cicr_kernel(%arg0: i32, %arg1: memref<16x128xbf16, #tpu.memory_space<vmem>>, %arg2: memref<16x128xbf16, #tpu.memory_space<vmem>>, %arg3: memref<16x128xbf16, #tpu.memory_space<vmem>>, %arg4: memref<128x64xbf16, #tpu.memory_space<vmem>>, %arg5: memref<1x64xf32, #tpu.memory_space<vmem>>, %arg6: memref<8x64xbf16, #tpu.memory_space<vmem>>, %arg7: memref<128x128xbf16, #tpu.memory_space<vmem>>, %arg8: memref<1x128xf32, #tpu.memory_space<vmem>>, %arg9: memref<8x128xbf16, #tpu.memory_space<vmem>>, %arg10: memref<128x128xbf16, #tpu.memory_space<vmem>>, %arg11: memref<1x128xf32, #tpu.memory_space<vmem>>, %arg12: memref<128x8xbf16, #tpu.memory_space<vmem>>, %arg13: memref<1x8xf32, #tpu.memory_space<vmem>>, %arg14: memref<128x128xbf16, #tpu.memory_space<vmem>>, %arg15: memref<1x128xf32, #tpu.memory_space<vmem>>, %arg16: memref<128x8xbf16, #tpu.memory_space<vmem>>, %arg17: memref<1x8xf32, #tpu.memory_space<vmem>>, %arg18: memref<128x128xbf16, #tpu.memory_space<vmem>>, %arg19: memref<1x128xf32, #tpu.memory_space<vmem>>, %arg20: memref<128x8xbf16, #tpu.memory_space<vmem>>, %arg21: memref<1x8xf32, #tpu.memory_space<vmem>>, %arg22: memref<1xf32, #tpu.memory_space<smem>>, %arg23: memref<16x128xf32, #tpu.memory_space<vmem>>) attributes {dimension_semantics = [#tpu.dimension_semantics<parallel>], iteration_bounds = array<i64: 1>, scalar_prefetch = 0 : i64, scratch_operands = 0 : i64, tpu.core_type = #tpu.core_type<tc>, window_params = [{transform_indices = @transform_0, window_bounds = array<i64: 16, 128>}, {transform_indices = @transform_1, window_bounds = array<i64: 16, 128>}, {transform_indices = @transform_2, window_bounds = array<i64: 16, 128>}, {pipeline_mode = #tpu.pipeline_mode<synchronous>, transform_indices = @transform_3, window_bounds = array<i64: 128, 64>}, {pipeline_mode = #tpu.pipeline_mode<synchronous>, transform_indices = @transform_4, window_bounds = array<i64: 1, 64>}, {pipeline_mode = #tpu.pipeline_mode<synchronous>, transform_indices = @transform_5, window_bounds = array<i64: 8, 64>}, {pipeline_mode = #tpu.pipeline_mode<synchronous>, transform_indices = @transform_6, window_bounds = array<i64: 128, 128>}, {pipeline_mode = #tpu.pipeline_mode<synchronous>, transform_indices = @transform_7, window_bounds = array<i64: 1, 128>}, {pipeline_mode = #tpu.pipeline_mode<synchronous>, transform_indices = @transform_8, window_bounds = array<i64: 8, 128>}, {pipeline_mode = #tpu.pipeline_mode<synchronous>, transform_indices = @transform_9, window_bounds = array<i64: 128, 128>}, {pipeline_mode = #tpu.pipeline_mode<synchronous>, transform_indices = @transform_10, window_bounds = array<i64: 1, 128>}, {pipeline_mode = #tpu.pipeline_mode<synchronous>, transform_indices = @transform_11, window_bounds = array<i64: 128, 8>}, {pipeline_mode = #tpu.pipeline_mode<synchronous>, transform_indices = @transform_12, window_bounds = array<i64: 1, 8>}, {pipeline_mode = #tpu.pipeline_mode<synchronous>, transform_indices = @transform_13, window_bounds = array<i64: 128, 128>}, {pipeline_mode = #tpu.pipeline_mode<synchronous>, transform_indices = @transform_14, window_bounds = array<i64: 1, 128>}, {pipeline_mode = #tpu.pipeline_mode<synchronous>, transform_indices = @transform_15, window_bounds = array<i64: 128, 8>}, {pipeline_mode = #tpu.pipeline_mode<synchronous>, transform_indices = @transform_16, window_bounds = array<i64: 1, 8>}, {pipeline_mode = #tpu.pipeline_mode<synchronous>, transform_indices = @transform_17, window_bounds = array<i64: 128, 128>}, {pipeline_mode = #tpu.pipeline_mode<synchronous>, transform_indices = @transform_18, window_bounds = array<i64: 1, 128>}, {pipeline_mode = #tpu.pipeline_mode<synchronous>, transform_indices = @transform_19, window_bounds = array<i64: 128, 8>}, {pipeline_mode = #tpu.pipeline_mode<synchronous>, transform_indices = @transform_20, window_bounds = array<i64: 1, 8>}, {transform_indices = @transform_21, window_bounds = array<i64: 1>}, {transform_indices = @transform_22, window_bounds = array<i64: 16, 128>}]} {
    %c0 = arith.constant 0 : index
    %c0_0 = arith.constant 0 : index
    %0 = vector.load %arg1[%c0, %c0_0] : memref<16x128xbf16, #tpu.memory_space<vmem>>, vector<16x128xbf16>
    %c0_1 = arith.constant 0 : index
    %c0_2 = arith.constant 0 : index
    %1 = vector.load %arg4[%c0_1, %c0_2] : memref<128x64xbf16, #tpu.memory_space<vmem>>, vector<128x64xbf16>
    %cst = arith.constant dense<0.000000e+00> : vector<16x64xf32>
    %2 = tpu.matmul %0, %1, %cst {dimension_numbers = #tpu.dot_dimension_numbers<[1], [0], [0], [1], [0, 0, 1, 1], [], []>} : vector<16x128xbf16>, vector<128x64xbf16>, vector<16x64xf32> -> vector<16x64xf32>
    %c0_3 = arith.constant 0 : index
    %c0_4 = arith.constant 0 : index
    %3 = vector.load %arg5[%c0_3, %c0_4] : memref<1x64xf32, #tpu.memory_space<vmem>>, vector<1x64xf32>
    %4 = vector.broadcast %3 : vector<1x64xf32> to vector<16x64xf32>
    %5 = arith.addf %2, %4 : vector<16x64xf32>
    %6 = arith.truncf %5 : vector<16x64xf32> to vector<16x64xbf16>
    %c0_5 = arith.constant 0 : index
    %c0_6 = arith.constant 0 : index
    %7 = vector.load %arg6[%c0_5, %c0_6] : memref<8x64xbf16, #tpu.memory_space<vmem>>, vector<8x64xbf16>
    %cst_7 = arith.constant dense<0.000000e+00> : vector<16x8xf32>
    %8 = tpu.matmul %6, %7, %cst_7 {dimension_numbers = #tpu.dot_dimension_numbers<[1], [1], [0], [0], [0, 0, 1, 0], [], []>} : vector<16x64xbf16>, vector<8x64xbf16>, vector<16x8xf32> -> vector<16x8xf32>
    %cst_8 = arith.constant dense<0xFF800000> : vector<16xf32>
    %9 = vector.multi_reduction <maximumf>, %8, %cst_8 [1] : vector<16x8xf32> to vector<16xf32>
    %10 = vector.shape_cast %9 : vector<16xf32> to vector<16x1xf32>
    %11 = vector.broadcast %10 : vector<16x1xf32> to vector<16x8xf32>
    %12 = arith.subf %8, %11 : vector<16x8xf32>
    %13 = math.exp %12 : vector<16x8xf32>
    %cst_9 = arith.constant dense<0.000000e+00> : vector<16xf32>
    %14 = vector.multi_reduction <add>, %13, %cst_9 [1] : vector<16x8xf32> to vector<16xf32>
    %15 = vector.shape_cast %14 : vector<16xf32> to vector<16x1xf32>
    %16 = vector.broadcast %15 : vector<16x1xf32> to vector<16x8xf32>
    %17 = arith.divf %13, %16 : vector<16x8xf32>
    %c0_10 = arith.constant 0 : index
    %c0_11 = arith.constant 0 : index
    %18 = vector.load %arg7[%c0_10, %c0_11] : memref<128x128xbf16, #tpu.memory_space<vmem>>, vector<128x128xbf16>
    %cst_12 = arith.constant dense<0.000000e+00> : vector<16x128xf32>
    %19 = tpu.matmul %0, %18, %cst_12 {dimension_numbers = #tpu.dot_dimension_numbers<[1], [0], [0], [1], [0, 0, 1, 1], [], []>} : vector<16x128xbf16>, vector<128x128xbf16>, vector<16x128xf32> -> vector<16x128xf32>
    %c0_13 = arith.constant 0 : index
    %c0_14 = arith.constant 0 : index
    %20 = vector.load %arg9[%c0_13, %c0_14] : memref<8x128xbf16, #tpu.memory_space<vmem>>, vector<8x128xbf16>
    %21 = arith.truncf %17 : vector<16x8xf32> to vector<16x8xbf16>
    %cst_15 = arith.constant dense<0.000000e+00> : vector<16x128xf32>
    %22 = tpu.matmul %21, %20, %cst_15 {dimension_numbers = #tpu.dot_dimension_numbers<[1], [0], [0], [1], [0, 0, 1, 1], [], []>} : vector<16x8xbf16>, vector<8x128xbf16>, vector<16x128xf32> -> vector<16x128xf32>
    %23 = arith.addf %19, %22 : vector<16x128xf32>
    %c0_16 = arith.constant 0 : index
    %c0_17 = arith.constant 0 : index
    %24 = vector.load %arg8[%c0_16, %c0_17] : memref<1x128xf32, #tpu.memory_space<vmem>>, vector<1x128xf32>
    %25 = vector.broadcast %24 : vector<1x128xf32> to vector<16x128xf32>
    %26 = arith.addf %23, %25 : vector<16x128xf32>
    %c0_18 = arith.constant 0 : index
    %c0_19 = arith.constant 0 : index
    %27 = vector.load %arg10[%c0_18, %c0_19] : memref<128x128xbf16, #tpu.memory_space<vmem>>, vector<128x128xbf16>
    %c0_20 = arith.constant 0 : index
    %c0_21 = arith.constant 0 : index
    %28 = vector.load %arg11[%c0_20, %c0_21] : memref<1x128xf32, #tpu.memory_space<vmem>>, vector<1x128xf32>
    %c0_22 = arith.constant 0 : index
    %c0_23 = arith.constant 0 : index
    %29 = vector.load %arg12[%c0_22, %c0_23] : memref<128x8xbf16, #tpu.memory_space<vmem>>, vector<128x8xbf16>
    %c0_24 = arith.constant 0 : index
    %c0_25 = arith.constant 0 : index
    %30 = vector.load %arg13[%c0_24, %c0_25] : memref<1x8xf32, #tpu.memory_space<vmem>>, vector<1x8xf32>
    %31 = arith.truncf %26 : vector<16x128xf32> to vector<16x128xbf16>
    %cst_26 = arith.constant dense<0.000000e+00> : vector<16x128xf32>
    %32 = tpu.matmul %31, %27, %cst_26 {dimension_numbers = #tpu.dot_dimension_numbers<[1], [0], [0], [1], [0, 0, 1, 1], [], []>} : vector<16x128xbf16>, vector<128x128xbf16>, vector<16x128xf32> -> vector<16x128xf32>
    %33 = vector.broadcast %28 : vector<1x128xf32> to vector<16x128xf32>
    %34 = arith.addf %32, %33 : vector<16x128xf32>
    %cst_27 = arith.constant 0.000000e+00 : f32
    %35 = vector.broadcast %cst_27 : f32 to vector<16x128xf32>
    %36 = arith.maximumf %34, %35 : vector<16x128xf32>
    %37 = arith.truncf %36 : vector<16x128xf32> to vector<16x128xbf16>
    %cst_28 = arith.constant dense<0.000000e+00> : vector<16x8xf32>
    %38 = tpu.matmul %37, %29, %cst_28 {dimension_numbers = #tpu.dot_dimension_numbers<[1], [0], [0], [1], [0, 0, 1, 1], [], []>} : vector<16x128xbf16>, vector<128x8xbf16>, vector<16x8xf32> -> vector<16x8xf32>
    %39 = vector.broadcast %30 : vector<1x8xf32> to vector<16x8xf32>
    %40 = arith.addf %38, %39 : vector<16x8xf32>
    %cst_29 = arith.constant 0.000000e+00 : f32
    %41 = vector.broadcast %cst_29 : f32 to vector<16x8xf32>
    %42 = arith.maximumf %40, %41 : vector<16x8xf32>
    %c0_30 = arith.constant 0 : index
    %c0_31 = arith.constant 0 : index
    %43 = vector.load %arg3[%c0_30, %c0_31] : memref<16x128xbf16, #tpu.memory_space<vmem>>, vector<16x128xbf16>
    %c0_32 = arith.constant 0 : index
    %c0_33 = arith.constant 0 : index
    %44 = vector.load %arg14[%c0_32, %c0_33] : memref<128x128xbf16, #tpu.memory_space<vmem>>, vector<128x128xbf16>
    %c0_34 = arith.constant 0 : index
    %c0_35 = arith.constant 0 : index
    %45 = vector.load %arg15[%c0_34, %c0_35] : memref<1x128xf32, #tpu.memory_space<vmem>>, vector<1x128xf32>
    %c0_36 = arith.constant 0 : index
    %c0_37 = arith.constant 0 : index
    %46 = vector.load %arg16[%c0_36, %c0_37] : memref<128x8xbf16, #tpu.memory_space<vmem>>, vector<128x8xbf16>
    %c0_38 = arith.constant 0 : index
    %c0_39 = arith.constant 0 : index
    %47 = vector.load %arg17[%c0_38, %c0_39] : memref<1x8xf32, #tpu.memory_space<vmem>>, vector<1x8xf32>
    %cst_40 = arith.constant dense<0.000000e+00> : vector<16x128xf32>
    %48 = tpu.matmul %43, %44, %cst_40 {dimension_numbers = #tpu.dot_dimension_numbers<[1], [0], [0], [1], [0, 0, 1, 1], [], []>} : vector<16x128xbf16>, vector<128x128xbf16>, vector<16x128xf32> -> vector<16x128xf32>
    %49 = vector.broadcast %45 : vector<1x128xf32> to vector<16x128xf32>
    %50 = arith.addf %48, %49 : vector<16x128xf32>
    %cst_41 = arith.constant 0.000000e+00 : f32
    %51 = vector.broadcast %cst_41 : f32 to vector<16x128xf32>
    %52 = arith.cmpf ogt, %50, %51 : vector<16x128xf32>
    %cst_42 = arith.constant 0.000000e+00 : f32
    %53 = vector.broadcast %cst_42 : f32 to vector<16x128xf32>
    %54 = arith.minimumf %50, %53 : vector<16x128xf32>
    %55 = math.exp %54 : vector<16x128xf32>
    %cst_43 = arith.constant 1.000000e+00 : f32
    %56 = vector.broadcast %cst_43 : f32 to vector<16x128xf32>
    %57 = arith.subf %55, %56 : vector<16x128xf32>
    %58 = arith.select %52, %50, %57 : vector<16x128xi1>, vector<16x128xf32>
    %59 = arith.truncf %58 : vector<16x128xf32> to vector<16x128xbf16>
    %cst_44 = arith.constant dense<0.000000e+00> : vector<16x8xf32>
    %60 = tpu.matmul %59, %46, %cst_44 {dimension_numbers = #tpu.dot_dimension_numbers<[1], [0], [0], [1], [0, 0, 1, 1], [], []>} : vector<16x128xbf16>, vector<128x8xbf16>, vector<16x8xf32> -> vector<16x8xf32>
    %61 = vector.broadcast %47 : vector<1x8xf32> to vector<16x8xf32>
    %62 = arith.addf %60, %61 : vector<16x8xf32>
    %cst_45 = arith.constant 0.000000e+00 : f32
    %63 = vector.broadcast %cst_45 : f32 to vector<16x8xf32>
    %64 = arith.cmpf ogt, %62, %63 : vector<16x8xf32>
    %cst_46 = arith.constant 0.000000e+00 : f32
    %65 = vector.broadcast %cst_46 : f32 to vector<16x8xf32>
    %66 = arith.minimumf %62, %65 : vector<16x8xf32>
    %67 = math.exp %66 : vector<16x8xf32>
    %cst_47 = arith.constant 1.000000e+00 : f32
    %68 = vector.broadcast %cst_47 : f32 to vector<16x8xf32>
    %69 = arith.subf %67, %68 : vector<16x8xf32>
    %70 = arith.select %64, %62, %69 : vector<16x8xi1>, vector<16x8xf32>
    %c0_48 = arith.constant 0 : index
    %c0_49 = arith.constant 0 : index
    %71 = vector.load %arg2[%c0_48, %c0_49] : memref<16x128xbf16, #tpu.memory_space<vmem>>, vector<16x128xbf16>
    %c0_50 = arith.constant 0 : index
    %c0_51 = arith.constant 0 : index
    %72 = vector.load %arg18[%c0_50, %c0_51] : memref<128x128xbf16, #tpu.memory_space<vmem>>, vector<128x128xbf16>
    %c0_52 = arith.constant 0 : index
    %c0_53 = arith.constant 0 : index
    %73 = vector.load %arg19[%c0_52, %c0_53] : memref<1x128xf32, #tpu.memory_space<vmem>>, vector<1x128xf32>
    %c0_54 = arith.constant 0 : index
    %c0_55 = arith.constant 0 : index
    %74 = vector.load %arg20[%c0_54, %c0_55] : memref<128x8xbf16, #tpu.memory_space<vmem>>, vector<128x8xbf16>
    %c0_56 = arith.constant 0 : index
    %c0_57 = arith.constant 0 : index
    %75 = vector.load %arg21[%c0_56, %c0_57] : memref<1x8xf32, #tpu.memory_space<vmem>>, vector<1x8xf32>
    %cst_58 = arith.constant dense<0.000000e+00> : vector<16x128xf32>
    %76 = tpu.matmul %71, %72, %cst_58 {dimension_numbers = #tpu.dot_dimension_numbers<[1], [0], [0], [1], [0, 0, 1, 1], [], []>} : vector<16x128xbf16>, vector<128x128xbf16>, vector<16x128xf32> -> vector<16x128xf32>
    %77 = vector.broadcast %73 : vector<1x128xf32> to vector<16x128xf32>
    %78 = arith.addf %76, %77 : vector<16x128xf32>
    %cst_59 = arith.constant 0.000000e+00 : f32
    %79 = vector.broadcast %cst_59 : f32 to vector<16x128xf32>
    %80 = arith.cmpf ogt, %78, %79 : vector<16x128xf32>
    %cst_60 = arith.constant 0.000000e+00 : f32
    %81 = vector.broadcast %cst_60 : f32 to vector<16x128xf32>
    %82 = arith.minimumf %78, %81 : vector<16x128xf32>
    %83 = math.exp %82 : vector<16x128xf32>
    %cst_61 = arith.constant 1.000000e+00 : f32
    %84 = vector.broadcast %cst_61 : f32 to vector<16x128xf32>
    %85 = arith.subf %83, %84 : vector<16x128xf32>
    %86 = arith.select %80, %78, %85 : vector<16x128xi1>, vector<16x128xf32>
    %87 = arith.truncf %86 : vector<16x128xf32> to vector<16x128xbf16>
    %cst_62 = arith.constant dense<0.000000e+00> : vector<16x8xf32>
    %88 = tpu.matmul %87, %74, %cst_62 {dimension_numbers = #tpu.dot_dimension_numbers<[1], [0], [0], [1], [0, 0, 1, 1], [], []>} : vector<16x128xbf16>, vector<128x8xbf16>, vector<16x8xf32> -> vector<16x8xf32>
    %89 = vector.broadcast %75 : vector<1x8xf32> to vector<16x8xf32>
    %90 = arith.addf %88, %89 : vector<16x8xf32>
    %cst_63 = arith.constant 0.000000e+00 : f32
    %91 = vector.broadcast %cst_63 : f32 to vector<16x8xf32>
    %92 = arith.cmpf ogt, %90, %91 : vector<16x8xf32>
    %cst_64 = arith.constant 0.000000e+00 : f32
    %93 = vector.broadcast %cst_64 : f32 to vector<16x8xf32>
    %94 = arith.minimumf %90, %93 : vector<16x8xf32>
    %95 = math.exp %94 : vector<16x8xf32>
    %cst_65 = arith.constant 1.000000e+00 : f32
    %96 = vector.broadcast %cst_65 : f32 to vector<16x8xf32>
    %97 = arith.subf %95, %96 : vector<16x8xf32>
    %98 = arith.select %92, %90, %97 : vector<16x8xi1>, vector<16x8xf32>
    %99 = arith.addf %42, %70 : vector<16x8xf32>
    %100 = arith.addf %99, %98 : vector<16x8xf32>
    %cst_66 = arith.constant 0.000000e+00 : f32
    %101 = vector.broadcast %cst_66 : f32 to vector<16x8xf32>
    %102 = arith.subf %101, %100 : vector<16x8xf32>
    %cst_67 = arith.constant 0.000000e+00 : f32
    %103 = vector.broadcast %cst_67 : f32 to vector<16x8xf32>
    %104 = arith.maximumf %102, %103 : vector<16x8xf32>
    %105 = math.absf %102 : vector<16x8xf32>
    %cst_68 = arith.constant 0.000000e+00 : f32
    %106 = vector.broadcast %cst_68 : f32 to vector<16x8xf32>
    %107 = arith.subf %106, %105 : vector<16x8xf32>
    %108 = math.exp %107 : vector<16x8xf32>
    %cst_69 = arith.constant 1.000000e+00 : f32
    %109 = vector.broadcast %cst_69 : f32 to vector<16x8xf32>
    %110 = arith.addf %109, %108 : vector<16x8xf32>
    %111 = math.log %110 : vector<16x8xf32>
    %112 = arith.addf %104, %111 : vector<16x8xf32>
    %cst_70 = arith.constant 0.000000e+00 : f32
    %113 = vector.broadcast %cst_70 : f32 to vector<16x8xf32>
    %114 = arith.subf %113, %112 : vector<16x8xf32>
    %115 = math.exp %114 : vector<16x8xf32>
    %cst_71 = arith.constant 9.99999993E-9 : f32
    %116 = vector.broadcast %cst_71 : f32 to vector<16x8xf32>
    %117 = arith.addf %116, %115 : vector<16x8xf32>
    %118 = math.log %117 : vector<16x8xf32>
    %c0_72 = arith.constant 0 : index
    %119 = memref.load %arg22[%c0_72] : memref<1xf32, #tpu.memory_space<smem>>
    %cst_73 = arith.constant 2.000000e+00 : f32
    %120 = arith.mulf %cst_73, %119 : f32
    %121 = vector.broadcast %120 : f32 to vector<16x8xf32>
    %122 = arith.addf %42, %121 : vector<16x8xf32>
    %cst_74 = arith.constant 0.000000e+00 : f32
    %123 = vector.broadcast %cst_74 : f32 to vector<16x8xf32>
    %124 = arith.subf %123, %122 : vector<16x8xf32>
    %cst_75 = arith.constant 0.000000e+00 : f32
    %125 = vector.broadcast %cst_75 : f32 to vector<16x8xf32>
    %126 = arith.maximumf %124, %125 : vector<16x8xf32>
    %127 = math.absf %124 : vector<16x8xf32>
    %cst_76 = arith.constant 0.000000e+00 : f32
    %128 = vector.broadcast %cst_76 : f32 to vector<16x8xf32>
    %129 = arith.subf %128, %127 : vector<16x8xf32>
    %130 = math.exp %129 : vector<16x8xf32>
    %cst_77 = arith.constant 1.000000e+00 : f32
    %131 = vector.broadcast %cst_77 : f32 to vector<16x8xf32>
    %132 = arith.addf %131, %130 : vector<16x8xf32>
    %133 = math.log %132 : vector<16x8xf32>
    %134 = arith.addf %126, %133 : vector<16x8xf32>
    %cst_78 = arith.constant 0.000000e+00 : f32
    %135 = vector.broadcast %cst_78 : f32 to vector<16x8xf32>
    %136 = arith.subf %135, %134 : vector<16x8xf32>
    %137 = math.exp %136 : vector<16x8xf32>
    %cst_79 = arith.constant 9.99999993E-9 : f32
    %138 = vector.broadcast %cst_79 : f32 to vector<16x8xf32>
    %139 = arith.addf %138, %137 : vector<16x8xf32>
    %140 = math.log %139 : vector<16x8xf32>
    %141 = arith.subf %118, %140 : vector<16x8xf32>
    %142 = tpu.concatenate %42, %70, %118, %140, %141 in 1 : vector<16x8xf32>, vector<16x8xf32>, vector<16x8xf32>, vector<16x8xf32>, vector<16x8xf32> -> vector<16x40xf32>
    %cst_80 = arith.constant 0.000000e+00 : f32
    %143 = vector.broadcast %cst_80 : f32 to vector<16x88xf32>
    %144 = tpu.concatenate %142, %143 in 1 : vector<16x40xf32>, vector<16x88xf32> -> vector<16x128xf32>
    %c0_81 = arith.constant 0 : index
    %c0_82 = arith.constant 0 : index
    %145 = vector.load %arg23[%c0_81, %c0_82] : memref<16x128xf32, #tpu.memory_space<vmem>>, vector<16x128xf32>
    tpu.vector_store %arg23[%c0_81, %c0_82], %144 {strides = array<i32>} : memref<16x128xf32, #tpu.memory_space<vmem>>, vector<16x128xf32>,
    return
  }
  func.func @transform_0(%arg0: i32) -> (i32, i32) {
    %c0_i32 = arith.constant 0 : i32
    %c0_i32_0 = arith.constant 0 : i32
    return %arg0, %c0_i32 : i32, i32
  }
  func.func @transform_1(%arg0: i32) -> (i32, i32) {
    %c0_i32 = arith.constant 0 : i32
    %c0_i32_0 = arith.constant 0 : i32
    return %arg0, %c0_i32 : i32, i32
  }
  func.func @transform_2(%arg0: i32) -> (i32, i32) {
    %c0_i32 = arith.constant 0 : i32
    %c0_i32_0 = arith.constant 0 : i32
    return %arg0, %c0_i32 : i32, i32
  }
  func.func @transform_3(%arg0: i32) -> (i32, i32) {
    %c0_i32 = arith.constant 0 : i32
    %c0_i32_0 = arith.constant 0 : i32
    %c0_i32_1 = arith.constant 0 : i32
    return %c0_i32, %c0_i32_0 : i32, i32
  }
  func.func @transform_4(%arg0: i32) -> (i32, i32) {
    %c0_i32 = arith.constant 0 : i32
    %c0_i32_0 = arith.constant 0 : i32
    %c0_i32_1 = arith.constant 0 : i32
    return %c0_i32, %c0_i32_0 : i32, i32
  }
  func.func @transform_5(%arg0: i32) -> (i32, i32) {
    %c0_i32 = arith.constant 0 : i32
    %c0_i32_0 = arith.constant 0 : i32
    %c0_i32_1 = arith.constant 0 : i32
    return %c0_i32, %c0_i32_0 : i32, i32
  }
  func.func @transform_6(%arg0: i32) -> (i32, i32) {
    %c0_i32 = arith.constant 0 : i32
    %c0_i32_0 = arith.constant 0 : i32
    %c0_i32_1 = arith.constant 0 : i32
    return %c0_i32, %c0_i32_0 : i32, i32
  }
  func.func @transform_7(%arg0: i32) -> (i32, i32) {
    %c0_i32 = arith.constant 0 : i32
    %c0_i32_0 = arith.constant 0 : i32
    %c0_i32_1 = arith.constant 0 : i32
    return %c0_i32, %c0_i32_0 : i32, i32
  }
  func.func @transform_8(%arg0: i32) -> (i32, i32) {
    %c0_i32 = arith.constant 0 : i32
    %c0_i32_0 = arith.constant 0 : i32
    %c0_i32_1 = arith.constant 0 : i32
    return %c0_i32, %c0_i32_0 : i32, i32
  }
  func.func @transform_9(%arg0: i32) -> (i32, i32) {
    %c0_i32 = arith.constant 0 : i32
    %c0_i32_0 = arith.constant 0 : i32
    %c0_i32_1 = arith.constant 0 : i32
    return %c0_i32, %c0_i32_0 : i32, i32
  }
  func.func @transform_10(%arg0: i32) -> (i32, i32) {
    %c0_i32 = arith.constant 0 : i32
    %c0_i32_0 = arith.constant 0 : i32
    %c0_i32_1 = arith.constant 0 : i32
    return %c0_i32, %c0_i32_0 : i32, i32
  }
  func.func @transform_11(%arg0: i32) -> (i32, i32) {
    %c0_i32 = arith.constant 0 : i32
    %c0_i32_0 = arith.constant 0 : i32
    %c0_i32_1 = arith.constant 0 : i32
    return %c0_i32, %c0_i32_0 : i32, i32
  }
  func.func @transform_12(%arg0: i32) -> (i32, i32) {
    %c0_i32 = arith.constant 0 : i32
    %c0_i32_0 = arith.constant 0 : i32
    %c0_i32_1 = arith.constant 0 : i32
    return %c0_i32, %c0_i32_0 : i32, i32
  }
  func.func @transform_13(%arg0: i32) -> (i32, i32) {
    %c0_i32 = arith.constant 0 : i32
    %c0_i32_0 = arith.constant 0 : i32
    %c0_i32_1 = arith.constant 0 : i32
    return %c0_i32, %c0_i32_0 : i32, i32
  }
  func.func @transform_14(%arg0: i32) -> (i32, i32) {
    %c0_i32 = arith.constant 0 : i32
    %c0_i32_0 = arith.constant 0 : i32
    %c0_i32_1 = arith.constant 0 : i32
    return %c0_i32, %c0_i32_0 : i32, i32
  }
  func.func @transform_15(%arg0: i32) -> (i32, i32) {
    %c0_i32 = arith.constant 0 : i32
    %c0_i32_0 = arith.constant 0 : i32
    %c0_i32_1 = arith.constant 0 : i32
    return %c0_i32, %c0_i32_0 : i32, i32
  }
  func.func @transform_16(%arg0: i32) -> (i32, i32) {
    %c0_i32 = arith.constant 0 : i32
    %c0_i32_0 = arith.constant 0 : i32
    %c0_i32_1 = arith.constant 0 : i32
    return %c0_i32, %c0_i32_0 : i32, i32
  }
  func.func @transform_17(%arg0: i32) -> (i32, i32) {
    %c0_i32 = arith.constant 0 : i32
    %c0_i32_0 = arith.constant 0 : i32
    %c0_i32_1 = arith.constant 0 : i32
    return %c0_i32, %c0_i32_0 : i32, i32
  }
  func.func @transform_18(%arg0: i32) -> (i32, i32) {
    %c0_i32 = arith.constant 0 : i32
    %c0_i32_0 = arith.constant 0 : i32
    %c0_i32_1 = arith.constant 0 : i32
    return %c0_i32, %c0_i32_0 : i32, i32
  }
  func.func @transform_19(%arg0: i32) -> (i32, i32) {
    %c0_i32 = arith.constant 0 : i32
    %c0_i32_0 = arith.constant 0 : i32
    %c0_i32_1 = arith.constant 0 : i32
    return %c0_i32, %c0_i32_0 : i32, i32
  }
  func.func @transform_20(%arg0: i32) -> (i32, i32) {
    %c0_i32 = arith.constant 0 : i32
    %c0_i32_0 = arith.constant 0 : i32
    %c0_i32_1 = arith.constant 0 : i32
    return %c0_i32, %c0_i32_0 : i32, i32
  }
  func.func @transform_21(%arg0: i32) -> i32 {
    %c0_i32 = arith.constant 0 : i32
    %c0_i32_0 = arith.constant 0 : i32
    return %c0_i32 : i32
  }
  func.func @transform_22(%arg0: i32) -> (i32, i32) {
    %c0_i32 = arith.constant 0 : i32
    %c0_i32_0 = arith.constant 0 : i32
    return %arg0, %c0_i32 : i32, i32
  }
}

module attributes {stable_mosaic.version = 11 : i64} {
  func.func @cicr_kernel(%arg0: i32, %arg1: memref<16x128xbf16, #tpu.memory_space<vmem>>, %arg2: memref<16x128xbf16, #tpu.memory_space<vmem>>, %arg3: memref<16x128xbf16, #tpu.memory_space<vmem>>, %arg4: memref<128x64xbf16, #tpu.memory_space<vmem>>, %arg5: memref<1x64xf32, #tpu.memory_space<vmem>>, %arg6: memref<8x64xbf16, #tpu.memory_space<vmem>>, %arg7: memref<128x128xbf16, #tpu.memory_space<vmem>>, %arg8: memref<1x128xf32, #tpu.memory_space<vmem>>, %arg9: memref<8x128xbf16, #tpu.memory_space<vmem>>, %arg10: memref<128x128xbf16, #tpu.memory_space<vmem>>, %arg11: memref<1x128xf32, #tpu.memory_space<vmem>>, %arg12: memref<128x8xbf16, #tpu.memory_space<vmem>>, %arg13: memref<1x8xf32, #tpu.memory_space<vmem>>, %arg14: memref<128x128xbf16, #tpu.memory_space<vmem>>, %arg15: memref<1x128xf32, #tpu.memory_space<vmem>>, %arg16: memref<128x8xbf16, #tpu.memory_space<vmem>>, %arg17: memref<1x8xf32, #tpu.memory_space<vmem>>, %arg18: memref<128x128xbf16, #tpu.memory_space<vmem>>, %arg19: memref<1x128xf32, #tpu.memory_space<vmem>>, %arg20: memref<128x8xbf16, #tpu.memory_space<vmem>>, %arg21: memref<1x8xf32, #tpu.memory_space<vmem>>, %arg22: memref<1xf32, #tpu.memory_space<smem>>, %arg23: memref<16x128xf32, #tpu.memory_space<vmem>>) attributes {dimension_semantics = [#tpu.dimension_semantics<parallel>], iteration_bounds = array<i64: 1>, scalar_prefetch = 0 : i64, scratch_operands = 0 : i64, tpu.core_type = #tpu.core_type<tc>, window_params = [{transform_indices = @transform_0, window_bounds = array<i64: 16, 128>}, {transform_indices = @transform_1, window_bounds = array<i64: 16, 128>}, {transform_indices = @transform_2, window_bounds = array<i64: 16, 128>}, {pipeline_mode = #tpu.pipeline_mode<synchronous>, transform_indices = @transform_3, window_bounds = array<i64: 128, 64>}, {pipeline_mode = #tpu.pipeline_mode<synchronous>, transform_indices = @transform_4, window_bounds = array<i64: 1, 64>}, {pipeline_mode = #tpu.pipeline_mode<synchronous>, transform_indices = @transform_5, window_bounds = array<i64: 8, 64>}, {pipeline_mode = #tpu.pipeline_mode<synchronous>, transform_indices = @transform_6, window_bounds = array<i64: 128, 128>}, {pipeline_mode = #tpu.pipeline_mode<synchronous>, transform_indices = @transform_7, window_bounds = array<i64: 1, 128>}, {pipeline_mode = #tpu.pipeline_mode<synchronous>, transform_indices = @transform_8, window_bounds = array<i64: 8, 128>}, {pipeline_mode = #tpu.pipeline_mode<synchronous>, transform_indices = @transform_9, window_bounds = array<i64: 128, 128>}, {pipeline_mode = #tpu.pipeline_mode<synchronous>, transform_indices = @transform_10, window_bounds = array<i64: 1, 128>}, {pipeline_mode = #tpu.pipeline_mode<synchronous>, transform_indices = @transform_11, window_bounds = array<i64: 128, 8>}, {pipeline_mode = #tpu.pipeline_mode<synchronous>, transform_indices = @transform_12, window_bounds = array<i64: 1, 8>}, {pipeline_mode = #tpu.pipeline_mode<synchronous>, transform_indices = @transform_13, window_bounds = array<i64: 128, 128>}, {pipeline_mode = #tpu.pipeline_mode<synchronous>, transform_indices = @transform_14, window_bounds = array<i64: 1, 128>}, {pipeline_mode = #tpu.pipeline_mode<synchronous>, transform_indices = @transform_15, window_bounds = array<i64: 128, 8>}, {pipeline_mode = #tpu.pipeline_mode<synchronous>, transform_indices = @transform_16, window_bounds = array<i64: 1, 8>}, {pipeline_mode = #tpu.pipeline_mode<synchronous>, transform_indices = @transform_17, window_bounds = array<i64: 128, 128>}, {pipeline_mode = #tpu.pipeline_mode<synchronous>, transform_indices = @transform_18, window_bounds = array<i64: 1, 128>}, {pipeline_mode = #tpu.pipeline_mode<synchronous>, transform_indices = @transform_19, window_bounds = array<i64: 128, 8>}, {pipeline_mode = #tpu.pipeline_mode<synchronous>, transform_indices = @transform_20, window_bounds = array<i64: 1, 8>}, {transform_indices = @transform_21, window_bounds = array<i64: 1>}, {transform_indices = @transform_22, window_bounds = array<i64: 16, 128>}]} {
    %c0 = arith.constant 0 : index
    %c0_0 = arith.constant 0 : index
    %0 = vector.load %arg1[%c0, %c0_0] : memref<16x128xbf16, #tpu.memory_space<vmem>>, vector<16x128xbf16>
    %c0_1 = arith.constant 0 : index
    %c0_2 = arith.constant 0 : index
    %1 = vector.load %arg4[%c0_1, %c0_2] : memref<128x64xbf16, #tpu.memory_space<vmem>>, vector<128x64xbf16>
    %cst = arith.constant dense<0.000000e+00> : vector<16x64xf32>
    %2 = tpu.matmul %0, %1, %cst {dimension_numbers = #tpu.dot_dimension_numbers<[1], [0], [0], [1], [0, 0, 1, 1], [], []>} : vector<16x128xbf16>, vector<128x64xbf16>, vector<16x64xf32> -> vector<16x64xf32>
    %c0_3 = arith.constant 0 : index
    %c0_4 = arith.constant 0 : index
    %3 = vector.load %arg5[%c0_3, %c0_4] : memref<1x64xf32, #tpu.memory_space<vmem>>, vector<1x64xf32>
    %4 = vector.broadcast %3 : vector<1x64xf32> to vector<16x64xf32>
    %5 = arith.addf %2, %4 : vector<16x64xf32>
    %6 = arith.truncf %5 : vector<16x64xf32> to vector<16x64xbf16>
    %c0_5 = arith.constant 0 : index
    %c0_6 = arith.constant 0 : index
    %7 = vector.load %arg6[%c0_5, %c0_6] : memref<8x64xbf16, #tpu.memory_space<vmem>>, vector<8x64xbf16>
    %cst_7 = arith.constant dense<0.000000e+00> : vector<16x8xf32>
    %8 = tpu.matmul %6, %7, %cst_7 {dimension_numbers = #tpu.dot_dimension_numbers<[1], [1], [0], [0], [0, 0, 1, 0], [], []>} : vector<16x64xbf16>, vector<8x64xbf16>, vector<16x8xf32> -> vector<16x8xf32>
    %cst_8 = arith.constant dense<0xFF800000> : vector<16xf32>
    %9 = vector.multi_reduction <maximumf>, %8, %cst_8 [1] : vector<16x8xf32> to vector<16xf32>
    %10 = vector.shape_cast %9 : vector<16xf32> to vector<16x1xf32>
    %11 = vector.broadcast %10 : vector<16x1xf32> to vector<16x8xf32>
    %12 = arith.subf %8, %11 : vector<16x8xf32>
    %13 = math.exp %12 : vector<16x8xf32>
    %cst_9 = arith.constant dense<0.000000e+00> : vector<16xf32>
    %14 = vector.multi_reduction <add>, %13, %cst_9 [1] : vector<16x8xf32> to vector<16xf32>
    %15 = vector.shape_cast %14 : vector<16xf32> to vector<16x1xf32>
    %16 = vector.broadcast %15 : vector<16x1xf32> to vector<16x8xf32>
    %17 = arith.divf %13, %16 : vector<16x8xf32>
    %c0_10 = arith.constant 0 : index
    %c0_11 = arith.constant 0 : index
    %18 = vector.load %arg7[%c0_10, %c0_11] : memref<128x128xbf16, #tpu.memory_space<vmem>>, vector<128x128xbf16>
    %cst_12 = arith.constant dense<0.000000e+00> : vector<16x128xf32>
    %19 = tpu.matmul %0, %18, %cst_12 {dimension_numbers = #tpu.dot_dimension_numbers<[1], [0], [0], [1], [0, 0, 1, 1], [], []>} : vector<16x128xbf16>, vector<128x128xbf16>, vector<16x128xf32> -> vector<16x128xf32>
    %c0_13 = arith.constant 0 : index
    %c0_14 = arith.constant 0 : index
    %20 = vector.load %arg9[%c0_13, %c0_14] : memref<8x128xbf16, #tpu.memory_space<vmem>>, vector<8x128xbf16>
    %21 = arith.truncf %17 : vector<16x8xf32> to vector<16x8xbf16>
    %cst_15 = arith.constant dense<0.000000e+00> : vector<16x128xf32>
    %22 = tpu.matmul %21, %20, %cst_15 {dimension_numbers = #tpu.dot_dimension_numbers<[1], [0], [0], [1], [0, 0, 1, 1], [], []>} : vector<16x8xbf16>, vector<8x128xbf16>, vector<16x128xf32> -> vector<16x128xf32>
    %23 = arith.addf %19, %22 : vector<16x128xf32>
    %c0_16 = arith.constant 0 : index
    %c0_17 = arith.constant 0 : index
    %24 = vector.load %arg8[%c0_16, %c0_17] : memref<1x128xf32, #tpu.memory_space<vmem>>, vector<1x128xf32>
    %25 = vector.broadcast %24 : vector<1x128xf32> to vector<16x128xf32>
    %26 = arith.addf %23, %25 : vector<16x128xf32>
    %c0_18 = arith.constant 0 : index
    %c0_19 = arith.constant 0 : index
    %27 = vector.load %arg10[%c0_18, %c0_19] : memref<128x128xbf16, #tpu.memory_space<vmem>>, vector<128x128xbf16>
    %c0_20 = arith.constant 0 : index
    %c0_21 = arith.constant 0 : index
    %28 = vector.load %arg11[%c0_20, %c0_21] : memref<1x128xf32, #tpu.memory_space<vmem>>, vector<1x128xf32>
    %c0_22 = arith.constant 0 : index
    %c0_23 = arith.constant 0 : index
    %29 = vector.load %arg12[%c0_22, %c0_23] : memref<128x8xbf16, #tpu.memory_space<vmem>>, vector<128x8xbf16>
    %c0_24 = arith.constant 0 : index
    %c0_25 = arith.constant 0 : index
    %30 = vector.load %arg13[%c0_24, %c0_25] : memref<1x8xf32, #tpu.memory_space<vmem>>, vector<1x8xf32>
    %31 = arith.truncf %26 : vector<16x128xf32> to vector<16x128xbf16>
    %cst_26 = arith.constant dense<0.000000e+00> : vector<16x128xf32>
    %32 = tpu.matmul %31, %27, %cst_26 {dimension_numbers = #tpu.dot_dimension_numbers<[1], [0], [0], [1], [0, 0, 1, 1], [], []>} : vector<16x128xbf16>, vector<128x128xbf16>, vector<16x128xf32> -> vector<16x128xf32>
    %33 = vector.broadcast %28 : vector<1x128xf32> to vector<16x128xf32>
    %34 = arith.addf %32, %33 : vector<16x128xf32>
    %cst_27 = arith.constant 0.000000e+00 : f32
    %35 = vector.broadcast %cst_27 : f32 to vector<16x128xf32>
    %36 = arith.maximumf %34, %35 : vector<16x128xf32>
    %37 = arith.truncf %36 : vector<16x128xf32> to vector<16x128xbf16>
    %cst_28 = arith.constant dense<0.000000e+00> : vector<16x8xf32>
    %38 = tpu.matmul %37, %29, %cst_28 {dimension_numbers = #tpu.dot_dimension_numbers<[1], [0], [0], [1], [0, 0, 1, 1], [], []>} : vector<16x128xbf16>, vector<128x8xbf16>, vector<16x8xf32> -> vector<16x8xf32>
    %39 = vector.broadcast %30 : vector<1x8xf32> to vector<16x8xf32>
    %40 = arith.addf %38, %39 : vector<16x8xf32>
    %cst_29 = arith.constant 0.000000e+00 : f32
    %41 = vector.broadcast %cst_29 : f32 to vector<16x8xf32>
    %42 = arith.maximumf %40, %41 : vector<16x8xf32>
    %c0_30 = arith.constant 0 : index
    %c0_31 = arith.constant 0 : index
    %43 = vector.load %arg3[%c0_30, %c0_31] : memref<16x128xbf16, #tpu.memory_space<vmem>>, vector<16x128xbf16>
    %c0_32 = arith.constant 0 : index
    %c0_33 = arith.constant 0 : index
    %44 = vector.load %arg14[%c0_32, %c0_33] : memref<128x128xbf16, #tpu.memory_space<vmem>>, vector<128x128xbf16>
    %c0_34 = arith.constant 0 : index
    %c0_35 = arith.constant 0 : index
    %45 = vector.load %arg15[%c0_34, %c0_35] : memref<1x128xf32, #tpu.memory_space<vmem>>, vector<1x128xf32>
    %c0_36 = arith.constant 0 : index
    %c0_37 = arith.constant 0 : index
    %46 = vector.load %arg16[%c0_36, %c0_37] : memref<128x8xbf16, #tpu.memory_space<vmem>>, vector<128x8xbf16>
    %c0_38 = arith.constant 0 : index
    %c0_39 = arith.constant 0 : index
    %47 = vector.load %arg17[%c0_38, %c0_39] : memref<1x8xf32, #tpu.memory_space<vmem>>, vector<1x8xf32>
    %cst_40 = arith.constant dense<0.000000e+00> : vector<16x128xf32>
    %48 = tpu.matmul %43, %44, %cst_40 {dimension_numbers = #tpu.dot_dimension_numbers<[1], [0], [0], [1], [0, 0, 1, 1], [], []>} : vector<16x128xbf16>, vector<128x128xbf16>, vector<16x128xf32> -> vector<16x128xf32>
    %49 = vector.broadcast %45 : vector<1x128xf32> to vector<16x128xf32>
    %50 = arith.addf %48, %49 : vector<16x128xf32>
    %cst_41 = arith.constant 0.000000e+00 : f32
    %51 = vector.broadcast %cst_41 : f32 to vector<16x128xf32>
    %52 = arith.cmpf ogt, %50, %51 : vector<16x128xf32>
    %cst_42 = arith.constant 0.000000e+00 : f32
    %53 = vector.broadcast %cst_42 : f32 to vector<16x128xf32>
    %54 = arith.minimumf %50, %53 : vector<16x128xf32>
    %55 = math.exp %54 : vector<16x128xf32>
    %cst_43 = arith.constant 1.000000e+00 : f32
    %56 = vector.broadcast %cst_43 : f32 to vector<16x128xf32>
    %57 = arith.subf %55, %56 : vector<16x128xf32>
    %58 = arith.select %52, %50, %57 : vector<16x128xi1>, vector<16x128xf32>
    %59 = arith.truncf %58 : vector<16x128xf32> to vector<16x128xbf16>
    %cst_44 = arith.constant dense<0.000000e+00> : vector<16x8xf32>
    %60 = tpu.matmul %59, %46, %cst_44 {dimension_numbers = #tpu.dot_dimension_numbers<[1], [0], [0], [1], [0, 0, 1, 1], [], []>} : vector<16x128xbf16>, vector<128x8xbf16>, vector<16x8xf32> -> vector<16x8xf32>
    %61 = vector.broadcast %47 : vector<1x8xf32> to vector<16x8xf32>
    %62 = arith.addf %60, %61 : vector<16x8xf32>
    %cst_45 = arith.constant 0.000000e+00 : f32
    %63 = vector.broadcast %cst_45 : f32 to vector<16x8xf32>
    %64 = arith.cmpf ogt, %62, %63 : vector<16x8xf32>
    %cst_46 = arith.constant 0.000000e+00 : f32
    %65 = vector.broadcast %cst_46 : f32 to vector<16x8xf32>
    %66 = arith.minimumf %62, %65 : vector<16x8xf32>
    %67 = math.exp %66 : vector<16x8xf32>
    %cst_47 = arith.constant 1.000000e+00 : f32
    %68 = vector.broadcast %cst_47 : f32 to vector<16x8xf32>
    %69 = arith.subf %67, %68 : vector<16x8xf32>
    %70 = arith.select %64, %62, %69 : vector<16x8xi1>, vector<16x8xf32>
    %c0_48 = arith.constant 0 : index
    %c0_49 = arith.constant 0 : index
    %71 = vector.load %arg2[%c0_48, %c0_49] : memref<16x128xbf16, #tpu.memory_space<vmem>>, vector<16x128xbf16>
    %c0_50 = arith.constant 0 : index
    %c0_51 = arith.constant 0 : index
    %72 = vector.load %arg18[%c0_50, %c0_51] : memref<128x128xbf16, #tpu.memory_space<vmem>>, vector<128x128xbf16>
    %c0_52 = arith.constant 0 : index
    %c0_53 = arith.constant 0 : index
    %73 = vector.load %arg19[%c0_52, %c0_53] : memref<1x128xf32, #tpu.memory_space<vmem>>, vector<1x128xf32>
    %c0_54 = arith.constant 0 : index
    %c0_55 = arith.constant 0 : index
    %74 = vector.load %arg20[%c0_54, %c0_55] : memref<128x8xbf16, #tpu.memory_space<vmem>>, vector<128x8xbf16>
    %c0_56 = arith.constant 0 : index
    %c0_57 = arith.constant 0 : index
    %75 = vector.load %arg21[%c0_56, %c0_57] : memref<1x8xf32, #tpu.memory_space<vmem>>, vector<1x8xf32>
    %cst_58 = arith.constant dense<0.000000e+00> : vector<16x128xf32>
    %76 = tpu.matmul %71, %72, %cst_58 {dimension_numbers = #tpu.dot_dimension_numbers<[1], [0], [0], [1], [0, 0, 1, 1], [], []>} : vector<16x128xbf16>, vector<128x128xbf16>, vector<16x128xf32> -> vector<16x128xf32>
    %77 = vector.broadcast %73 : vector<1x128xf32> to vector<16x128xf32>
    %78 = arith.addf %76, %77 : vector<16x128xf32>
    %cst_59 = arith.constant 0.000000e+00 : f32
    %79 = vector.broadcast %cst_59 : f32 to vector<16x128xf32>
    %80 = arith.cmpf ogt, %78, %79 : vector<16x128xf32>
    %cst_60 = arith.constant 0.000000e+00 : f32
    %81 = vector.broadcast %cst_60 : f32 to vector<16x128xf32>
    %82 = arith.minimumf %78, %81 : vector<16x128xf32>
    %83 = math.exp %82 : vector<16x128xf32>
    %cst_61 = arith.constant 1.000000e+00 : f32
    %84 = vector.broadcast %cst_61 : f32 to vector<16x128xf32>
    %85 = arith.subf %83, %84 : vector<16x128xf32>
    %86 = arith.select %80, %78, %85 : vector<16x128xi1>, vector<16x128xf32>
    %87 = arith.truncf %86 : vector<16x128xf32> to vector<16x128xbf16>
    %cst_62 = arith.constant dense<0.000000e+00> : vector<16x8xf32>
    %88 = tpu.matmul %87, %74, %cst_62 {dimension_numbers = #tpu.dot_dimension_numbers<[1], [0], [0], [1], [0, 0, 1, 1], [], []>} : vector<16x128xbf16>, vector<128x8xbf16>, vector<16x8xf32> -> vector<16x8xf32>
    %89 = vector.broadcast %75 : vector<1x8xf32> to vector<16x8xf32>
    %90 = arith.addf %88, %89 : vector<16x8xf32>
    %cst_63 = arith.constant 0.000000e+00 : f32
    %91 = vector.broadcast %cst_63 : f32 to vector<16x8xf32>
    %92 = arith.cmpf ogt, %90, %91 : vector<16x8xf32>
    %cst_64 = arith.constant 0.000000e+00 : f32
    %93 = vector.broadcast %cst_64 : f32 to vector<16x8xf32>
    %94 = arith.minimumf %90, %93 : vector<16x8xf32>
    %95 = math.exp %94 : vector<16x8xf32>
    %cst_65 = arith.constant 1.000000e+00 : f32
    %96 = vector.broadcast %cst_65 : f32 to vector<16x8xf32>
    %97 = arith.subf %95, %96 : vector<16x8xf32>
    %98 = arith.select %92, %90, %97 : vector<16x8xi1>, vector<16x8xf32>
    %99 = arith.addf %42, %70 : vector<16x8xf32>
    %100 = arith.addf %99, %98 : vector<16x8xf32>
    %cst_66 = arith.constant 0.000000e+00 : f32
    %101 = vector.broadcast %cst_66 : f32 to vector<16x8xf32>
    %102 = arith.subf %101, %100 : vector<16x8xf32>
    %cst_67 = arith.constant 0.000000e+00 : f32
    %103 = vector.broadcast %cst_67 : f32 to vector<16x8xf32>
    %104 = arith.maximumf %102, %103 : vector<16x8xf32>
    %105 = math.absf %102 : vector<16x8xf32>
    %cst_68 = arith.constant 0.000000e+00 : f32
    %106 = vector.broadcast %cst_68 : f32 to vector<16x8xf32>
    %107 = arith.subf %106, %105 : vector<16x8xf32>
    %108 = math.exp %107 : vector<16x8xf32>
    %cst_69 = arith.constant 1.000000e+00 : f32
    %109 = vector.broadcast %cst_69 : f32 to vector<16x8xf32>
    %110 = arith.addf %109, %108 : vector<16x8xf32>
    %111 = math.log %110 : vector<16x8xf32>
    %112 = arith.addf %104, %111 : vector<16x8xf32>
    %cst_70 = arith.constant 0.000000e+00 : f32
    %113 = vector.broadcast %cst_70 : f32 to vector<16x8xf32>
    %114 = arith.subf %113, %112 : vector<16x8xf32>
    %115 = math.exp %114 : vector<16x8xf32>
    %cst_71 = arith.constant 9.99999993E-9 : f32
    %116 = vector.broadcast %cst_71 : f32 to vector<16x8xf32>
    %117 = arith.addf %116, %115 : vector<16x8xf32>
    %118 = math.log %117 : vector<16x8xf32>
    %c0_72 = arith.constant 0 : index
    %119 = memref.load %arg22[%c0_72] : memref<1xf32, #tpu.memory_space<smem>>
    %cst_73 = arith.constant 2.000000e+00 : f32
    %120 = arith.mulf %cst_73, %119 : f32
    %121 = vector.broadcast %120 : f32 to vector<16x8xf32>
    %122 = arith.addf %42, %121 : vector<16x8xf32>
    %cst_74 = arith.constant 0.000000e+00 : f32
    %123 = vector.broadcast %cst_74 : f32 to vector<16x8xf32>
    %124 = arith.subf %123, %122 : vector<16x8xf32>
    %cst_75 = arith.constant 0.000000e+00 : f32
    %125 = vector.broadcast %cst_75 : f32 to vector<16x8xf32>
    %126 = arith.maximumf %124, %125 : vector<16x8xf32>
    %127 = math.absf %124 : vector<16x8xf32>
    %cst_76 = arith.constant 0.000000e+00 : f32
    %128 = vector.broadcast %cst_76 : f32 to vector<16x8xf32>
    %129 = arith.subf %128, %127 : vector<16x8xf32>
    %130 = math.exp %129 : vector<16x8xf32>
    %cst_77 = arith.constant 1.000000e+00 : f32
    %131 = vector.broadcast %cst_77 : f32 to vector<16x8xf32>
    %132 = arith.addf %131, %130 : vector<16x8xf32>
    %133 = math.log %132 : vector<16x8xf32>
    %134 = arith.addf %126, %133 : vector<16x8xf32>
    %cst_78 = arith.constant 0.000000e+00 : f32
    %135 = vector.broadcast %cst_78 : f32 to vector<16x8xf32>
    %136 = arith.subf %135, %134 : vector<16x8xf32>
    %137 = math.exp %136 : vector<16x8xf32>
    %cst_79 = arith.constant 9.99999993E-9 : f32
    %138 = vector.broadcast %cst_79 : f32 to vector<16x8xf32>
    %139 = arith.addf %138, %137 : vector<16x8xf32>
    %140 = math.log %139 : vector<16x8xf32>
    %141 = arith.subf %118, %140 : vector<16x8xf32>
    %142 = tpu.concatenate %42, %70, %118, %140, %141 in 1 : vector<16x8xf32>, vector<16x8xf32>, vector<16x8xf32>, vector<16x8xf32>, vector<16x8xf32> -> vector<16x40xf32>
    %cst_80 = arith.constant 0.000000e+00 : f32
    %143 = vector.broadcast %cst_80 : f32 to vector<16x88xf32>
    %144 = tpu.concatenate %142, %143 in 1 : vector<16x40xf32>, vector<16x88xf32> -> vector<16x128xf32>
    %c0_81 = arith.constant 0 : index
    %c0_82 = arith.constant 0 : index
    %145 = vector.load %arg23[%c0_81, %c0_82] : memref<16x128xf32, #tpu.memory_space<vmem>>, vector<16x128xf32>
    tpu.vector_store %arg23[%c0_81, %c0_82], %144 {strides = array<i32>} : memref<16x128xf32, #tpu.memory_space<vmem>>, vector<16x128xf32>,
    return
  }
  func.func @transform_0(%arg0: i32) -> (i32, i32) {
    %c0_i32 = arith.constant 0 : i32
    %c0_i32_0 = arith.constant 0 : i32
    return %arg0, %c0_i32 : i32, i32
  }
  func.func @transform_1(%arg0: i32) -> (i32, i32) {
    %c0_i32 = arith.constant 0 : i32
    %c0_i32_0 = arith.constant 0 : i32
    return %arg0, %c0_i32 : i32, i32
  }
  func.func @transform_2(%arg0: i32) -> (i32, i32) {
    %c0_i32 = arith.constant 0 : i32
    %c0_i32_0 = arith.constant 0 : i32
    return %arg0, %c0_i32 : i32, i32
  }
  func.func @transform_3(%arg0: i32) -> (i32, i32) {
    %c0_i32 = arith.constant 0 : i32
    %c0_i32_0 = arith.constant 0 : i32
    %c0_i32_1 = arith.constant 0 : i32
    return %c0_i32, %c0_i32_0 : i32, i32
  }
  func.func @transform_4(%arg0: i32) -> (i32, i32) {
    %c0_i32 = arith.constant 0 : i32
    %c0_i32_0 = arith.constant 0 : i32
    %c0_i32_1 = arith.constant 0 : i32
    return %c0_i32, %c0_i32_0 : i32, i32
  }
  func.func @transform_5(%arg0: i32) -> (i32, i32) {
    %c0_i32 = arith.constant 0 : i32
    %c0_i32_0 = arith.constant 0 : i32
    %c0_i32_1 = arith.constant 0 : i32
    return %c0_i32, %c0_i32_0 : i32, i32
  }
  func.func @transform_6(%arg0: i32) -> (i32, i32) {
    %c0_i32 = arith.constant 0 : i32
    %c0_i32_0 = arith.constant 0 : i32
    %c0_i32_1 = arith.constant 0 : i32
    return %c0_i32, %c0_i32_0 : i32, i32
  }
  func.func @transform_7(%arg0: i32) -> (i32, i32) {
    %c0_i32 = arith.constant 0 : i32
    %c0_i32_0 = arith.constant 0 : i32
    %c0_i32_1 = arith.constant 0 : i32
    return %c0_i32, %c0_i32_0 : i32, i32
  }
  func.func @transform_8(%arg0: i32) -> (i32, i32) {
    %c0_i32 = arith.constant 0 : i32
    %c0_i32_0 = arith.constant 0 : i32
    %c0_i32_1 = arith.constant 0 : i32
    return %c0_i32, %c0_i32_0 : i32, i32
  }
  func.func @transform_9(%arg0: i32) -> (i32, i32) {
    %c0_i32 = arith.constant 0 : i32
    %c0_i32_0 = arith.constant 0 : i32
    %c0_i32_1 = arith.constant 0 : i32
    return %c0_i32, %c0_i32_0 : i32, i32
  }
  func.func @transform_10(%arg0: i32) -> (i32, i32) {
    %c0_i32 = arith.constant 0 : i32
    %c0_i32_0 = arith.constant 0 : i32
    %c0_i32_1 = arith.constant 0 : i32
    return %c0_i32, %c0_i32_0 : i32, i32
  }
  func.func @transform_11(%arg0: i32) -> (i32, i32) {
    %c0_i32 = arith.constant 0 : i32
    %c0_i32_0 = arith.constant 0 : i32
    %c0_i32_1 = arith.constant 0 : i32
    return %c0_i32, %c0_i32_0 : i32, i32
  }
  func.func @transform_12(%arg0: i32) -> (i32, i32) {
    %c0_i32 = arith.constant 0 : i32
    %c0_i32_0 = arith.constant 0 : i32
    %c0_i32_1 = arith.constant 0 : i32
    return %c0_i32, %c0_i32_0 : i32, i32
  }
  func.func @transform_13(%arg0: i32) -> (i32, i32) {
    %c0_i32 = arith.constant 0 : i32
    %c0_i32_0 = arith.constant 0 : i32
    %c0_i32_1 = arith.constant 0 : i32
    return %c0_i32, %c0_i32_0 : i32, i32
  }
  func.func @transform_14(%arg0: i32) -> (i32, i32) {
    %c0_i32 = arith.constant 0 : i32
    %c0_i32_0 = arith.constant 0 : i32
    %c0_i32_1 = arith.constant 0 : i32
    return %c0_i32, %c0_i32_0 : i32, i32
  }
  func.func @transform_15(%arg0: i32) -> (i32, i32) {
    %c0_i32 = arith.constant 0 : i32
    %c0_i32_0 = arith.constant 0 : i32
    %c0_i32_1 = arith.constant 0 : i32
    return %c0_i32, %c0_i32_0 : i32, i32
  }
  func.func @transform_16(%arg0: i32) -> (i32, i32) {
    %c0_i32 = arith.constant 0 : i32
    %c0_i32_0 = arith.constant 0 : i32
    %c0_i32_1 = arith.constant 0 : i32
    return %c0_i32, %c0_i32_0 : i32, i32
  }
  func.func @transform_17(%arg0: i32) -> (i32, i32) {
    %c0_i32 = arith.constant 0 : i32
    %c0_i32_0 = arith.constant 0 : i32
    %c0_i32_1 = arith.constant 0 : i32
    return %c0_i32, %c0_i32_0 : i32, i32
  }
  func.func @transform_18(%arg0: i32) -> (i32, i32) {
    %c0_i32 = arith.constant 0 : i32
    %c0_i32_0 = arith.constant 0 : i32
    %c0_i32_1 = arith.constant 0 : i32
    return %c0_i32, %c0_i32_0 : i32, i32
  }
  func.func @transform_19(%arg0: i32) -> (i32, i32) {
    %c0_i32 = arith.constant 0 : i32
    %c0_i32_0 = arith.constant 0 : i32
    %c0_i32_1 = arith.constant 0 : i32
    return %c0_i32, %c0_i32_0 : i32, i32
  }
  func.func @transform_20(%arg0: i32) -> (i32, i32) {
    %c0_i32 = arith.constant 0 : i32
    %c0_i32_0 = arith.constant 0 : i32
    %c0_i32_1 = arith.constant 0 : i32
    return %c0_i32, %c0_i32_0 : i32, i32
  }
  func.func @transform_21(%arg0: i32) -> i32 {
    %c0_i32 = arith.constant 0 : i32
    %c0_i32_0 = arith.constant 0 : i32
    return %c0_i32 : i32
  }
  func.func @transform_22(%arg0: i32) -> (i32, i32) {
    %c0_i32 = arith.constant 0 : i32
    %c0_i32_0 = arith.constant 0 : i32
    return %arg0, %c0_i32 : i32, i32
  }
}

</mosaic_0001>

<llo_original>
// kernel: tpu_custom_call.1
$region0: #{tpu_custom_call.1}
  #allocation0 [shape = 'u32[]', space=smem, size = 0x4, offset = 0x4, fixed_abs, tag = 'smem constant byte address 0x4 - core index']
  #allocation1 [shape = 'u32[144,128]{1,0:T(1,128)}', space=vmem, size = 0x12000, scoped, tag = 'internal scratch']
  #allocation2 [shape = 'f32[1]{0:T(128)S(6)}', space=smem, size = 0x200, scoped, tag = 'scoped memory for tpu_custom_call.1']
  %s0 = inlined_call_operand.vmem [shape: bf16[16,128], index: 0, kind: input, shape index: {}]
  %s1 = inlined_call_operand.vmem [shape: bf16[16,128], index: 1, kind: input, shape index: {}]
  %s2 = inlined_call_operand.vmem [shape: bf16[16,128], index: 2, kind: input, shape index: {}]
  %s3 = inlined_call_operand.vmem [shape: bf16[128,64], index: 3, kind: input, shape index: {}]
  %s4 = inlined_call_operand.vmem [shape: f32[1,64], index: 4, kind: input, shape index: {}]
  %s5 = inlined_call_operand.vmem [shape: bf16[8,64], index: 5, kind: input, shape index: {}]
  %s6 = inlined_call_operand.vmem [shape: bf16[128,128], index: 6, kind: input, shape index: {}]
  %s7 = inlined_call_operand.vmem [shape: f32[1,128], index: 7, kind: input, shape index: {}]
  %s8 = inlined_call_operand.vmem [shape: bf16[8,128], index: 8, kind: input, shape index: {}]
  %s9 = inlined_call_operand.vmem [shape: bf16[128,128], index: 9, kind: input, shape index: {}]
  %s10 = inlined_call_operand.vmem [shape: f32[1,128], index: 10, kind: input, shape index: {}]
  %s11 = inlined_call_operand.vmem [shape: bf16[128,8], index: 11, kind: input, shape index: {}]
  %s12 = inlined_call_operand.vmem [shape: f32[1,8], index: 12, kind: input, shape index: {}]
  %s13 = inlined_call_operand.vmem [shape: bf16[128,128], index: 13, kind: input, shape index: {}]
  %s14 = inlined_call_operand.vmem [shape: f32[1,128], index: 14, kind: input, shape index: {}]
  %s15 = inlined_call_operand.vmem [shape: bf16[128,8], index: 15, kind: input, shape index: {}]
  %s16 = inlined_call_operand.vmem [shape: f32[1,8], index: 16, kind: input, shape index: {}]
  %s17 = inlined_call_operand.vmem [shape: bf16[128,128], index: 17, kind: input, shape index: {}]
  %s18 = inlined_call_operand.vmem [shape: f32[1,128], index: 18, kind: input, shape index: {}]
  %s19 = inlined_call_operand.vmem [shape: bf16[128,8], index: 19, kind: input, shape index: {}]
  %s20 = inlined_call_operand.vmem [shape: f32[1,8], index: 20, kind: input, shape index: {}]
  %s21 = inlined_call_operand.<no memory space> [shape: f32[1], index: 21, kind: input, shape index: {}]
  %s22 = inlined_call_operand.hbm [shape: f32[16,128], index: 22, kind: output, shape index: {}]
  %s23 = sld [smem:[#allocation0]]
  $region98: #{tpu_custom_call.1} parent=0
    _
  %s25 = ssub.s32 1, %s23
  %s26 = scalar_select 0, %s25, %s23
  %27 = sst [smem:[#allocation2]] %s21
  $region1: #{tpu_custom_call.1} parent=0
    #allocation3 [shape = 'u8[8192]{0}', space=vmem, size = 0x2000, scoped, tag = 'output window, operand 0, single buffered']
    #allocation4 [shape = 's32[1]{0}', space=sflag, size = 0x4, scoped, tag = 'scoped memory for tpu_custom_call.1']
    %28 = vsyncpa [#allocation4], 0
    // Predicated region
    $region2: #{tpu_custom_call.1} parent=1 // pred_check
      _
    $region3: #{tpu_custom_call.1} parent=1 // pred_check_branch
      %30 = sbr.rel (0) target = $region5
    $region4: #{tpu_custom_call.1} parent=1 // pred_region
      _
    $region5: #{tpu_custom_call.1} parent=1 // pred_fallthru
      _
    // Predicated region
    $region6: #{tpu_custom_call.1} parent=1 // pred_check
      _
    $region7: #{tpu_custom_call.1} parent=1 // pred_check_branch
      %32 = sbr.rel (0) target = $region9
    $region8: #{tpu_custom_call.1} parent=1 // pred_region
      _
    $region9: #{tpu_custom_call.1} parent=1 // pred_fallthru
      _
    // Predicated region
    $region10: #{tpu_custom_call.1} parent=1 // pred_check
      _
    $region11: #{tpu_custom_call.1} parent=1 // pred_check_branch
      %34 = sbr.rel (0) target = $region13
    $region12: #{tpu_custom_call.1} parent=1 // pred_region
      _
    $region13: #{tpu_custom_call.1} parent=1 // pred_fallthru
      _
    // Predicated region
    $region14: #{tpu_custom_call.1} parent=1 // pred_check
      _
    $region15: #{tpu_custom_call.1} parent=1 // pred_check_branch
      %36 = sbr.rel (0) target = $region17
    $region16: #{tpu_custom_call.1} parent=1 // pred_region
      _
    $region17: #{tpu_custom_call.1} parent=1 // pred_fallthru
      _
    // Predicated region
    $region18: #{tpu_custom_call.1} parent=1 // pred_check
      _
    $region19: #{tpu_custom_call.1} parent=1 // pred_check_branch
      %38 = sbr.rel (0) target = $region21
    $region20: #{tpu_custom_call.1} parent=1 // pred_region
      _
    $region21: #{tpu_custom_call.1} parent=1 // pred_fallthru
      _
    // Predicated region
    $region22: #{tpu_custom_call.1} parent=1 // pred_check
      _
    $region23: #{tpu_custom_call.1} parent=1 // pred_check_branch
      %40 = sbr.rel (0) target = $region25
    $region24: #{tpu_custom_call.1} parent=1 // pred_region
      _
    $region25: #{tpu_custom_call.1} parent=1 // pred_fallthru
      _
    // Predicated region
    $region26: #{tpu_custom_call.1} parent=1 // pred_check
      _
    $region27: #{tpu_custom_call.1} parent=1 // pred_check_branch
      %42 = sbr.rel (0) target = $region29
    $region28: #{tpu_custom_call.1} parent=1 // pred_region
      _
    $region29: #{tpu_custom_call.1} parent=1 // pred_fallthru
      _
    // Predicated region
    $region30: #{tpu_custom_call.1} parent=1 // pred_check
      _
    $region31: #{tpu_custom_call.1} parent=1 // pred_check_branch
      %44 = sbr.rel (0) target = $region33
    $region32: #{tpu_custom_call.1} parent=1 // pred_region
      _
    $region33: #{tpu_custom_call.1} parent=1 // pred_fallthru
      _
    // Predicated region
    $region34: #{tpu_custom_call.1} parent=1 // pred_check
      _
    $region35: #{tpu_custom_call.1} parent=1 // pred_check_branch
      %46 = sbr.rel (0) target = $region37
    $region36: #{tpu_custom_call.1} parent=1 // pred_region
      _
    $region37: #{tpu_custom_call.1} parent=1 // pred_fallthru
      _
    // Predicated region
    $region38: #{tpu_custom_call.1} parent=1 // pred_check
      _
    $region39: #{tpu_custom_call.1} parent=1 // pred_check_branch
      %48 = sbr.rel (0) target = $region41
    $region40: #{tpu_custom_call.1} parent=1 // pred_region
      _
    $region41: #{tpu_custom_call.1} parent=1 // pred_fallthru
      _
    // Predicated region
    $region42: #{tpu_custom_call.1} parent=1 // pred_check
      _
    $region43: #{tpu_custom_call.1} parent=1 // pred_check_branch
      %50 = sbr.rel (0) target = $region45
    $region44: #{tpu_custom_call.1} parent=1 // pred_region
      _
    $region45: #{tpu_custom_call.1} parent=1 // pred_fallthru
      _
    // Predicated region
    $region46: #{tpu_custom_call.1} parent=1 // pred_check
      _
    $region47: #{tpu_custom_call.1} parent=1 // pred_check_branch
      %52 = sbr.rel (0) target = $region49
    $region48: #{tpu_custom_call.1} parent=1 // pred_region
      _
    $region49: #{tpu_custom_call.1} parent=1 // pred_fallthru
      _
    // Predicated region
    $region50: #{tpu_custom_call.1} parent=1 // pred_check
      _
    $region51: #{tpu_custom_call.1} parent=1 // pred_check_branch
      %54 = sbr.rel (0) target = $region53
    $region52: #{tpu_custom_call.1} parent=1 // pred_region
      _
    $region53: #{tpu_custom_call.1} parent=1 // pred_fallthru
      _
    // Predicated region
    $region54: #{tpu_custom_call.1} parent=1 // pred_check
      _
    $region55: #{tpu_custom_call.1} parent=1 // pred_check_branch
      %56 = sbr.rel (0) target = $region57
    $region56: #{tpu_custom_call.1} parent=1 // pred_region
      _
    $region57: #{tpu_custom_call.1} parent=1 // pred_fallthru
      _
    // Predicated region
    $region58: #{tpu_custom_call.1} parent=1 // pred_check
      _
    $region59: #{tpu_custom_call.1} parent=1 // pred_check_branch
      %58 = sbr.rel (0) target = $region61
    $region60: #{tpu_custom_call.1} parent=1 // pred_region
      _
    $region61: #{tpu_custom_call.1} parent=1 // pred_fallthru
      _
    // Predicated region
    $region62: #{tpu_custom_call.1} parent=1 // pred_check
      _
    $region63: #{tpu_custom_call.1} parent=1 // pred_check_branch
      %60 = sbr.rel (0) target = $region65
    $region64: #{tpu_custom_call.1} parent=1 // pred_region
      _
    $region65: #{tpu_custom_call.1} parent=1 // pred_fallthru
      _
    // Predicated region
    $region66: #{tpu_custom_call.1} parent=1 // pred_check
      _
    $region67: #{tpu_custom_call.1} parent=1 // pred_check_branch
      %62 = sbr.rel (0) target = $region69
    $region68: #{tpu_custom_call.1} parent=1 // pred_region
      _
    $region69: #{tpu_custom_call.1} parent=1 // pred_fallthru
      _
    // Predicated region
    $region70: #{tpu_custom_call.1} parent=1 // pred_check
      _
    $region71: #{tpu_custom_call.1} parent=1 // pred_check_branch
      %64 = sbr.rel (0) target = $region73
    $region72: #{tpu_custom_call.1} parent=1 // pred_region
      _
    $region73: #{tpu_custom_call.1} parent=1 // pred_fallthru
      _
    // Predicated region
    $region74: #{tpu_custom_call.1} parent=1 // pred_check
      _
    $region75: #{tpu_custom_call.1} parent=1 // pred_check_branch
      %66 = sbr.rel (0) target = $region77
    $region76: #{tpu_custom_call.1} parent=1 // pred_region
      _
    $region77: #{tpu_custom_call.1} parent=1 // pred_fallthru
      _
    // Predicated region
    $region78: #{tpu_custom_call.1} parent=1 // pred_check
      _
    $region79: #{tpu_custom_call.1} parent=1 // pred_check_branch
      %68 = sbr.rel (0) target = $region81
    $region80: #{tpu_custom_call.1} parent=1 // pred_region
      _
    $region81: #{tpu_custom_call.1} parent=1 // pred_fallthru
      _
    // Predicated region
    $region82: #{tpu_custom_call.1} parent=1 // pred_check
      _
    $region83: #{tpu_custom_call.1} parent=1 // pred_check_branch
      %70 = sbr.rel (0) target = $region85
    $region84: #{tpu_custom_call.1} parent=1 // pred_region
      _
    $region85: #{tpu_custom_call.1} parent=1 // pred_fallthru
      _
    // Predicated region
    $region86: #{tpu_custom_call.1} parent=1 // pred_check
      _
    $region87: #{tpu_custom_call.1} parent=1 // pred_check_branch
      %72 = sbr.rel (0) target = $region89
    $region88: #{tpu_custom_call.1} parent=1 // pred_region
      _
    $region89: #{tpu_custom_call.1} parent=1 // pred_fallthru
      _
    %v74 = vld [vmem:[%s0] sm:$0xf]
    %v75 = vld [vmem:[%s0 + $0x4] sm:$0xf]
    %v76 = vld [vmem:[%s3] sm:$0xf]
    %v77 = vld [vmem:[%s3 + $0x4] sm:$0xf]
    %v78 = vld [vmem:[%s3 + $0x8] sm:$0xf]
    %v79 = vld [vmem:[%s3 + $0xc] sm:$0xf]
    %v80 = vld [vmem:[%s3 + $0x10] sm:$0xf]
    %v81 = vld [vmem:[%s3 + $0x14] sm:$0xf]
    %v82 = vld [vmem:[%s3 + $0x18] sm:$0xf]
    %v83 = vld [vmem:[%s3 + $0x1c] sm:$0xf]
    %v84 = vld [vmem:[%s3 + $0x20] sm:$0xf]
    %v85 = vld [vmem:[%s3 + $0x24] sm:$0xf]
    %v86 = vld [vmem:[%s3 + $0x28] sm:$0xf]
    %v87 = vld [vmem:[%s3 + $0x2c] sm:$0xf]
    %v88 = vld [vmem:[%s3 + $0x30] sm:$0xf]
    %v89 = vld [vmem:[%s3 + $0x34] sm:$0xf]
    %v90 = vld [vmem:[%s3 + $0x38] sm:$0xf]
    %v91 = vld [vmem:[%s3 + $0x3c] sm:$0xf]
    %v92 = vld [vmem:[%s4] sm:$0x1]
    %v94 = vlaneseq
    %v95 = vshrl.u32 %v94, 7
    %v96 = vsub.s32 0, %v95
    %v97 = vrot.slane %v92, %v96
    %v101 = vunpack.c.l.b16 %v74
    %v102 = vunpack.c.l.b16 %v75
    %v103 = vpack.c.b16 %v102, %v101
    %v121 = vunpack.c.l.b16 %v76
    %v122 = vunpack.c.l.b16 %v77
    %v123 = vunpack.c.l.b16 %v78
    %v124 = vunpack.c.l.b16 %v79
    %v125 = vunpack.c.l.b16 %v80
    %v126 = vunpack.c.l.b16 %v81
    %v127 = vunpack.c.l.b16 %v82
    %v128 = vunpack.c.l.b16 %v83
    %v129 = vunpack.c.l.b16 %v84
    %v130 = vunpack.c.l.b16 %v85
    %v131 = vunpack.c.l.b16 %v86
    %v132 = vunpack.c.l.b16 %v87
    %v133 = vunpack.c.l.b16 %v88
    %v134 = vunpack.c.l.b16 %v89
    %v135 = vunpack.c.l.b16 %v90
    %v136 = vunpack.c.l.b16 %v91
    %v137 = vpack.c.b16 %v122, %v121
    %v138 = vpack.c.b16 %v124, %v123
    %v139 = vpack.c.b16 %v126, %v125
    %v140 = vpack.c.b16 %v128, %v127
    %v141 = vpack.c.b16 %v130, %v129
    %v142 = vpack.c.b16 %v132, %v131
    %v143 = vpack.c.b16 %v134, %v133
    %v144 = vpack.c.b16 %v136, %v135
    %153 = vmatprep.subr.bf16.mxu0 0
    %154 = vmatpush1.bf16.msra.mxu0 %v137
    %155 = vmatprep.subr.bf16.mxu0 0
    %156 = vmatpush1.bf16.msra.mxu0 %v138
    %157 = vmatprep.subr.bf16.mxu0 0
    %158 = vmatpush1.bf16.msra.mxu0 %v139
    %159 = vmatprep.subr.bf16.mxu0 0
    %160 = vmatpush1.bf16.msra.mxu0 %v140
    %161 = vmatprep.subr.bf16.mxu0 0
    %162 = vmatpush1.bf16.msra.mxu0 %v141
    %163 = vmatprep.subr.bf16.mxu0 0
    %164 = vmatpush1.bf16.msra.mxu0 %v142
    %165 = vmatprep.subr.bf16.mxu0 0
    %166 = vmatpush1.bf16.msra.mxu0 %v143
    %167 = vmatprep.subr.bf16.mxu0 0
    %168 = vmatpush1.bf16.msra.mxu0 %v144
    %169 = vmatprep.subr.bf16.mxu0 0
    %170 = vmatpush1.bf16.msra.mxu0 0
    %171 = vmatprep.subr.bf16.mxu0 0
    %172 = vmatpush1.bf16.msra.mxu0 0
    %173 = vmatprep.subr.bf16.mxu0 0
    %174 = vmatpush1.bf16.msra.mxu0 0
    %175 = vmatprep.subr.bf16.mxu0 0
    %176 = vmatpush1.bf16.msra.mxu0 0
    %177 = vmatprep.subr.bf16.mxu0 0
    %178 = vmatpush1.bf16.msra.mxu0 0
    %179 = vmatprep.subr.bf16.mxu0 0
    %180 = vmatpush1.bf16.msra.mxu0 0
    %181 = vmatprep.subr.bf16.mxu0 0
    %182 = vmatpush1.bf16.msra.mxu0 0
    %183 = vmatprep.subr.bf16.mxu0 0
    %184 = vmatpush1.bf16.msra.mxu0 0
    %185 = vmatprep.mubr.bf16.mxu0 0
    %186 = vmatmul.mubr.bf16.gmra.mrb[0].mxu0 %v103
    %v187 = vpop.f32.mrb[0].mxu0
    %v188 = vadd.f32 %v97, %v187
    %v189 = vpop.f32.mrb[0].mxu0
    %v190 = vpop.f32.mrb[0].mxu0
    %v191 = vadd.f32 %v97, %v190
    %v192 = vpop.f32.mrb[0].mxu0
    %193 = vdwg.mxu0
    %v194 = vpack.c.bf16 %v191, %v188
    %v195 = vld [vmem:[%s5] sm:$0xf]
    %vm196 = vcmask 523264
    %v198 = vsel %vm196, %v194, 0
    %v201 = vsel %vm196, %v195, 0
    %203 = vmatprep.subr.bf16.mxu0 0
    %204 = vmatpush1.bf16.xpose.msra.mxu0 %v201
    %205 = vmatprep.subr.bf16.mxu0 0
    %206 = vmatpush1.bf16.xpose.msra.mxu0 0
    %207 = vmatprep.subr.bf16.mxu0 0
    %208 = vmatpush1.bf16.xpose.msra.mxu0 0
    %209 = vmatprep.subr.bf16.mxu0 0
    %210 = vmatpush1.bf16.xpose.msra.mxu0 0
    %211 = vmatprep.subr.bf16.mxu0 0
    %212 = vmatpush1.bf16.xpose.msra.mxu0 0
    %213 = vmatprep.subr.bf16.mxu0 0
    %214 = vmatpush1.bf16.xpose.msra.mxu0 0
    %215 = vmatprep.subr.bf16.mxu0 0
    %216 = vmatpush1.bf16.xpose.msra.mxu0 0
    %217 = vmatprep.subr.bf16.mxu0 0
    %218 = vmatpush1.bf16.xpose.msra.mxu0 0
    %219 = vmatprep.subr.bf16.mxu0 0
    %220 = vmatpush1.bf16.xpose.msra.mxu0 0
    %221 = vmatprep.subr.bf16.mxu0 0
    %222 = vmatpush1.bf16.xpose.msra.mxu0 0
    %223 = vmatprep.subr.bf16.mxu0 0
    %224 = vmatpush1.bf16.xpose.msra.mxu0 0
    %225 = vmatprep.subr.bf16.mxu0 0
    %226 = vmatpush1.bf16.xpose.msra.mxu0 0
    %227 = vmatprep.subr.bf16.mxu0 0
    %228 = vmatpush1.bf16.xpose.msra.mxu0 0
    %229 = vmatprep.subr.bf16.mxu0 0
    %230 = vmatpush1.bf16.xpose.msra.mxu0 0
    %231 = vmatprep.subr.bf16.mxu0 0
    %232 = vmatpush1.bf16.xpose.msra.mxu0 0
    %233 = vmatprep.subr.bf16.mxu0 0
    %234 = vmatpush1.bf16.xpose.msra.mxu0 0
    %235 = vmatprep.mubr.bf16.mxu0 0
    %236 = vmatmul.mubr.bf16.gmra.mrb[0].mxu0 %v198
    %v237 = vpop.f32.mrb[0].mxu0
    %v238 = vadd.f32 0.0, %v237
    %v239 = vpop.f32.mrb[0].mxu0
    %v240 = vpop.f32.mrb[0].mxu0
    %v241 = vadd.f32 0.0, %v240
    %v242 = vpop.f32.mrb[0].mxu0
    %243 = vdwg.mxu0
    %vm244 = vcmask 64512
    %v245 = vsel %vm244, %v238, -inf
    %246 = vmax.xlane.f32.xlu0 %v245
    %v247 = vpop.xlane.xlu0 %246
    %v248 = vsel %vm244, %v241, -inf
    %249 = vmax.xlane.f32.xlu0 %v248
    %v250 = vpop.xlane.xlu0 %249
    %v251 = vsub.f32 %v238, %v247
    %v252 = vsub.f32 %v241, %v250
    %v253 = vmul.f32 %v251, 1.442695
    %v254 = vpow.pop %v253
    %v255 = vmul.f32 %v252, 1.442695
    %v256 = vpow.pop %v255
    %v257 = vsel %vm244, %v254, 0.0
    %258 = vadd.xlane.f32.xlu0 %v257
    %v259 = vpop.xlane.xlu0 %258
    %v260 = vsel %vm244, %v256, 0.0
    %261 = vadd.xlane.f32.xlu0 %v260
    %v262 = vpop.xlane.xlu0 %261
    %v263 = vrcp.pop %v259
    %v264 = vmul.f32 %v254, %v263
    %v265 = vrcp.pop %v262
    %v266 = vmul.f32 %v256, %v265
    %v267 = vld [vmem:[%s6] sm:$0xf]
    %v268 = vld [vmem:[%s6 + $0x4] sm:$0xf]
    %v269 = vld [vmem:[%s6 + $0x8] sm:$0xf]
    %v270 = vld [vmem:[%s6 + $0xc] sm:$0xf]
    %v271 = vld [vmem:[%s6 + $0x10] sm:$0xf]
    %v272 = vld [vmem:[%s6 + $0x14] sm:$0xf]
    %v273 = vld [vmem:[%s6 + $0x18] sm:$0xf]
    %v274 = vld [vmem:[%s6 + $0x1c] sm:$0xf]
    %v275 = vld [vmem:[%s6 + $0x20] sm:$0xf]
    %v276 = vld [vmem:[%s6 + $0x24] sm:$0xf]
    %v277 = vld [vmem:[%s6 + $0x28] sm:$0xf]
    %v278 = vld [vmem:[%s6 + $0x2c] sm:$0xf]
    %v279 = vld [vmem:[%s6 + $0x30] sm:$0xf]
    %v280 = vld [vmem:[%s6 + $0x34] sm:$0xf]
    %v281 = vld [vmem:[%s6 + $0x38] sm:$0xf]
    %v282 = vld [vmem:[%s6 + $0x3c] sm:$0xf]
    %v283 = vld [vmem:[%s8] sm:$0xf]
    %v284 = vpack.c.bf16 %v266, %v264
    %v286 = vsel %vm244, %v284, 0
    %vm288 = vcmask 1043456
    %v290 = vsel %vm288, %v283, 0
    %292 = vmatprep.subr.bf16.mxu0 0
    %293 = vmatpush1.bf16.msra.mxu0 %v290
    %294 = vmatprep.subr.bf16.mxu0 0
    %295 = vmatpush1.bf16.msra.mxu0 0
    %296 = vmatprep.subr.bf16.mxu0 0
    %297 = vmatpush1.bf16.msra.mxu0 0
    %298 = vmatprep.subr.bf16.mxu0 0
    %299 = vmatpush1.bf16.msra.mxu0 0
    %300 = vmatprep.subr.bf16.mxu0 0
    %301 = vmatpush1.bf16.msra.mxu0 0
    %302 = vmatprep.subr.bf16.mxu0 0
    %303 = vmatpush1.bf16.msra.mxu0 0
    %304 = vmatprep.subr.bf16.mxu0 0
    %305 = vmatpush1.bf16.msra.mxu0 0
    %306 = vmatprep.subr.bf16.mxu0 0
    %307 = vmatpush1.bf16.msra.mxu0 0
    %308 = vmatprep.subr.bf16.mxu0 0
    %309 = vmatpush1.bf16.msra.mxu0 0
    %310 = vmatprep.subr.bf16.mxu0 0
    %311 = vmatpush1.bf16.msra.mxu0 0
    %312 = vmatprep.subr.bf16.mxu0 0
    %313 = vmatpush1.bf16.msra.mxu0 0
    %314 = vmatprep.subr.bf16.mxu0 0
    %315 = vmatpush1.bf16.msra.mxu0 0
    %316 = vmatprep.subr.bf16.mxu0 0
    %317 = vmatpush1.bf16.msra.mxu0 0
    %318 = vmatprep.subr.bf16.mxu0 0
    %319 = vmatpush1.bf16.msra.mxu0 0
    %320 = vmatprep.subr.bf16.mxu0 0
    %321 = vmatpush1.bf16.msra.mxu0 0
    %322 = vmatprep.subr.bf16.mxu0 0
    %323 = vmatpush1.bf16.msra.mxu0 0
    %324 = vmatprep.mubr.bf16.mxu0 0
    %325 = vmatmul.mubr.bf16.gmra.mrb[0].mxu0 %v286
    %v326 = vpop.f32.mrb[0].mxu0
    %v327 = vadd.f32 0.0, %v326
    %v328 = vpop.f32.mrb[0].mxu0
    %v329 = vpop.f32.mrb[0].mxu0
    %v330 = vadd.f32 0.0, %v329
    %v331 = vpop.f32.mrb[0].mxu0
    %332 = vdwg.mxu0
    %v349 = vunpack.c.l.b16 %v267
    %v350 = vunpack.c.l.b16 %v268
    %v351 = vunpack.c.l.b16 %v269
    %v352 = vunpack.c.l.b16 %v270
    %v353 = vunpack.c.l.b16 %v271
    %v354 = vunpack.c.l.b16 %v272
    %v355 = vunpack.c.l.b16 %v273
    %v356 = vunpack.c.l.b16 %v274
    %v357 = vunpack.c.l.b16 %v275
    %v358 = vunpack.c.l.b16 %v276
    %v359 = vunpack.c.l.b16 %v277
    %v360 = vunpack.c.l.b16 %v278
    %v361 = vunpack.c.l.b16 %v279
    %v362 = vunpack.c.l.b16 %v280
    %v363 = vunpack.c.l.b16 %v281
    %v364 = vunpack.c.l.b16 %v282
    %v365 = vpack.c.b16 %v350, %v349
    %v366 = vpack.c.b16 %v352, %v351
    %v367 = vpack.c.b16 %v354, %v353
    %v368 = vpack.c.b16 %v356, %v355
    %v369 = vpack.c.b16 %v358, %v357
    %v370 = vpack.c.b16 %v360, %v359
    %v371 = vpack.c.b16 %v362, %v361
    %v372 = vpack.c.b16 %v364, %v363
    %381 = vmatprep.subr.bf16.mxu0 0
    %382 = vmatpush1.bf16.msra.mxu0 %v365
    %383 = vmatprep.subr.bf16.mxu0 0
    %384 = vmatpush1.bf16.msra.mxu0 %v366
    %385 = vmatprep.subr.bf16.mxu0 0
    %386 = vmatpush1.bf16.msra.mxu0 %v367
    %387 = vmatprep.subr.bf16.mxu0 0
    %388 = vmatpush1.bf16.msra.mxu0 %v368
    %389 = vmatprep.subr.bf16.mxu0 0
    %390 = vmatpush1.bf16.msra.mxu0 %v369
    %391 = vmatprep.subr.bf16.mxu0 0
    %392 = vmatpush1.bf16.msra.mxu0 %v370
    %393 = vmatprep.subr.bf16.mxu0 0
    %394 = vmatpush1.bf16.msra.mxu0 %v371
    %395 = vmatprep.subr.bf16.mxu0 0
    %396 = vmatpush1.bf16.msra.mxu0 %v372
    %397 = vmatprep.subr.bf16.mxu0 0
    %398 = vmatpush1.bf16.msra.mxu0 0
    %399 = vmatprep.subr.bf16.mxu0 0
    %400 = vmatpush1.bf16.msra.mxu0 0
    %401 = vmatprep.subr.bf16.mxu0 0
    %402 = vmatpush1.bf16.msra.mxu0 0
    %403 = vmatprep.subr.bf16.mxu0 0
    %404 = vmatpush1.bf16.msra.mxu0 0
    %405 = vmatprep.subr.bf16.mxu0 0
    %406 = vmatpush1.bf16.msra.mxu0 0
    %407 = vmatprep.subr.bf16.mxu0 0
    %408 = vmatpush1.bf16.msra.mxu0 0
    %409 = vmatprep.subr.bf16.mxu0 0
    %410 = vmatpush1.bf16.msra.mxu0 0
    %411 = vmatprep.subr.bf16.mxu0 0
    %412 = vmatpush1.bf16.msra.mxu0 0
    %413 = vmatprep.mubr.bf16.mxu0 0
    %414 = vmatmul.mubr.bf16.gmra.mrb[0].mxu0 %v103
    %v415 = vpop.f32.mrb[0].mxu0
    %v416 = vadd.f32 %v327, %v415
    %v417 = vpop.f32.mrb[0].mxu0
    %v418 = vpop.f32.mrb[0].mxu0
    %v419 = vadd.f32 %v330, %v418
    %v420 = vpop.f32.mrb[0].mxu0
    %421 = vdwg.mxu0
    %v422 = vld [vmem:[%s7] sm:$0x1]
    %v424 = vlaneseq
    %v425 = vshrl.u32 %v424, 7
    %v426 = vsub.s32 0, %v425
    %v427 = vrot.slane %v422, %v426
    %v429 = vadd.f32 %v416, %v427
    %v430 = vadd.f32 %v419, %v427
    %v431 = vld [vmem:[%s9] sm:$0xf]
    %v432 = vld [vmem:[%s9 + $0x4] sm:$0xf]
    %v433 = vld [vmem:[%s9 + $0x8] sm:$0xf]
    %v434 = vld [vmem:[%s9 + $0xc] sm:$0xf]
    %v435 = vld [vmem:[%s9 + $0x10] sm:$0xf]
    %v436 = vld [vmem:[%s9 + $0x14] sm:$0xf]
    %v437 = vld [vmem:[%s9 + $0x18] sm:$0xf]
    %v438 = vld [vmem:[%s9 + $0x1c] sm:$0xf]
    %v439 = vld [vmem:[%s9 + $0x20] sm:$0xf]
    %v440 = vld [vmem:[%s9 + $0x24] sm:$0xf]
    %v441 = vld [vmem:[%s9 + $0x28] sm:$0xf]
    %v442 = vld [vmem:[%s9 + $0x2c] sm:$0xf]
    %v443 = vld [vmem:[%s9 + $0x30] sm:$0xf]
    %v444 = vld [vmem:[%s9 + $0x34] sm:$0xf]
    %v445 = vld [vmem:[%s9 + $0x38] sm:$0xf]
    %v446 = vld [vmem:[%s9 + $0x3c] sm:$0xf]
    %v447 = vld [vmem:[%s10] sm:$0x1]
    %v448 = vld [vmem:[%s11] sm:$0xf]
    %v449 = vld [vmem:[%s11 + $0x4] sm:$0xf]
    %v450 = vld [vmem:[%s11 + $0x8] sm:$0xf]
    %v451 = vld [vmem:[%s11 + $0xc] sm:$0xf]
    %v452 = vld [vmem:[%s11 + $0x10] sm:$0xf]
    %v453 = vld [vmem:[%s11 + $0x14] sm:$0xf]
    %v454 = vld [vmem:[%s11 + $0x18] sm:$0xf]
    %v455 = vld [vmem:[%s11 + $0x1c] sm:$0xf]
    %v456 = vld [vmem:[%s11 + $0x20] sm:$0xf]
    %v457 = vld [vmem:[%s11 + $0x24] sm:$0xf]
    %v458 = vld [vmem:[%s11 + $0x28] sm:$0xf]
    %v459 = vld [vmem:[%s11 + $0x2c] sm:$0xf]
    %v460 = vld [vmem:[%s11 + $0x30] sm:$0xf]
    %v461 = vld [vmem:[%s11 + $0x34] sm:$0xf]
    %v462 = vld [vmem:[%s11 + $0x38] sm:$0xf]
    %v463 = vld [vmem:[%s11 + $0x3c] sm:$0xf]
    %v464 = vld [vmem:[%s12] sm:$0x1]
    %v465 = vpack.c.bf16 %v430, %v429
    %v467 = vlaneseq
    %v468 = vshrl.u32 %v467, 7
    %v469 = vsub.s32 0, %v468
    %v470 = vrot.slane %v447, %v469
    %v488 = vunpack.c.l.b16 %v431
    %v489 = vunpack.c.l.b16 %v432
    %v490 = vunpack.c.l.b16 %v433
    %v491 = vunpack.c.l.b16 %v434
    %v492 = vunpack.c.l.b16 %v435
    %v493 = vunpack.c.l.b16 %v436
    %v494 = vunpack.c.l.b16 %v437
    %v495 = vunpack.c.l.b16 %v438
    %v496 = vunpack.c.l.b16 %v439
    %v497 = vunpack.c.l.b16 %v440
    %v498 = vunpack.c.l.b16 %v441
    %v499 = vunpack.c.l.b16 %v442
    %v500 = vunpack.c.l.b16 %v443
    %v501 = vunpack.c.l.b16 %v444
    %v502 = vunpack.c.l.b16 %v445
    %v503 = vunpack.c.l.b16 %v446
    %v504 = vpack.c.b16 %v489, %v488
    %v505 = vpack.c.b16 %v491, %v490
    %v506 = vpack.c.b16 %v493, %v492
    %v507 = vpack.c.b16 %v495, %v494
    %v508 = vpack.c.b16 %v497, %v496
    %v509 = vpack.c.b16 %v499, %v498
    %v510 = vpack.c.b16 %v501, %v500
    %v511 = vpack.c.b16 %v503, %v502
    %520 = vmatprep.subr.bf16.mxu0 0
    %521 = vmatpush1.bf16.msra.mxu0 %v504
    %522 = vmatprep.subr.bf16.mxu0 0
    %523 = vmatpush1.bf16.msra.mxu0 %v505
    %524 = vmatprep.subr.bf16.mxu0 0
    %525 = vmatpush1.bf16.msra.mxu0 %v506
    %526 = vmatprep.subr.bf16.mxu0 0
    %527 = vmatpush1.bf16.msra.mxu0 %v507
    %528 = vmatprep.subr.bf16.mxu0 0
    %529 = vmatpush1.bf16.msra.mxu0 %v508
    %530 = vmatprep.subr.bf16.mxu0 0
    %531 = vmatpush1.bf16.msra.mxu0 %v509
    %532 = vmatprep.subr.bf16.mxu0 0
    %533 = vmatpush1.bf16.msra.mxu0 %v510
    %534 = vmatprep.subr.bf16.mxu0 0
    %535 = vmatpush1.bf16.msra.mxu0 %v511
    %536 = vmatprep.subr.bf16.mxu0 0
    %537 = vmatpush1.bf16.msra.mxu0 0
    %538 = vmatprep.subr.bf16.mxu0 0
    %539 = vmatpush1.bf16.msra.mxu0 0
    %540 = vmatprep.subr.bf16.mxu0 0
    %541 = vmatpush1.bf16.msra.mxu0 0
    %542 = vmatprep.subr.bf16.mxu0 0
    %543 = vmatpush1.bf16.msra.mxu0 0
    %544 = vmatprep.subr.bf16.mxu0 0
    %545 = vmatpush1.bf16.msra.mxu0 0
    %546 = vmatprep.subr.bf16.mxu0 0
    %547 = vmatpush1.bf16.msra.mxu0 0
    %548 = vmatprep.subr.bf16.mxu0 0
    %549 = vmatpush1.bf16.msra.mxu0 0
    %550 = vmatprep.subr.bf16.mxu0 0
    %551 = vmatpush1.bf16.msra.mxu0 0
    %552 = vmatprep.mubr.bf16.mxu0 0
    %553 = vmatmul.mubr.bf16.gmra.mrb[0].mxu0 %v465
    %v554 = vpop.f32.mrb[0].mxu0
    %v555 = vadd.f32 %v470, %v554
    %v556 = vpop.f32.mrb[0].mxu0
    %v557 = vpop.f32.mrb[0].mxu0
    %v558 = vadd.f32 %v470, %v557
    %v559 = vpop.f32.mrb[0].mxu0
    %560 = vdwg.mxu0
    %v561 = vmax.f32 %v555, 0.0
    %v562 = vmax.f32 %v558, 0.0
    %v563 = vpack.c.bf16 %v562, %v561
    %v565 = vlaneseq
    %v566 = vshrl.u32 %v565, 7
    %v567 = vsub.s32 0, %v566
    %v568 = vrot.slane %v464, %v567
    %v586 = vunpack.c.l.b16 %v448
    %v587 = vunpack.c.l.b16 %v449
    %v588 = vunpack.c.l.b16 %v450
    %v589 = vunpack.c.l.b16 %v451
    %v590 = vunpack.c.l.b16 %v452
    %v591 = vunpack.c.l.b16 %v453
    %v592 = vunpack.c.l.b16 %v454
    %v593 = vunpack.c.l.b16 %v455
    %v594 = vunpack.c.l.b16 %v456
    %v595 = vunpack.c.l.b16 %v457
    %v596 = vunpack.c.l.b16 %v458
    %v597 = vunpack.c.l.b16 %v459
    %v598 = vunpack.c.l.b16 %v460
    %v599 = vunpack.c.l.b16 %v461
    %v600 = vunpack.c.l.b16 %v462
    %v601 = vunpack.c.l.b16 %v463
    %v602 = vpack.c.b16 %v587, %v586
    %v603 = vpack.c.b16 %v589, %v588
    %v604 = vpack.c.b16 %v591, %v590
    %v605 = vpack.c.b16 %v593, %v592
    %v606 = vpack.c.b16 %v595, %v594
    %v607 = vpack.c.b16 %v597, %v596
    %v608 = vpack.c.b16 %v599, %v598
    %v609 = vpack.c.b16 %v601, %v600
    %618 = vmatprep.subr.bf16.mxu0 0
    %619 = vmatpush1.bf16.msra.mxu0 %v602
    %620 = vmatprep.subr.bf16.mxu0 0
    %621 = vmatpush1.bf16.msra.mxu0 %v603
    %622 = vmatprep.subr.bf16.mxu0 0
    %623 = vmatpush1.bf16.msra.mxu0 %v604
    %624 = vmatprep.subr.bf16.mxu0 0
    %625 = vmatpush1.bf16.msra.mxu0 %v605
    %626 = vmatprep.subr.bf16.mxu0 0
    %627 = vmatpush1.bf16.msra.mxu0 %v606
    %628 = vmatprep.subr.bf16.mxu0 0
    %629 = vmatpush1.bf16.msra.mxu0 %v607
    %630 = vmatprep.subr.bf16.mxu0 0
    %631 = vmatpush1.bf16.msra.mxu0 %v608
    %632 = vmatprep.subr.bf16.mxu0 0
    %633 = vmatpush1.bf16.msra.mxu0 %v609
    %634 = vmatprep.subr.bf16.mxu0 0
    %635 = vmatpush1.bf16.msra.mxu0 0
    %636 = vmatprep.subr.bf16.mxu0 0
    %637 = vmatpush1.bf16.msra.mxu0 0
    %638 = vmatprep.subr.bf16.mxu0 0
    %639 = vmatpush1.bf16.msra.mxu0 0
    %640 = vmatprep.subr.bf16.mxu0 0
    %641 = vmatpush1.bf16.msra.mxu0 0
    %642 = vmatprep.subr.bf16.mxu0 0
    %643 = vmatpush1.bf16.msra.mxu0 0
    %644 = vmatprep.subr.bf16.mxu0 0
    %645 = vmatpush1.bf16.msra.mxu0 0
    %646 = vmatprep.subr.bf16.mxu0 0
    %647 = vmatpush1.bf16.msra.mxu0 0
    %648 = vmatprep.subr.bf16.mxu0 0
    %649 = vmatpush1.bf16.msra.mxu0 0
    %650 = vmatprep.mubr.bf16.mxu0 0
    %651 = vmatmul.mubr.bf16.gmra.mrb[0].mxu0 %v563
    %v652 = vpop.f32.mrb[0].mxu0
    %v653 = vadd.f32 %v568, %v652
    %v654 = vpop.f32.mrb[0].mxu0
    %v655 = vpop.f32.mrb[0].mxu0
    %v656 = vadd.f32 %v568, %v655
    %v657 = vpop.f32.mrb[0].mxu0
    %658 = vdwg.mxu0
    %v659 = vmax.f32 %v653, 0.0
    %v660 = vmax.f32 %v656, 0.0
    %v661 = vld [vmem:[%s2] sm:$0xf]
    %v662 = vld [vmem:[%s2 + $0x4] sm:$0xf]
    %v663 = vld [vmem:[%s13] sm:$0xf]
    %v664 = vld [vmem:[%s13 + $0x4] sm:$0xf]
    %v665 = vld [vmem:[%s13 + $0x8] sm:$0xf]
    %v666 = vld [vmem:[%s13 + $0xc] sm:$0xf]
    %v667 = vld [vmem:[%s13 + $0x10] sm:$0xf]
    %v668 = vld [vmem:[%s13 + $0x14] sm:$0xf]
    %v669 = vld [vmem:[%s13 + $0x18] sm:$0xf]
    %v670 = vld [vmem:[%s13 + $0x1c] sm:$0xf]
    %v671 = vld [vmem:[%s13 + $0x20] sm:$0xf]
    %v672 = vld [vmem:[%s13 + $0x24] sm:$0xf]
    %v673 = vld [vmem:[%s13 + $0x28] sm:$0xf]
    %v674 = vld [vmem:[%s13 + $0x2c] sm:$0xf]
    %v675 = vld [vmem:[%s13 + $0x30] sm:$0xf]
    %v676 = vld [vmem:[%s13 + $0x34] sm:$0xf]
    %v677 = vld [vmem:[%s13 + $0x38] sm:$0xf]
    %v678 = vld [vmem:[%s13 + $0x3c] sm:$0xf]
    %v679 = vld [vmem:[%s14] sm:$0x1]
    %v680 = vld [vmem:[%s15] sm:$0xf]
    %v681 = vld [vmem:[%s15 + $0x4] sm:$0xf]
    %v682 = vld [vmem:[%s15 + $0x8] sm:$0xf]
    %v683 = vld [vmem:[%s15 + $0xc] sm:$0xf]
    %v684 = vld [vmem:[%s15 + $0x10] sm:$0xf]
    %v685 = vld [vmem:[%s15 + $0x14] sm:$0xf]
    %v686 = vld [vmem:[%s15 + $0x18] sm:$0xf]
    %v687 = vld [vmem:[%s15 + $0x1c] sm:$0xf]
    %v688 = vld [vmem:[%s15 + $0x20] sm:$0xf]
    %v689 = vld [vmem:[%s15 + $0x24] sm:$0xf]
    %v690 = vld [vmem:[%s15 + $0x28] sm:$0xf]
    %v691 = vld [vmem:[%s15 + $0x2c] sm:$0xf]
    %v692 = vld [vmem:[%s15 + $0x30] sm:$0xf]
    %v693 = vld [vmem:[%s15 + $0x34] sm:$0xf]
    %v694 = vld [vmem:[%s15 + $0x38] sm:$0xf]
    %v695 = vld [vmem:[%s15 + $0x3c] sm:$0xf]
    %v696 = vld [vmem:[%s16] sm:$0x1]
    %v698 = vlaneseq
    %v699 = vshrl.u32 %v698, 7
    %v700 = vsub.s32 0, %v699
    %v701 = vrot.slane %v679, %v700
    %v705 = vunpack.c.l.b16 %v661
    %v706 = vunpack.c.l.b16 %v662
    %v707 = vpack.c.b16 %v706, %v705
    %v725 = vunpack.c.l.b16 %v663
    %v726 = vunpack.c.l.b16 %v664
    %v727 = vunpack.c.l.b16 %v665
    %v728 = vunpack.c.l.b16 %v666
    %v729 = vunpack.c.l.b16 %v667
    %v730 = vunpack.c.l.b16 %v668
    %v731 = vunpack.c.l.b16 %v669
    %v732 = vunpack.c.l.b16 %v670
    %v733 = vunpack.c.l.b16 %v671
    %v734 = vunpack.c.l.b16 %v672
    %v735 = vunpack.c.l.b16 %v673
    %v736 = vunpack.c.l.b16 %v674
    %v737 = vunpack.c.l.b16 %v675
    %v738 = vunpack.c.l.b16 %v676
    %v739 = vunpack.c.l.b16 %v677
    %v740 = vunpack.c.l.b16 %v678
    %v741 = vpack.c.b16 %v726, %v725
    %v742 = vpack.c.b16 %v728, %v727
    %v743 = vpack.c.b16 %v730, %v729
    %v744 = vpack.c.b16 %v732, %v731
    %v745 = vpack.c.b16 %v734, %v733
    %v746 = vpack.c.b16 %v736, %v735
    %v747 = vpack.c.b16 %v738, %v737
    %v748 = vpack.c.b16 %v740, %v739
    %757 = vmatprep.subr.bf16.mxu0 0
    %758 = vmatpush1.bf16.msra.mxu0 %v741
    %759 = vmatprep.subr.bf16.mxu0 0
    %760 = vmatpush1.bf16.msra.mxu0 %v742
    %761 = vmatprep.subr.bf16.mxu0 0
    %762 = vmatpush1.bf16.msra.mxu0 %v743
    %763 = vmatprep.subr.bf16.mxu0 0
    %764 = vmatpush1.bf16.msra.mxu0 %v744
    %765 = vmatprep.subr.bf16.mxu0 0
    %766 = vmatpush1.bf16.msra.mxu0 %v745
    %767 = vmatprep.subr.bf16.mxu0 0
    %768 = vmatpush1.bf16.msra.mxu0 %v746
    %769 = vmatprep.subr.bf16.mxu0 0
    %770 = vmatpush1.bf16.msra.mxu0 %v747
    %771 = vmatprep.subr.bf16.mxu0 0
    %772 = vmatpush1.bf16.msra.mxu0 %v748
    %773 = vmatprep.subr.bf16.mxu0 0
    %774 = vmatpush1.bf16.msra.mxu0 0
    %775 = vmatprep.subr.bf16.mxu0 0
    %776 = vmatpush1.bf16.msra.mxu0 0
    %777 = vmatprep.subr.bf16.mxu0 0
    %778 = vmatpush1.bf16.msra.mxu0 0
    %779 = vmatprep.subr.bf16.mxu0 0
    %780 = vmatpush1.bf16.msra.mxu0 0
    %781 = vmatprep.subr.bf16.mxu0 0
    %782 = vmatpush1.bf16.msra.mxu0 0
    %783 = vmatprep.subr.bf16.mxu0 0
    %784 = vmatpush1.bf16.msra.mxu0 0
    %785 = vmatprep.subr.bf16.mxu0 0
    %786 = vmatpush1.bf16.msra.mxu0 0
    %787 = vmatprep.subr.bf16.mxu0 0
    %788 = vmatpush1.bf16.msra.mxu0 0
    %789 = vmatprep.mubr.bf16.mxu0 0
    %790 = vmatmul.mubr.bf16.gmra.mrb[0].mxu0 %v707
    %v791 = vpop.f32.mrb[0].mxu0
    %v792 = vadd.f32 %v701, %v791
    %v793 = vpop.f32.mrb[0].mxu0
    %v794 = vpop.f32.mrb[0].mxu0
    %v795 = vadd.f32 %v701, %v794
    %v796 = vpop.f32.mrb[0].mxu0
    %797 = vdwg.mxu0
    %vm798 = vcmp.gt.f32.partialorder %v792, 0.0
    %vm799 = vcmp.gt.f32.partialorder %v795, 0.0
    %v800 = vmin.f32 %v792, 0.0
    %v801 = vmin.f32 %v795, 0.0
    %v802 = vmul.f32 %v800, 1.442695
    %v803 = vpow.pop %v802
    %v804 = vmul.f32 %v801, 1.442695
    %v805 = vpow.pop %v804
    %v806 = vsub.f32 %v803, 1.0
    %v807 = vsub.f32 %v805, 1.0
    %v808 = vsel %vm798, %v792, %v806
    %v809 = vsel %vm799, %v795, %v807
    %v810 = vpack.c.bf16 %v809, %v808
    %v812 = vlaneseq
    %v813 = vshrl.u32 %v812, 7
    %v814 = vsub.s32 0, %v813
    %v815 = vrot.slane %v696, %v814
    %v833 = vunpack.c.l.b16 %v680
    %v834 = vunpack.c.l.b16 %v681
    %v835 = vunpack.c.l.b16 %v682
    %v836 = vunpack.c.l.b16 %v683
    %v837 = vunpack.c.l.b16 %v684
    %v838 = vunpack.c.l.b16 %v685
    %v839 = vunpack.c.l.b16 %v686
    %v840 = vunpack.c.l.b16 %v687
    %v841 = vunpack.c.l.b16 %v688
    %v842 = vunpack.c.l.b16 %v689
    %v843 = vunpack.c.l.b16 %v690
    %v844 = vunpack.c.l.b16 %v691
    %v845 = vunpack.c.l.b16 %v692
    %v846 = vunpack.c.l.b16 %v693
    %v847 = vunpack.c.l.b16 %v694
    %v848 = vunpack.c.l.b16 %v695
    %v849 = vpack.c.b16 %v834, %v833
    %v850 = vpack.c.b16 %v836, %v835
    %v851 = vpack.c.b16 %v838, %v837
    %v852 = vpack.c.b16 %v840, %v839
    %v853 = vpack.c.b16 %v842, %v841
    %v854 = vpack.c.b16 %v844, %v843
    %v855 = vpack.c.b16 %v846, %v845
    %v856 = vpack.c.b16 %v848, %v847
    %865 = vmatprep.subr.bf16.mxu0 0
    %866 = vmatpush1.bf16.msra.mxu0 %v849
    %867 = vmatprep.subr.bf16.mxu0 0
    %868 = vmatpush1.bf16.msra.mxu0 %v850
    %869 = vmatprep.subr.bf16.mxu0 0
    %870 = vmatpush1.bf16.msra.mxu0 %v851
    %871 = vmatprep.subr.bf16.mxu0 0
    %872 = vmatpush1.bf16.msra.mxu0 %v852
    %873 = vmatprep.subr.bf16.mxu0 0
    %874 = vmatpush1.bf16.msra.mxu0 %v853
    %875 = vmatprep.subr.bf16.mxu0 0
    %876 = vmatpush1.bf16.msra.mxu0 %v854
    %877 = vmatprep.subr.bf16.mxu0 0
    %878 = vmatpush1.bf16.msra.mxu0 %v855
    %879 = vmatprep.subr.bf16.mxu0 0
    %880 = vmatpush1.bf16.msra.mxu0 %v856
    %881 = vmatprep.subr.bf16.mxu0 0
    %882 = vmatpush1.bf16.msra.mxu0 0
    %883 = vmatprep.subr.bf16.mxu0 0
    %884 = vmatpush1.bf16.msra.mxu0 0
    %885 = vmatprep.subr.bf16.mxu0 0
    %886 = vmatpush1.bf16.msra.mxu0 0
    %887 = vmatprep.subr.bf16.mxu0 0
    %888 = vmatpush1.bf16.msra.mxu0 0
    %889 = vmatprep.subr.bf16.mxu0 0
    %890 = vmatpush1.bf16.msra.mxu0 0
    %891 = vmatprep.subr.bf16.mxu0 0
    %892 = vmatpush1.bf16.msra.mxu0 0
    %893 = vmatprep.subr.bf16.mxu0 0
    %894 = vmatpush1.bf16.msra.mxu0 0
    %895 = vmatprep.subr.bf16.mxu0 0
    %896 = vmatpush1.bf16.msra.mxu0 0
    %897 = vmatprep.mubr.bf16.mxu0 0
    %898 = vmatmul.mubr.bf16.gmra.mrb[0].mxu0 %v810
    %v899 = vpop.f32.mrb[0].mxu0
    %v900 = vadd.f32 %v815, %v899
    %v901 = vpop.f32.mrb[0].mxu0
    %v902 = vpop.f32.mrb[0].mxu0
    %v903 = vadd.f32 %v815, %v902
    %v904 = vpop.f32.mrb[0].mxu0
    %905 = vdwg.mxu0
    %vm906 = vcmp.gt.f32.partialorder %v900, 0.0
    %vm907 = vcmp.gt.f32.partialorder %v903, 0.0
    %v908 = vmin.f32 %v900, 0.0
    %v909 = vmin.f32 %v903, 0.0
    %v910 = vmul.f32 %v908, 1.442695
    %v911 = vpow.pop %v910
    %v912 = vmul.f32 %v909, 1.442695
    %v913 = vpow.pop %v912
    %v914 = vsub.f32 %v911, 1.0
    %v915 = vsub.f32 %v913, 1.0
    %v916 = vsel %vm906, %v900, %v914
    %v917 = vsel %vm907, %v903, %v915
    %v918 = vld [vmem:[%s1] sm:$0xf]
    %v919 = vld [vmem:[%s1 + $0x4] sm:$0xf]
    %v920 = vld [vmem:[%s17] sm:$0xf]
    %v921 = vld [vmem:[%s17 + $0x4] sm:$0xf]
    %v922 = vld [vmem:[%s17 + $0x8] sm:$0xf]
    %v923 = vld [vmem:[%s17 + $0xc] sm:$0xf]
    %v924 = vld [vmem:[%s17 + $0x10] sm:$0xf]
    %v925 = vld [vmem:[%s17 + $0x14] sm:$0xf]
    %v926 = vld [vmem:[%s17 + $0x18] sm:$0xf]
    %v927 = vld [vmem:[%s17 + $0x1c] sm:$0xf]
    %v928 = vld [vmem:[%s17 + $0x20] sm:$0xf]
    %v929 = vld [vmem:[%s17 + $0x24] sm:$0xf]
    %v930 = vld [vmem:[%s17 + $0x28] sm:$0xf]
    %v931 = vld [vmem:[%s17 + $0x2c] sm:$0xf]
    %v932 = vld [vmem:[%s17 + $0x30] sm:$0xf]
    %v933 = vld [vmem:[%s17 + $0x34] sm:$0xf]
    %v934 = vld [vmem:[%s17 + $0x38] sm:$0xf]
    %v935 = vld [vmem:[%s17 + $0x3c] sm:$0xf]
    %v936 = vld [vmem:[%s18] sm:$0x1]
    %v937 = vld [vmem:[%s19] sm:$0xf]
    %v938 = vld [vmem:[%s19 + $0x4] sm:$0xf]
    %v939 = vld [vmem:[%s19 + $0x8] sm:$0xf]
    %v940 = vld [vmem:[%s19 + $0xc] sm:$0xf]
    %v941 = vld [vmem:[%s19 + $0x10] sm:$0xf]
    %v942 = vld [vmem:[%s19 + $0x14] sm:$0xf]
    %v943 = vld [vmem:[%s19 + $0x18] sm:$0xf]
    %v944 = vld [vmem:[%s19 + $0x1c] sm:$0xf]
    %v945 = vld [vmem:[%s19 + $0x20] sm:$0xf]
    %v946 = vld [vmem:[%s19 + $0x24] sm:$0xf]
    %v947 = vld [vmem:[%s19 + $0x28] sm:$0xf]
    %v948 = vld [vmem:[%s19 + $0x2c] sm:$0xf]
    %v949 = vld [vmem:[%s19 + $0x30] sm:$0xf]
    %v950 = vld [vmem:[%s19 + $0x34] sm:$0xf]
    %v951 = vld [vmem:[%s19 + $0x38] sm:$0xf]
    %v952 = vld [vmem:[%s19 + $0x3c] sm:$0xf]
    %v953 = vld [vmem:[%s20] sm:$0x1]
    %v955 = vlaneseq
    %v956 = vshrl.u32 %v955, 7
    %v957 = vsub.s32 0, %v956
    %v958 = vrot.slane %v936, %v957
    %v962 = vunpack.c.l.b16 %v918
    %v963 = vunpack.c.l.b16 %v919
    %v964 = vpack.c.b16 %v963, %v962
    %v982 = vunpack.c.l.b16 %v920
    %v983 = vunpack.c.l.b16 %v921
    %v984 = vunpack.c.l.b16 %v922
    %v985 = vunpack.c.l.b16 %v923
    %v986 = vunpack.c.l.b16 %v924
    %v987 = vunpack.c.l.b16 %v925
    %v988 = vunpack.c.l.b16 %v926
    %v989 = vunpack.c.l.b16 %v927
    %v990 = vunpack.c.l.b16 %v928
    %v991 = vunpack.c.l.b16 %v929
    %v992 = vunpack.c.l.b16 %v930
    %v993 = vunpack.c.l.b16 %v931
    %v994 = vunpack.c.l.b16 %v932
    %v995 = vunpack.c.l.b16 %v933
    %v996 = vunpack.c.l.b16 %v934
    %v997 = vunpack.c.l.b16 %v935
    %v998 = vpack.c.b16 %v983, %v982
    %v999 = vpack.c.b16 %v985, %v984
    %v1000 = vpack.c.b16 %v987, %v986
    %v1001 = vpack.c.b16 %v989, %v988
    %v1002 = vpack.c.b16 %v991, %v990
    %v1003 = vpack.c.b16 %v993, %v992
    %v1004 = vpack.c.b16 %v995, %v994
    %v1005 = vpack.c.b16 %v997, %v996
    %1014 = vmatprep.subr.bf16.mxu0 0
    %1015 = vmatpush1.bf16.msra.mxu0 %v998
    %1016 = vmatprep.subr.bf16.mxu0 0
    %1017 = vmatpush1.bf16.msra.mxu0 %v999
    %1018 = vmatprep.subr.bf16.mxu0 0
    %1019 = vmatpush1.bf16.msra.mxu0 %v1000
    %1020 = vmatprep.subr.bf16.mxu0 0
    %1021 = vmatpush1.bf16.msra.mxu0 %v1001
    %1022 = vmatprep.subr.bf16.mxu0 0
    %1023 = vmatpush1.bf16.msra.mxu0 %v1002
    %1024 = vmatprep.subr.bf16.mxu0 0
    %1025 = vmatpush1.bf16.msra.mxu0 %v1003
    %1026 = vmatprep.subr.bf16.mxu0 0
    %1027 = vmatpush1.bf16.msra.mxu0 %v1004
    %1028 = vmatprep.subr.bf16.mxu0 0
    %1029 = vmatpush1.bf16.msra.mxu0 %v1005
    %1030 = vmatprep.subr.bf16.mxu0 0
    %1031 = vmatpush1.bf16.msra.mxu0 0
    %1032 = vmatprep.subr.bf16.mxu0 0
    %1033 = vmatpush1.bf16.msra.mxu0 0
    %1034 = vmatprep.subr.bf16.mxu0 0
    %1035 = vmatpush1.bf16.msra.mxu0 0
    %1036 = vmatprep.subr.bf16.mxu0 0
    %1037 = vmatpush1.bf16.msra.mxu0 0
    %1038 = vmatprep.subr.bf16.mxu0 0
    %1039 = vmatpush1.bf16.msra.mxu0 0
    %1040 = vmatprep.subr.bf16.mxu0 0
    %1041 = vmatpush1.bf16.msra.mxu0 0
    %1042 = vmatprep.subr.bf16.mxu0 0
    %1043 = vmatpush1.bf16.msra.mxu0 0
    %1044 = vmatprep.subr.bf16.mxu0 0
    %1045 = vmatpush1.bf16.msra.mxu0 0
    %1046 = vmatprep.mubr.bf16.mxu0 0
    %1047 = vmatmul.mubr.bf16.gmra.mrb[0].mxu0 %v964
    %v1048 = vpop.f32.mrb[0].mxu0
    %v1049 = vadd.f32 %v958, %v1048
    %v1050 = vpop.f32.mrb[0].mxu0
    %v1051 = vpop.f32.mrb[0].mxu0
    %v1052 = vadd.f32 %v958, %v1051
    %v1053 = vpop.f32.mrb[0].mxu0
    %1054 = vdwg.mxu0
    %vm1055 = vcmp.gt.f32.partialorder %v1049, 0.0
    %vm1056 = vcmp.gt.f32.partialorder %v1052, 0.0
    %v1057 = vmin.f32 %v1049, 0.0
    %v1058 = vmin.f32 %v1052, 0.0
    %v1059 = vmul.f32 %v1057, 1.442695
    %v1060 = vpow.pop %v1059
    %v1061 = vmul.f32 %v1058, 1.442695
    %v1062 = vpow.pop %v1061
    %v1063 = vsub.f32 %v1060, 1.0
    %v1064 = vsub.f32 %v1062, 1.0
    %v1065 = vsel %vm1055, %v1049, %v1063
    %v1066 = vsel %vm1056, %v1052, %v1064
    %v1067 = vpack.c.bf16 %v1066, %v1065
    %v1069 = vlaneseq
    %v1070 = vshrl.u32 %v1069, 7
    %v1071 = vsub.s32 0, %v1070
    %v1072 = vrot.slane %v953, %v1071
    %v1090 = vunpack.c.l.b16 %v937
    %v1091 = vunpack.c.l.b16 %v938
    %v1092 = vunpack.c.l.b16 %v939
    %v1093 = vunpack.c.l.b16 %v940
    %v1094 = vunpack.c.l.b16 %v941
    %v1095 = vunpack.c.l.b16 %v942
    %v1096 = vunpack.c.l.b16 %v943
    %v1097 = vunpack.c.l.b16 %v944
    %v1098 = vunpack.c.l.b16 %v945
    %v1099 = vunpack.c.l.b16 %v946
    %v1100 = vunpack.c.l.b16 %v947
    %v1101 = vunpack.c.l.b16 %v948
    %v1102 = vunpack.c.l.b16 %v949
    %v1103 = vunpack.c.l.b16 %v950
    %v1104 = vunpack.c.l.b16 %v951
    %v1105 = vunpack.c.l.b16 %v952
    %v1106 = vpack.c.b16 %v1091, %v1090
    %v1107 = vpack.c.b16 %v1093, %v1092
    %v1108 = vpack.c.b16 %v1095, %v1094
    %v1109 = vpack.c.b16 %v1097, %v1096
    %v1110 = vpack.c.b16 %v1099, %v1098
    %v1111 = vpack.c.b16 %v1101, %v1100
    %v1112 = vpack.c.b16 %v1103, %v1102
    %v1113 = vpack.c.b16 %v1105, %v1104
    %1122 = vmatprep.subr.bf16.mxu0 0
    %1123 = vmatpush1.bf16.msra.mxu0 %v1106
    %1124 = vmatprep.subr.bf16.mxu0 0
    %1125 = vmatpush1.bf16.msra.mxu0 %v1107
    %1126 = vmatprep.subr.bf16.mxu0 0
    %1127 = vmatpush1.bf16.msra.mxu0 %v1108
    %1128 = vmatprep.subr.bf16.mxu0 0
    %1129 = vmatpush1.bf16.msra.mxu0 %v1109
    %1130 = vmatprep.subr.bf16.mxu0 0
    %1131 = vmatpush1.bf16.msra.mxu0 %v1110
    %1132 = vmatprep.subr.bf16.mxu0 0
    %1133 = vmatpush1.bf16.msra.mxu0 %v1111
    %1134 = vmatprep.subr.bf16.mxu0 0
    %1135 = vmatpush1.bf16.msra.mxu0 %v1112
    %1136 = vmatprep.subr.bf16.mxu0 0
    %1137 = vmatpush1.bf16.msra.mxu0 %v1113
    %1138 = vmatprep.subr.bf16.mxu0 0
    %1139 = vmatpush1.bf16.msra.mxu0 0
    %1140 = vmatprep.subr.bf16.mxu0 0
    %1141 = vmatpush1.bf16.msra.mxu0 0
    %1142 = vmatprep.subr.bf16.mxu0 0
    %1143 = vmatpush1.bf16.msra.mxu0 0
    %1144 = vmatprep.subr.bf16.mxu0 0
    %1145 = vmatpush1.bf16.msra.mxu0 0
    %1146 = vmatprep.subr.bf16.mxu0 0
    %1147 = vmatpush1.bf16.msra.mxu0 0
    %1148 = vmatprep.subr.bf16.mxu0 0
    %1149 = vmatpush1.bf16.msra.mxu0 0
    %1150 = vmatprep.subr.bf16.mxu0 0
    %1151 = vmatpush1.bf16.msra.mxu0 0
    %1152 = vmatprep.subr.bf16.mxu0 0
    %1153 = vmatpush1.bf16.msra.mxu0 0
    %1154 = vmatprep.mubr.bf16.mxu0 0
    %1155 = vmatmul.mubr.bf16.gmra.mrb[0].mxu0 %v1067
    %v1156 = vpop.f32.mrb[0].mxu0
    %v1157 = vadd.f32 %v1072, %v1156
    %v1158 = vpop.f32.mrb[0].mxu0
    %v1159 = vpop.f32.mrb[0].mxu0
    %v1160 = vadd.f32 %v1072, %v1159
    %v1161 = vpop.f32.mrb[0].mxu0
    %1162 = vdwg.mxu0
    %vm1163 = vcmp.gt.f32.partialorder %v1157, 0.0
    %vm1164 = vcmp.gt.f32.partialorder %v1160, 0.0
    %v1165 = vmin.f32 %v1157, 0.0
    %v1166 = vmin.f32 %v1160, 0.0
    %v1167 = vmul.f32 %v1165, 1.442695
    %v1168 = vpow.pop %v1167
    %v1169 = vmul.f32 %v1166, 1.442695
    %v1170 = vpow.pop %v1169
    %v1171 = vsub.f32 %v1168, 1.0
    %v1172 = vsub.f32 %v1170, 1.0
    %v1173 = vsel %vm1163, %v1157, %v1171
    %v1174 = vsel %vm1164, %v1160, %v1172
    %v1175 = vadd.f32 %v659, %v916
    %v1176 = vadd.f32 %v660, %v917
    %v1177 = vadd.f32 %v1175, %v1173
    %v1178 = vadd.f32 %v1176, %v1174
    %v1179 = vsub.f32 0.0, %v1177
    %v1180 = vsub.f32 0.0, %v1178
    %v1181 = vmax.f32 %v1179, 0.0
    %v1182 = vmax.f32 %v1180, 0.0
    %v1183 = vand.u32 2147483647, %v1179
    %v1184 = vand.u32 2147483647, %v1180
    %v1185 = vsub.f32 0.0, %v1183
    %v1186 = vsub.f32 0.0, %v1184
    %v1187 = vmul.f32 %v1185, 1.442695
    %v1188 = vpow.pop %v1187
    %v1189 = vmul.f32 %v1186, 1.442695
    %v1190 = vpow.pop %v1189
    %v1191 = vadd.f32 %v1188, 1.0
    %v1192 = vadd.f32 %v1190, 1.0
    %v1193 = vlog2.pop %v1191
    %v1194 = vmul.f32 %v1193, 0.6931472
    %v1195 = vlog2.pop %v1192
    %v1196 = vmul.f32 %v1195, 0.6931472
    %v1197 = vadd.f32 %v1181, %v1194
    %v1198 = vadd.f32 %v1182, %v1196
    %v1199 = vsub.f32 0.0, %v1197
    %v1200 = vsub.f32 0.0, %v1198
    %v1201 = vmul.f32 %v1199, 1.442695
    %v1202 = vpow.pop %v1201
    %v1203 = vmul.f32 %v1200, 1.442695
    %v1204 = vpow.pop %v1203
    %v1205 = vadd.f32 %v1202, 1e-08
    %v1206 = vadd.f32 %v1204, 1e-08
    %v1207 = vlog2.pop %v1205
    %v1208 = vmul.f32 %v1207, 0.6931472
    %v1209 = vlog2.pop %v1206
    %v1210 = vmul.f32 %v1209, 0.6931472
    %s1211 = sld [smem:[#allocation2]]
    %s1212 = smul.f32 %s1211, 2.0
    %v1213 = vstv %s1212
    %v1214 = vadd.f32 %v659, %v1213
    %v1215 = vadd.f32 %v660, %v1213
    %v1216 = vsub.f32 0.0, %v1214
    %v1217 = vsub.f32 0.0, %v1215
    %v1218 = vmax.f32 %v1216, 0.0
    %v1219 = vmax.f32 %v1217, 0.0
    %v1220 = vand.u32 2147483647, %v1216
    %v1221 = vand.u32 2147483647, %v1217
    %v1222 = vsub.f32 0.0, %v1220
    %v1223 = vsub.f32 0.0, %v1221
    %v1224 = vmul.f32 %v1222, 1.442695
    %v1225 = vpow.pop %v1224
    %v1226 = vmul.f32 %v1223, 1.442695
    %v1227 = vpow.pop %v1226
    %v1228 = vadd.f32 %v1225, 1.0
    %v1229 = vadd.f32 %v1227, 1.0
    %v1230 = vlog2.pop %v1228
    %v1231 = vmul.f32 %v1230, 0.6931472
    %v1232 = vlog2.pop %v1229
    %v1233 = vmul.f32 %v1232, 0.6931472
    %v1234 = vadd.f32 %v1218, %v1231
    %v1235 = vadd.f32 %v1219, %v1233
    %v1236 = vsub.f32 0.0, %v1234
    %v1237 = vsub.f32 0.0, %v1235
    %v1238 = vmul.f32 %v1236, 1.442695
    %v1239 = vpow.pop %v1238
    %v1240 = vmul.f32 %v1237, 1.442695
    %v1241 = vpow.pop %v1240
    %v1242 = vadd.f32 %v1239, 1e-08
    %v1243 = vadd.f32 %v1241, 1e-08
    %v1244 = vlog2.pop %v1242
    %v1245 = vmul.f32 %v1244, 0.6931472
    %v1246 = vlog2.pop %v1243
    %v1247 = vmul.f32 %v1246, 0.6931472
    %v1248 = vsub.f32 %v1208, %v1245
    %v1249 = vsub.f32 %v1210, %v1247
    %1252 = vrot.lane.b32.xlu0 %v916, 8
    %v1253 = vpop.permute.xlu0 %1252
    %1254 = vrot.lane.b32.xlu0 %v917, 8
    %v1255 = vpop.permute.xlu0 %1254
    %1260 = vrot.lane.b32.xlu0 %v1208, 16
    %v1261 = vpop.permute.xlu0 %1260
    %1262 = vrot.lane.b32.xlu0 %v1210, 16
    %v1263 = vpop.permute.xlu0 %1262
    %1268 = vrot.lane.b32.xlu0 %v1245, 24
    %v1269 = vpop.permute.xlu0 %1268
    %1270 = vrot.lane.b32.xlu0 %v1247, 24
    %v1271 = vpop.permute.xlu0 %1270
    %1276 = vrot.lane.b32.xlu0 %v1248, 32
    %v1277 = vpop.permute.xlu0 %1276
    %1278 = vrot.lane.b32.xlu0 %v1249, 32
    %v1279 = vpop.permute.xlu0 %1278
    %v1282 = vsel %vm244, %v659, %v1253
    %v1283 = vsel %vm244, %v660, %v1255
    %vm1284 = vcmask 130048
    %v1285 = vsel %vm1284, %v1282, %v1261
    %v1286 = vsel %vm1284, %v1283, %v1263
    %vm1287 = vcmask 195584
    %v1288 = vsel %vm1287, %v1285, %v1269
    %v1289 = vsel %vm1287, %v1286, %v1271
    %vm1290 = vcmask 261120
    %v1291 = vsel %vm1290, %v1288, %v1277
    %v1292 = vsel %vm1290, %v1289, %v1279
    %vm1293 = vcmask 326656
    %v1294 = vsel %vm1293, %v1291, 0.0
    %v1295 = vsel %vm1293, %v1292, 0.0
    %1296 = vst [vmem:[#allocation3] sm:$0xff] %v1294
    %1297 = vst [vmem:[#allocation3 + $0x8] sm:$0xff] %v1295
    // Predicated region
    $region90: #{tpu_custom_call.1} parent=1 // pred_check
      _
    $region91: #{tpu_custom_call.1} parent=1 // pred_check_branch
      %1299 = sbr.rel (0) target = $region93
    $region92: #{tpu_custom_call.1} parent=1 // pred_region
      %s1301 = ssub.s32 256, 256
      %1302 = vsyncadd [#allocation4], %s1301
      %s1303 = sshll.u32 [#allocation3], 4
      %s1304 = int_to_ptr.vmem [resolvable:$true] %s1303
      %1309 = dma.vmem_to_hbm [thread:$0]  %s1304, 256, %s22, [#allocation4], 128, 128, 8
    $region93: #{tpu_custom_call.1} parent=1 // pred_fallthru
      _
    // Predicated region
    $region94: #{tpu_custom_call.1} parent=1 // pred_check
      _
    $region95: #{tpu_custom_call.1} parent=1 // pred_check_branch
      %1311 = sbr.rel (0) target = $region97
    $region96: #{tpu_custom_call.1} parent=1 // pred_region
      %1312 = dma.done [#allocation4], 256
    $region97: #{tpu_custom_call.1} parent=1 // pred_fallthru
      _
    %1313 = vsyncpa [#allocation4], 1

// kernel: tpu_custom_call.1
$region0: #{tpu_custom_call.1}
  #allocation0 [shape = 'u32[]', space=smem, size = 0x4, offset = 0x4, fixed_abs, tag = 'smem constant byte address 0x4 - core index']
  #allocation1 [shape = 'u32[144,128]{1,0:T(1,128)}', space=vmem, size = 0x12000, scoped, tag = 'internal scratch']
  #allocation2 [shape = 'f32[1]{0:T(128)S(6)}', space=smem, size = 0x200, scoped, tag = 'scoped memory for tpu_custom_call.1']
  %s0 = inlined_call_operand.vmem [shape: bf16[16,128], index: 0, kind: input, shape index: {}]
  %s1 = inlined_call_operand.vmem [shape: bf16[16,128], index: 1, kind: input, shape index: {}]
  %s2 = inlined_call_operand.vmem [shape: bf16[16,128], index: 2, kind: input, shape index: {}]
  %s3 = inlined_call_operand.vmem [shape: bf16[128,64], index: 3, kind: input, shape index: {}]
  %s4 = inlined_call_operand.vmem [shape: f32[1,64], index: 4, kind: input, shape index: {}]
  %s5 = inlined_call_operand.vmem [shape: bf16[8,64], index: 5, kind: input, shape index: {}]
  %s6 = inlined_call_operand.vmem [shape: bf16[128,128], index: 6, kind: input, shape index: {}]
  %s7 = inlined_call_operand.vmem [shape: f32[1,128], index: 7, kind: input, shape index: {}]
  %s8 = inlined_call_operand.vmem [shape: bf16[8,128], index: 8, kind: input, shape index: {}]
  %s9 = inlined_call_operand.vmem [shape: bf16[128,128], index: 9, kind: input, shape index: {}]
  %s10 = inlined_call_operand.vmem [shape: f32[1,128], index: 10, kind: input, shape index: {}]
  %s11 = inlined_call_operand.vmem [shape: bf16[128,8], index: 11, kind: input, shape index: {}]
  %s12 = inlined_call_operand.vmem [shape: f32[1,8], index: 12, kind: input, shape index: {}]
  %s13 = inlined_call_operand.vmem [shape: bf16[128,128], index: 13, kind: input, shape index: {}]
  %s14 = inlined_call_operand.vmem [shape: f32[1,128], index: 14, kind: input, shape index: {}]
  %s15 = inlined_call_operand.vmem [shape: bf16[128,8], index: 15, kind: input, shape index: {}]
  %s16 = inlined_call_operand.vmem [shape: f32[1,8], index: 16, kind: input, shape index: {}]
  %s17 = inlined_call_operand.vmem [shape: bf16[128,128], index: 17, kind: input, shape index: {}]
  %s18 = inlined_call_operand.vmem [shape: f32[1,128], index: 18, kind: input, shape index: {}]
  %s19 = inlined_call_operand.vmem [shape: bf16[128,8], index: 19, kind: input, shape index: {}]
  %s20 = inlined_call_operand.vmem [shape: f32[1,8], index: 20, kind: input, shape index: {}]
  %s21 = inlined_call_operand.<no memory space> [shape: f32[1], index: 21, kind: input, shape index: {}]
  %s22 = inlined_call_operand.hbm [shape: f32[16,128], index: 22, kind: output, shape index: {}]
  %s23 = sld [smem:[#allocation0]]
  $region98: #{tpu_custom_call.1} parent=0
    _
  %s25 = ssub.s32 1, %s23
  %s26 = scalar_select 0, %s25, %s23
  %27 = sst [smem:[#allocation2]] %s21
  $region1: #{tpu_custom_call.1} parent=0
    #allocation3 [shape = 'u8[8192]{0}', space=vmem, size = 0x2000, scoped, tag = 'output window, operand 0, single buffered']
    #allocation4 [shape = 's32[1]{0}', space=sflag, size = 0x4, scoped, tag = 'scoped memory for tpu_custom_call.1']
    %28 = vsyncpa [#allocation4], 0
    // Predicated region
    $region2: #{tpu_custom_call.1} parent=1 // pred_check
      _
    $region3: #{tpu_custom_call.1} parent=1 // pred_check_branch
      %30 = sbr.rel (0) target = $region5
    $region4: #{tpu_custom_call.1} parent=1 // pred_region
      _
    $region5: #{tpu_custom_call.1} parent=1 // pred_fallthru
      _
    // Predicated region
    $region6: #{tpu_custom_call.1} parent=1 // pred_check
      _
    $region7: #{tpu_custom_call.1} parent=1 // pred_check_branch
      %32 = sbr.rel (0) target = $region9
    $region8: #{tpu_custom_call.1} parent=1 // pred_region
      _
    $region9: #{tpu_custom_call.1} parent=1 // pred_fallthru
      _
    // Predicated region
    $region10: #{tpu_custom_call.1} parent=1 // pred_check
      _
    $region11: #{tpu_custom_call.1} parent=1 // pred_check_branch
      %34 = sbr.rel (0) target = $region13
    $region12: #{tpu_custom_call.1} parent=1 // pred_region
      _
    $region13: #{tpu_custom_call.1} parent=1 // pred_fallthru
      _
    // Predicated region
    $region14: #{tpu_custom_call.1} parent=1 // pred_check
      _
    $region15: #{tpu_custom_call.1} parent=1 // pred_check_branch
      %36 = sbr.rel (0) target = $region17
    $region16: #{tpu_custom_call.1} parent=1 // pred_region
      _
    $region17: #{tpu_custom_call.1} parent=1 // pred_fallthru
      _
    // Predicated region
    $region18: #{tpu_custom_call.1} parent=1 // pred_check
      _
    $region19: #{tpu_custom_call.1} parent=1 // pred_check_branch
      %38 = sbr.rel (0) target = $region21
    $region20: #{tpu_custom_call.1} parent=1 // pred_region
      _
    $region21: #{tpu_custom_call.1} parent=1 // pred_fallthru
      _
    // Predicated region
    $region22: #{tpu_custom_call.1} parent=1 // pred_check
      _
    $region23: #{tpu_custom_call.1} parent=1 // pred_check_branch
      %40 = sbr.rel (0) target = $region25
    $region24: #{tpu_custom_call.1} parent=1 // pred_region
      _
    $region25: #{tpu_custom_call.1} parent=1 // pred_fallthru
      _
    // Predicated region
    $region26: #{tpu_custom_call.1} parent=1 // pred_check
      _
    $region27: #{tpu_custom_call.1} parent=1 // pred_check_branch
      %42 = sbr.rel (0) target = $region29
    $region28: #{tpu_custom_call.1} parent=1 // pred_region
      _
    $region29: #{tpu_custom_call.1} parent=1 // pred_fallthru
      _
    // Predicated region
    $region30: #{tpu_custom_call.1} parent=1 // pred_check
      _
    $region31: #{tpu_custom_call.1} parent=1 // pred_check_branch
      %44 = sbr.rel (0) target = $region33
    $region32: #{tpu_custom_call.1} parent=1 // pred_region
      _
    $region33: #{tpu_custom_call.1} parent=1 // pred_fallthru
      _
    // Predicated region
    $region34: #{tpu_custom_call.1} parent=1 // pred_check
      _
    $region35: #{tpu_custom_call.1} parent=1 // pred_check_branch
      %46 = sbr.rel (0) target = $region37
    $region36: #{tpu_custom_call.1} parent=1 // pred_region
      _
    $region37: #{tpu_custom_call.1} parent=1 // pred_fallthru
      _
    // Predicated region
    $region38: #{tpu_custom_call.1} parent=1 // pred_check
      _
    $region39: #{tpu_custom_call.1} parent=1 // pred_check_branch
      %48 = sbr.rel (0) target = $region41
    $region40: #{tpu_custom_call.1} parent=1 // pred_region
      _
    $region41: #{tpu_custom_call.1} parent=1 // pred_fallthru
      _
    // Predicated region
    $region42: #{tpu_custom_call.1} parent=1 // pred_check
      _
    $region43: #{tpu_custom_call.1} parent=1 // pred_check_branch
      %50 = sbr.rel (0) target = $region45
    $region44: #{tpu_custom_call.1} parent=1 // pred_region
      _
    $region45: #{tpu_custom_call.1} parent=1 // pred_fallthru
      _
    // Predicated region
    $region46: #{tpu_custom_call.1} parent=1 // pred_check
      _
    $region47: #{tpu_custom_call.1} parent=1 // pred_check_branch
      %52 = sbr.rel (0) target = $region49
    $region48: #{tpu_custom_call.1} parent=1 // pred_region
      _
    $region49: #{tpu_custom_call.1} parent=1 // pred_fallthru
      _
    // Predicated region
    $region50: #{tpu_custom_call.1} parent=1 // pred_check
      _
    $region51: #{tpu_custom_call.1} parent=1 // pred_check_branch
      %54 = sbr.rel (0) target = $region53
    $region52: #{tpu_custom_call.1} parent=1 // pred_region
      _
    $region53: #{tpu_custom_call.1} parent=1 // pred_fallthru
      _
    // Predicated region
    $region54: #{tpu_custom_call.1} parent=1 // pred_check
      _
    $region55: #{tpu_custom_call.1} parent=1 // pred_check_branch
      %56 = sbr.rel (0) target = $region57
    $region56: #{tpu_custom_call.1} parent=1 // pred_region
      _
    $region57: #{tpu_custom_call.1} parent=1 // pred_fallthru
      _
    // Predicated region
    $region58: #{tpu_custom_call.1} parent=1 // pred_check
      _
    $region59: #{tpu_custom_call.1} parent=1 // pred_check_branch
      %58 = sbr.rel (0) target = $region61
    $region60: #{tpu_custom_call.1} parent=1 // pred_region
      _
    $region61: #{tpu_custom_call.1} parent=1 // pred_fallthru
      _
    // Predicated region
    $region62: #{tpu_custom_call.1} parent=1 // pred_check
      _
    $region63: #{tpu_custom_call.1} parent=1 // pred_check_branch
      %60 = sbr.rel (0) target = $region65
    $region64: #{tpu_custom_call.1} parent=1 // pred_region
      _
    $region65: #{tpu_custom_call.1} parent=1 // pred_fallthru
      _
    // Predicated region
    $region66: #{tpu_custom_call.1} parent=1 // pred_check
      _
    $region67: #{tpu_custom_call.1} parent=1 // pred_check_branch
      %62 = sbr.rel (0) target = $region69
    $region68: #{tpu_custom_call.1} parent=1 // pred_region
      _
    $region69: #{tpu_custom_call.1} parent=1 // pred_fallthru
      _
    // Predicated region
    $region70: #{tpu_custom_call.1} parent=1 // pred_check
      _
    $region71: #{tpu_custom_call.1} parent=1 // pred_check_branch
      %64 = sbr.rel (0) target = $region73
    $region72: #{tpu_custom_call.1} parent=1 // pred_region
      _
    $region73: #{tpu_custom_call.1} parent=1 // pred_fallthru
      _
    // Predicated region
    $region74: #{tpu_custom_call.1} parent=1 // pred_check
      _
    $region75: #{tpu_custom_call.1} parent=1 // pred_check_branch
      %66 = sbr.rel (0) target = $region77
    $region76: #{tpu_custom_call.1} parent=1 // pred_region
      _
    $region77: #{tpu_custom_call.1} parent=1 // pred_fallthru
      _
    // Predicated region
    $region78: #{tpu_custom_call.1} parent=1 // pred_check
      _
    $region79: #{tpu_custom_call.1} parent=1 // pred_check_branch
      %68 = sbr.rel (0) target = $region81
    $region80: #{tpu_custom_call.1} parent=1 // pred_region
      _
    $region81: #{tpu_custom_call.1} parent=1 // pred_fallthru
      _
    // Predicated region
    $region82: #{tpu_custom_call.1} parent=1 // pred_check
      _
    $region83: #{tpu_custom_call.1} parent=1 // pred_check_branch
      %70 = sbr.rel (0) target = $region85
    $region84: #{tpu_custom_call.1} parent=1 // pred_region
      _
    $region85: #{tpu_custom_call.1} parent=1 // pred_fallthru
      _
    // Predicated region
    $region86: #{tpu_custom_call.1} parent=1 // pred_check
      _
    $region87: #{tpu_custom_call.1} parent=1 // pred_check_branch
      %72 = sbr.rel (0) target = $region89
    $region88: #{tpu_custom_call.1} parent=1 // pred_region
      _
    $region89: #{tpu_custom_call.1} parent=1 // pred_fallthru
      _
    %v74 = vld [vmem:[%s0] sm:$0xf]
    %v75 = vld [vmem:[%s0 + $0x4] sm:$0xf]
    %v76 = vld [vmem:[%s3] sm:$0xf]
    %v77 = vld [vmem:[%s3 + $0x4] sm:$0xf]
    %v78 = vld [vmem:[%s3 + $0x8] sm:$0xf]
    %v79 = vld [vmem:[%s3 + $0xc] sm:$0xf]
    %v80 = vld [vmem:[%s3 + $0x10] sm:$0xf]
    %v81 = vld [vmem:[%s3 + $0x14] sm:$0xf]
    %v82 = vld [vmem:[%s3 + $0x18] sm:$0xf]
    %v83 = vld [vmem:[%s3 + $0x1c] sm:$0xf]
    %v84 = vld [vmem:[%s3 + $0x20] sm:$0xf]
    %v85 = vld [vmem:[%s3 + $0x24] sm:$0xf]
    %v86 = vld [vmem:[%s3 + $0x28] sm:$0xf]
    %v87 = vld [vmem:[%s3 + $0x2c] sm:$0xf]
    %v88 = vld [vmem:[%s3 + $0x30] sm:$0xf]
    %v89 = vld [vmem:[%s3 + $0x34] sm:$0xf]
    %v90 = vld [vmem:[%s3 + $0x38] sm:$0xf]
    %v91 = vld [vmem:[%s3 + $0x3c] sm:$0xf]
    %v92 = vld [vmem:[%s4] sm:$0x1]
    %v94 = vlaneseq
    %v95 = vshrl.u32 %v94, 7
    %v96 = vsub.s32 0, %v95
    %v97 = vrot.slane %v92, %v96
    %v101 = vunpack.c.l.b16 %v74
    %v102 = vunpack.c.l.b16 %v75
    %v103 = vpack.c.b16 %v102, %v101
    %v121 = vunpack.c.l.b16 %v76
    %v122 = vunpack.c.l.b16 %v77
    %v123 = vunpack.c.l.b16 %v78
    %v124 = vunpack.c.l.b16 %v79
    %v125 = vunpack.c.l.b16 %v80
    %v126 = vunpack.c.l.b16 %v81
    %v127 = vunpack.c.l.b16 %v82
    %v128 = vunpack.c.l.b16 %v83
    %v129 = vunpack.c.l.b16 %v84
    %v130 = vunpack.c.l.b16 %v85
    %v131 = vunpack.c.l.b16 %v86
    %v132 = vunpack.c.l.b16 %v87
    %v133 = vunpack.c.l.b16 %v88
    %v134 = vunpack.c.l.b16 %v89
    %v135 = vunpack.c.l.b16 %v90
    %v136 = vunpack.c.l.b16 %v91
    %v137 = vpack.c.b16 %v122, %v121
    %v138 = vpack.c.b16 %v124, %v123
    %v139 = vpack.c.b16 %v126, %v125
    %v140 = vpack.c.b16 %v128, %v127
    %v141 = vpack.c.b16 %v130, %v129
    %v142 = vpack.c.b16 %v132, %v131
    %v143 = vpack.c.b16 %v134, %v133
    %v144 = vpack.c.b16 %v136, %v135
    %153 = vmatprep.subr.bf16.mxu0 0
    %154 = vmatpush1.bf16.msra.mxu0 %v137
    %155 = vmatprep.subr.bf16.mxu0 0
    %156 = vmatpush1.bf16.msra.mxu0 %v138
    %157 = vmatprep.subr.bf16.mxu0 0
    %158 = vmatpush1.bf16.msra.mxu0 %v139
    %159 = vmatprep.subr.bf16.mxu0 0
    %160 = vmatpush1.bf16.msra.mxu0 %v140
    %161 = vmatprep.subr.bf16.mxu0 0
    %162 = vmatpush1.bf16.msra.mxu0 %v141
    %163 = vmatprep.subr.bf16.mxu0 0
    %164 = vmatpush1.bf16.msra.mxu0 %v142
    %165 = vmatprep.subr.bf16.mxu0 0
    %166 = vmatpush1.bf16.msra.mxu0 %v143
    %167 = vmatprep.subr.bf16.mxu0 0
    %168 = vmatpush1.bf16.msra.mxu0 %v144
    %169 = vmatprep.subr.bf16.mxu0 0
    %170 = vmatpush1.bf16.msra.mxu0 0
    %171 = vmatprep.subr.bf16.mxu0 0
    %172 = vmatpush1.bf16.msra.mxu0 0
    %173 = vmatprep.subr.bf16.mxu0 0
    %174 = vmatpush1.bf16.msra.mxu0 0
    %175 = vmatprep.subr.bf16.mxu0 0
    %176 = vmatpush1.bf16.msra.mxu0 0
    %177 = vmatprep.subr.bf16.mxu0 0
    %178 = vmatpush1.bf16.msra.mxu0 0
    %179 = vmatprep.subr.bf16.mxu0 0
    %180 = vmatpush1.bf16.msra.mxu0 0
    %181 = vmatprep.subr.bf16.mxu0 0
    %182 = vmatpush1.bf16.msra.mxu0 0
    %183 = vmatprep.subr.bf16.mxu0 0
    %184 = vmatpush1.bf16.msra.mxu0 0
    %185 = vmatprep.mubr.bf16.mxu0 0
    %186 = vmatmul.mubr.bf16.gmra.mrb[0].mxu0 %v103
    %v187 = vpop.f32.mrb[0].mxu0
    %v188 = vadd.f32 %v97, %v187
    %v189 = vpop.f32.mrb[0].mxu0
    %v190 = vpop.f32.mrb[0].mxu0
    %v191 = vadd.f32 %v97, %v190
    %v192 = vpop.f32.mrb[0].mxu0
    %193 = vdwg.mxu0
    %v194 = vpack.c.bf16 %v191, %v188
    %v195 = vld [vmem:[%s5] sm:$0xf]
    %vm196 = vcmask 523264
    %v198 = vsel %vm196, %v194, 0
    %v201 = vsel %vm196, %v195, 0
    %203 = vmatprep.subr.bf16.mxu0 0
    %204 = vmatpush1.bf16.xpose.msra.mxu0 %v201
    %205 = vmatprep.subr.bf16.mxu0 0
    %206 = vmatpush1.bf16.xpose.msra.mxu0 0
    %207 = vmatprep.subr.bf16.mxu0 0
    %208 = vmatpush1.bf16.xpose.msra.mxu0 0
    %209 = vmatprep.subr.bf16.mxu0 0
    %210 = vmatpush1.bf16.xpose.msra.mxu0 0
    %211 = vmatprep.subr.bf16.mxu0 0
    %212 = vmatpush1.bf16.xpose.msra.mxu0 0
    %213 = vmatprep.subr.bf16.mxu0 0
    %214 = vmatpush1.bf16.xpose.msra.mxu0 0
    %215 = vmatprep.subr.bf16.mxu0 0
    %216 = vmatpush1.bf16.xpose.msra.mxu0 0
    %217 = vmatprep.subr.bf16.mxu0 0
    %218 = vmatpush1.bf16.xpose.msra.mxu0 0
    %219 = vmatprep.subr.bf16.mxu0 0
    %220 = vmatpush1.bf16.xpose.msra.mxu0 0
    %221 = vmatprep.subr.bf16.mxu0 0
    %222 = vmatpush1.bf16.xpose.msra.mxu0 0
    %223 = vmatprep.subr.bf16.mxu0 0
    %224 = vmatpush1.bf16.xpose.msra.mxu0 0
    %225 = vmatprep.subr.bf16.mxu0 0
    %226 = vmatpush1.bf16.xpose.msra.mxu0 0
    %227 = vmatprep.subr.bf16.mxu0 0
    %228 = vmatpush1.bf16.xpose.msra.mxu0 0
    %229 = vmatprep.subr.bf16.mxu0 0
    %230 = vmatpush1.bf16.xpose.msra.mxu0 0
    %231 = vmatprep.subr.bf16.mxu0 0
    %232 = vmatpush1.bf16.xpose.msra.mxu0 0
    %233 = vmatprep.subr.bf16.mxu0 0
    %234 = vmatpush1.bf16.xpose.msra.mxu0 0
    %235 = vmatprep.mubr.bf16.mxu0 0
    %236 = vmatmul.mubr.bf16.gmra.mrb[0].mxu0 %v198
    %v237 = vpop.f32.mrb[0].mxu0
    %v238 = vadd.f32 0.0, %v237
    %v239 = vpop.f32.mrb[0].mxu0
    %v240 = vpop.f32.mrb[0].mxu0
    %v241 = vadd.f32 0.0, %v240
    %v242 = vpop.f32.mrb[0].mxu0
    %243 = vdwg.mxu0
    %vm244 = vcmask 64512
    %v245 = vsel %vm244, %v238, -inf
    %246 = vmax.xlane.f32.xlu0 %v245
    %v247 = vpop.xlane.xlu0 %246
    %v248 = vsel %vm244, %v241, -inf
    %249 = vmax.xlane.f32.xlu0 %v248
    %v250 = vpop.xlane.xlu0 %249
    %v251 = vsub.f32 %v238, %v247
    %v252 = vsub.f32 %v241, %v250
    %v253 = vmul.f32 %v251, 1.442695
    %v254 = vpow.pop %v253
    %v255 = vmul.f32 %v252, 1.442695
    %v256 = vpow.pop %v255
    %v257 = vsel %vm244, %v254, 0.0
    %258 = vadd.xlane.f32.xlu0 %v257
    %v259 = vpop.xlane.xlu0 %258
    %v260 = vsel %vm244, %v256, 0.0
    %261 = vadd.xlane.f32.xlu0 %v260
    %v262 = vpop.xlane.xlu0 %261
    %v263 = vrcp.pop %v259
    %v264 = vmul.f32 %v254, %v263
    %v265 = vrcp.pop %v262
    %v266 = vmul.f32 %v256, %v265
    %v267 = vld [vmem:[%s6] sm:$0xf]
    %v268 = vld [vmem:[%s6 + $0x4] sm:$0xf]
    %v269 = vld [vmem:[%s6 + $0x8] sm:$0xf]
    %v270 = vld [vmem:[%s6 + $0xc] sm:$0xf]
    %v271 = vld [vmem:[%s6 + $0x10] sm:$0xf]
    %v272 = vld [vmem:[%s6 + $0x14] sm:$0xf]
    %v273 = vld [vmem:[%s6 + $0x18] sm:$0xf]
    %v274 = vld [vmem:[%s6 + $0x1c] sm:$0xf]
    %v275 = vld [vmem:[%s6 + $0x20] sm:$0xf]
    %v276 = vld [vmem:[%s6 + $0x24] sm:$0xf]
    %v277 = vld [vmem:[%s6 + $0x28] sm:$0xf]
    %v278 = vld [vmem:[%s6 + $0x2c] sm:$0xf]
    %v279 = vld [vmem:[%s6 + $0x30] sm:$0xf]
    %v280 = vld [vmem:[%s6 + $0x34] sm:$0xf]
    %v281 = vld [vmem:[%s6 + $0x38] sm:$0xf]
    %v282 = vld [vmem:[%s6 + $0x3c] sm:$0xf]
    %v283 = vld [vmem:[%s8] sm:$0xf]
    %v284 = vpack.c.bf16 %v266, %v264
    %v286 = vsel %vm244, %v284, 0
    %vm288 = vcmask 1043456
    %v290 = vsel %vm288, %v283, 0
    %292 = vmatprep.subr.bf16.mxu0 0
    %293 = vmatpush1.bf16.msra.mxu0 %v290
    %294 = vmatprep.subr.bf16.mxu0 0
    %295 = vmatpush1.bf16.msra.mxu0 0
    %296 = vmatprep.subr.bf16.mxu0 0
    %297 = vmatpush1.bf16.msra.mxu0 0
    %298 = vmatprep.subr.bf16.mxu0 0
    %299 = vmatpush1.bf16.msra.mxu0 0
    %300 = vmatprep.subr.bf16.mxu0 0
    %301 = vmatpush1.bf16.msra.mxu0 0
    %302 = vmatprep.subr.bf16.mxu0 0
    %303 = vmatpush1.bf16.msra.mxu0 0
    %304 = vmatprep.subr.bf16.mxu0 0
    %305 = vmatpush1.bf16.msra.mxu0 0
    %306 = vmatprep.subr.bf16.mxu0 0
    %307 = vmatpush1.bf16.msra.mxu0 0
    %308 = vmatprep.subr.bf16.mxu0 0
    %309 = vmatpush1.bf16.msra.mxu0 0
    %310 = vmatprep.subr.bf16.mxu0 0
    %311 = vmatpush1.bf16.msra.mxu0 0
    %312 = vmatprep.subr.bf16.mxu0 0
    %313 = vmatpush1.bf16.msra.mxu0 0
    %314 = vmatprep.subr.bf16.mxu0 0
    %315 = vmatpush1.bf16.msra.mxu0 0
    %316 = vmatprep.subr.bf16.mxu0 0
    %317 = vmatpush1.bf16.msra.mxu0 0
    %318 = vmatprep.subr.bf16.mxu0 0
    %319 = vmatpush1.bf16.msra.mxu0 0
    %320 = vmatprep.subr.bf16.mxu0 0
    %321 = vmatpush1.bf16.msra.mxu0 0
    %322 = vmatprep.subr.bf16.mxu0 0
    %323 = vmatpush1.bf16.msra.mxu0 0
    %324 = vmatprep.mubr.bf16.mxu0 0
    %325 = vmatmul.mubr.bf16.gmra.mrb[0].mxu0 %v286
    %v326 = vpop.f32.mrb[0].mxu0
    %v327 = vadd.f32 0.0, %v326
    %v328 = vpop.f32.mrb[0].mxu0
    %v329 = vpop.f32.mrb[0].mxu0
    %v330 = vadd.f32 0.0, %v329
    %v331 = vpop.f32.mrb[0].mxu0
    %332 = vdwg.mxu0
    %v349 = vunpack.c.l.b16 %v267
    %v350 = vunpack.c.l.b16 %v268
    %v351 = vunpack.c.l.b16 %v269
    %v352 = vunpack.c.l.b16 %v270
    %v353 = vunpack.c.l.b16 %v271
    %v354 = vunpack.c.l.b16 %v272
    %v355 = vunpack.c.l.b16 %v273
    %v356 = vunpack.c.l.b16 %v274
    %v357 = vunpack.c.l.b16 %v275
    %v358 = vunpack.c.l.b16 %v276
    %v359 = vunpack.c.l.b16 %v277
    %v360 = vunpack.c.l.b16 %v278
    %v361 = vunpack.c.l.b16 %v279
    %v362 = vunpack.c.l.b16 %v280
    %v363 = vunpack.c.l.b16 %v281
    %v364 = vunpack.c.l.b16 %v282
    %v365 = vpack.c.b16 %v350, %v349
    %v366 = vpack.c.b16 %v352, %v351
    %v367 = vpack.c.b16 %v354, %v353
    %v368 = vpack.c.b16 %v356, %v355
    %v369 = vpack.c.b16 %v358, %v357
    %v370 = vpack.c.b16 %v360, %v359
    %v371 = vpack.c.b16 %v362, %v361
    %v372 = vpack.c.b16 %v364, %v363
    %381 = vmatprep.subr.bf16.mxu0 0
    %382 = vmatpush1.bf16.msra.mxu0 %v365
    %383 = vmatprep.subr.bf16.mxu0 0
    %384 = vmatpush1.bf16.msra.mxu0 %v366
    %385 = vmatprep.subr.bf16.mxu0 0
    %386 = vmatpush1.bf16.msra.mxu0 %v367
    %387 = vmatprep.subr.bf16.mxu0 0
    %388 = vmatpush1.bf16.msra.mxu0 %v368
    %389 = vmatprep.subr.bf16.mxu0 0
    %390 = vmatpush1.bf16.msra.mxu0 %v369
    %391 = vmatprep.subr.bf16.mxu0 0
    %392 = vmatpush1.bf16.msra.mxu0 %v370
    %393 = vmatprep.subr.bf16.mxu0 0
    %394 = vmatpush1.bf16.msra.mxu0 %v371
    %395 = vmatprep.subr.bf16.mxu0 0
    %396 = vmatpush1.bf16.msra.mxu0 %v372
    %397 = vmatprep.subr.bf16.mxu0 0
    %398 = vmatpush1.bf16.msra.mxu0 0
    %399 = vmatprep.subr.bf16.mxu0 0
    %400 = vmatpush1.bf16.msra.mxu0 0
    %401 = vmatprep.subr.bf16.mxu0 0
    %402 = vmatpush1.bf16.msra.mxu0 0
    %403 = vmatprep.subr.bf16.mxu0 0
    %404 = vmatpush1.bf16.msra.mxu0 0
    %405 = vmatprep.subr.bf16.mxu0 0
    %406 = vmatpush1.bf16.msra.mxu0 0
    %407 = vmatprep.subr.bf16.mxu0 0
    %408 = vmatpush1.bf16.msra.mxu0 0
    %409 = vmatprep.subr.bf16.mxu0 0
    %410 = vmatpush1.bf16.msra.mxu0 0
    %411 = vmatprep.subr.bf16.mxu0 0
    %412 = vmatpush1.bf16.msra.mxu0 0
    %413 = vmatprep.mubr.bf16.mxu0 0
    %414 = vmatmul.mubr.bf16.gmra.mrb[0].mxu0 %v103
    %v415 = vpop.f32.mrb[0].mxu0
    %v416 = vadd.f32 %v327, %v415
    %v417 = vpop.f32.mrb[0].mxu0
    %v418 = vpop.f32.mrb[0].mxu0
    %v419 = vadd.f32 %v330, %v418
    %v420 = vpop.f32.mrb[0].mxu0
    %421 = vdwg.mxu0
    %v422 = vld [vmem:[%s7] sm:$0x1]
    %v424 = vlaneseq
    %v425 = vshrl.u32 %v424, 7
    %v426 = vsub.s32 0, %v425
    %v427 = vrot.slane %v422, %v426
    %v429 = vadd.f32 %v416, %v427
    %v430 = vadd.f32 %v419, %v427
    %v431 = vld [vmem:[%s9] sm:$0xf]
    %v432 = vld [vmem:[%s9 + $0x4] sm:$0xf]
    %v433 = vld [vmem:[%s9 + $0x8] sm:$0xf]
    %v434 = vld [vmem:[%s9 + $0xc] sm:$0xf]
    %v435 = vld [vmem:[%s9 + $0x10] sm:$0xf]
    %v436 = vld [vmem:[%s9 + $0x14] sm:$0xf]
    %v437 = vld [vmem:[%s9 + $0x18] sm:$0xf]
    %v438 = vld [vmem:[%s9 + $0x1c] sm:$0xf]
    %v439 = vld [vmem:[%s9 + $0x20] sm:$0xf]
    %v440 = vld [vmem:[%s9 + $0x24] sm:$0xf]
    %v441 = vld [vmem:[%s9 + $0x28] sm:$0xf]
    %v442 = vld [vmem:[%s9 + $0x2c] sm:$0xf]
    %v443 = vld [vmem:[%s9 + $0x30] sm:$0xf]
    %v444 = vld [vmem:[%s9 + $0x34] sm:$0xf]
    %v445 = vld [vmem:[%s9 + $0x38] sm:$0xf]
    %v446 = vld [vmem:[%s9 + $0x3c] sm:$0xf]
    %v447 = vld [vmem:[%s10] sm:$0x1]
    %v448 = vld [vmem:[%s11] sm:$0xf]
    %v449 = vld [vmem:[%s11 + $0x4] sm:$0xf]
    %v450 = vld [vmem:[%s11 + $0x8] sm:$0xf]
    %v451 = vld [vmem:[%s11 + $0xc] sm:$0xf]
    %v452 = vld [vmem:[%s11 + $0x10] sm:$0xf]
    %v453 = vld [vmem:[%s11 + $0x14] sm:$0xf]
    %v454 = vld [vmem:[%s11 + $0x18] sm:$0xf]
    %v455 = vld [vmem:[%s11 + $0x1c] sm:$0xf]
    %v456 = vld [vmem:[%s11 + $0x20] sm:$0xf]
    %v457 = vld [vmem:[%s11 + $0x24] sm:$0xf]
    %v458 = vld [vmem:[%s11 + $0x28] sm:$0xf]
    %v459 = vld [vmem:[%s11 + $0x2c] sm:$0xf]
    %v460 = vld [vmem:[%s11 + $0x30] sm:$0xf]
    %v461 = vld [vmem:[%s11 + $0x34] sm:$0xf]
    %v462 = vld [vmem:[%s11 + $0x38] sm:$0xf]
    %v463 = vld [vmem:[%s11 + $0x3c] sm:$0xf]
    %v464 = vld [vmem:[%s12] sm:$0x1]
    %v465 = vpack.c.bf16 %v430, %v429
    %v467 = vlaneseq
    %v468 = vshrl.u32 %v467, 7
    %v469 = vsub.s32 0, %v468
    %v470 = vrot.slane %v447, %v469
    %v488 = vunpack.c.l.b16 %v431
    %v489 = vunpack.c.l.b16 %v432
    %v490 = vunpack.c.l.b16 %v433
    %v491 = vunpack.c.l.b16 %v434
    %v492 = vunpack.c.l.b16 %v435
    %v493 = vunpack.c.l.b16 %v436
    %v494 = vunpack.c.l.b16 %v437
    %v495 = vunpack.c.l.b16 %v438
    %v496 = vunpack.c.l.b16 %v439
    %v497 = vunpack.c.l.b16 %v440
    %v498 = vunpack.c.l.b16 %v441
    %v499 = vunpack.c.l.b16 %v442
    %v500 = vunpack.c.l.b16 %v443
    %v501 = vunpack.c.l.b16 %v444
    %v502 = vunpack.c.l.b16 %v445
    %v503 = vunpack.c.l.b16 %v446
    %v504 = vpack.c.b16 %v489, %v488
    %v505 = vpack.c.b16 %v491, %v490
    %v506 = vpack.c.b16 %v493, %v492
    %v507 = vpack.c.b16 %v495, %v494
    %v508 = vpack.c.b16 %v497, %v496
    %v509 = vpack.c.b16 %v499, %v498
    %v510 = vpack.c.b16 %v501, %v500
    %v511 = vpack.c.b16 %v503, %v502
    %520 = vmatprep.subr.bf16.mxu0 0
    %521 = vmatpush1.bf16.msra.mxu0 %v504
    %522 = vmatprep.subr.bf16.mxu0 0
    %523 = vmatpush1.bf16.msra.mxu0 %v505
    %524 = vmatprep.subr.bf16.mxu0 0
    %525 = vmatpush1.bf16.msra.mxu0 %v506
    %526 = vmatprep.subr.bf16.mxu0 0
    %527 = vmatpush1.bf16.msra.mxu0 %v507
    %528 = vmatprep.subr.bf16.mxu0 0
    %529 = vmatpush1.bf16.msra.mxu0 %v508
    %530 = vmatprep.subr.bf16.mxu0 0
    %531 = vmatpush1.bf16.msra.mxu0 %v509
    %532 = vmatprep.subr.bf16.mxu0 0
    %533 = vmatpush1.bf16.msra.mxu0 %v510
    %534 = vmatprep.subr.bf16.mxu0 0
    %535 = vmatpush1.bf16.msra.mxu0 %v511
    %536 = vmatprep.subr.bf16.mxu0 0
    %537 = vmatpush1.bf16.msra.mxu0 0
    %538 = vmatprep.subr.bf16.mxu0 0
    %539 = vmatpush1.bf16.msra.mxu0 0
    %540 = vmatprep.subr.bf16.mxu0 0
    %541 = vmatpush1.bf16.msra.mxu0 0
    %542 = vmatprep.subr.bf16.mxu0 0
    %543 = vmatpush1.bf16.msra.mxu0 0
    %544 = vmatprep.subr.bf16.mxu0 0
    %545 = vmatpush1.bf16.msra.mxu0 0
    %546 = vmatprep.subr.bf16.mxu0 0
    %547 = vmatpush1.bf16.msra.mxu0 0
    %548 = vmatprep.subr.bf16.mxu0 0
    %549 = vmatpush1.bf16.msra.mxu0 0
    %550 = vmatprep.subr.bf16.mxu0 0
    %551 = vmatpush1.bf16.msra.mxu0 0
    %552 = vmatprep.mubr.bf16.mxu0 0
    %553 = vmatmul.mubr.bf16.gmra.mrb[0].mxu0 %v465
    %v554 = vpop.f32.mrb[0].mxu0
    %v555 = vadd.f32 %v470, %v554
    %v556 = vpop.f32.mrb[0].mxu0
    %v557 = vpop.f32.mrb[0].mxu0
    %v558 = vadd.f32 %v470, %v557
    %v559 = vpop.f32.mrb[0].mxu0
    %560 = vdwg.mxu0
    %v561 = vmax.f32 %v555, 0.0
    %v562 = vmax.f32 %v558, 0.0
    %v563 = vpack.c.bf16 %v562, %v561
    %v565 = vlaneseq
    %v566 = vshrl.u32 %v565, 7
    %v567 = vsub.s32 0, %v566
    %v568 = vrot.slane %v464, %v567
    %v586 = vunpack.c.l.b16 %v448
    %v587 = vunpack.c.l.b16 %v449
    %v588 = vunpack.c.l.b16 %v450
    %v589 = vunpack.c.l.b16 %v451
    %v590 = vunpack.c.l.b16 %v452
    %v591 = vunpack.c.l.b16 %v453
    %v592 = vunpack.c.l.b16 %v454
    %v593 = vunpack.c.l.b16 %v455
    %v594 = vunpack.c.l.b16 %v456
    %v595 = vunpack.c.l.b16 %v457
    %v596 = vunpack.c.l.b16 %v458
    %v597 = vunpack.c.l.b16 %v459
    %v598 = vunpack.c.l.b16 %v460
    %v599 = vunpack.c.l.b16 %v461
    %v600 = vunpack.c.l.b16 %v462
    %v601 = vunpack.c.l.b16 %v463
    %v602 = vpack.c.b16 %v587, %v586
    %v603 = vpack.c.b16 %v589, %v588
    %v604 = vpack.c.b16 %v591, %v590
    %v605 = vpack.c.b16 %v593, %v592
    %v606 = vpack.c.b16 %v595, %v594
    %v607 = vpack.c.b16 %v597, %v596
    %v608 = vpack.c.b16 %v599, %v598
    %v609 = vpack.c.b16 %v601, %v600
    %618 = vmatprep.subr.bf16.mxu0 0
    %619 = vmatpush1.bf16.msra.mxu0 %v602
    %620 = vmatprep.subr.bf16.mxu0 0
    %621 = vmatpush1.bf16.msra.mxu0 %v603
    %622 = vmatprep.subr.bf16.mxu0 0
    %623 = vmatpush1.bf16.msra.mxu0 %v604
    %624 = vmatprep.subr.bf16.mxu0 0
    %625 = vmatpush1.bf16.msra.mxu0 %v605
    %626 = vmatprep.subr.bf16.mxu0 0
    %627 = vmatpush1.bf16.msra.mxu0 %v606
    %628 = vmatprep.subr.bf16.mxu0 0
    %629 = vmatpush1.bf16.msra.mxu0 %v607
    %630 = vmatprep.subr.bf16.mxu0 0
    %631 = vmatpush1.bf16.msra.mxu0 %v608
    %632 = vmatprep.subr.bf16.mxu0 0
    %633 = vmatpush1.bf16.msra.mxu0 %v609
    %634 = vmatprep.subr.bf16.mxu0 0
    %635 = vmatpush1.bf16.msra.mxu0 0
    %636 = vmatprep.subr.bf16.mxu0 0
    %637 = vmatpush1.bf16.msra.mxu0 0
    %638 = vmatprep.subr.bf16.mxu0 0
    %639 = vmatpush1.bf16.msra.mxu0 0
    %640 = vmatprep.subr.bf16.mxu0 0
    %641 = vmatpush1.bf16.msra.mxu0 0
    %642 = vmatprep.subr.bf16.mxu0 0
    %643 = vmatpush1.bf16.msra.mxu0 0
    %644 = vmatprep.subr.bf16.mxu0 0
    %645 = vmatpush1.bf16.msra.mxu0 0
    %646 = vmatprep.subr.bf16.mxu0 0
    %647 = vmatpush1.bf16.msra.mxu0 0
    %648 = vmatprep.subr.bf16.mxu0 0
    %649 = vmatpush1.bf16.msra.mxu0 0
    %650 = vmatprep.mubr.bf16.mxu0 0
    %651 = vmatmul.mubr.bf16.gmra.mrb[0].mxu0 %v563
    %v652 = vpop.f32.mrb[0].mxu0
    %v653 = vadd.f32 %v568, %v652
    %v654 = vpop.f32.mrb[0].mxu0
    %v655 = vpop.f32.mrb[0].mxu0
    %v656 = vadd.f32 %v568, %v655
    %v657 = vpop.f32.mrb[0].mxu0
    %658 = vdwg.mxu0
    %v659 = vmax.f32 %v653, 0.0
    %v660 = vmax.f32 %v656, 0.0
    %v661 = vld [vmem:[%s2] sm:$0xf]
    %v662 = vld [vmem:[%s2 + $0x4] sm:$0xf]
    %v663 = vld [vmem:[%s13] sm:$0xf]
    %v664 = vld [vmem:[%s13 + $0x4] sm:$0xf]
    %v665 = vld [vmem:[%s13 + $0x8] sm:$0xf]
    %v666 = vld [vmem:[%s13 + $0xc] sm:$0xf]
    %v667 = vld [vmem:[%s13 + $0x10] sm:$0xf]
    %v668 = vld [vmem:[%s13 + $0x14] sm:$0xf]
    %v669 = vld [vmem:[%s13 + $0x18] sm:$0xf]
    %v670 = vld [vmem:[%s13 + $0x1c] sm:$0xf]
    %v671 = vld [vmem:[%s13 + $0x20] sm:$0xf]
    %v672 = vld [vmem:[%s13 + $0x24] sm:$0xf]
    %v673 = vld [vmem:[%s13 + $0x28] sm:$0xf]
    %v674 = vld [vmem:[%s13 + $0x2c] sm:$0xf]
    %v675 = vld [vmem:[%s13 + $0x30] sm:$0xf]
    %v676 = vld [vmem:[%s13 + $0x34] sm:$0xf]
    %v677 = vld [vmem:[%s13 + $0x38] sm:$0xf]
    %v678 = vld [vmem:[%s13 + $0x3c] sm:$0xf]
    %v679 = vld [vmem:[%s14] sm:$0x1]
    %v680 = vld [vmem:[%s15] sm:$0xf]
    %v681 = vld [vmem:[%s15 + $0x4] sm:$0xf]
    %v682 = vld [vmem:[%s15 + $0x8] sm:$0xf]
    %v683 = vld [vmem:[%s15 + $0xc] sm:$0xf]
    %v684 = vld [vmem:[%s15 + $0x10] sm:$0xf]
    %v685 = vld [vmem:[%s15 + $0x14] sm:$0xf]
    %v686 = vld [vmem:[%s15 + $0x18] sm:$0xf]
    %v687 = vld [vmem:[%s15 + $0x1c] sm:$0xf]
    %v688 = vld [vmem:[%s15 + $0x20] sm:$0xf]
    %v689 = vld [vmem:[%s15 + $0x24] sm:$0xf]
    %v690 = vld [vmem:[%s15 + $0x28] sm:$0xf]
    %v691 = vld [vmem:[%s15 + $0x2c] sm:$0xf]
    %v692 = vld [vmem:[%s15 + $0x30] sm:$0xf]
    %v693 = vld [vmem:[%s15 + $0x34] sm:$0xf]
    %v694 = vld [vmem:[%s15 + $0x38] sm:$0xf]
    %v695 = vld [vmem:[%s15 + $0x3c] sm:$0xf]
    %v696 = vld [vmem:[%s16] sm:$0x1]
    %v698 = vlaneseq
    %v699 = vshrl.u32 %v698, 7
    %v700 = vsub.s32 0, %v699
    %v701 = vrot.slane %v679, %v700
    %v705 = vunpack.c.l.b16 %v661
    %v706 = vunpack.c.l.b16 %v662
    %v707 = vpack.c.b16 %v706, %v705
    %v725 = vunpack.c.l.b16 %v663
    %v726 = vunpack.c.l.b16 %v664
    %v727 = vunpack.c.l.b16 %v665
    %v728 = vunpack.c.l.b16 %v666
    %v729 = vunpack.c.l.b16 %v667
    %v730 = vunpack.c.l.b16 %v668
    %v731 = vunpack.c.l.b16 %v669
    %v732 = vunpack.c.l.b16 %v670
    %v733 = vunpack.c.l.b16 %v671
    %v734 = vunpack.c.l.b16 %v672
    %v735 = vunpack.c.l.b16 %v673
    %v736 = vunpack.c.l.b16 %v674
    %v737 = vunpack.c.l.b16 %v675
    %v738 = vunpack.c.l.b16 %v676
    %v739 = vunpack.c.l.b16 %v677
    %v740 = vunpack.c.l.b16 %v678
    %v741 = vpack.c.b16 %v726, %v725
    %v742 = vpack.c.b16 %v728, %v727
    %v743 = vpack.c.b16 %v730, %v729
    %v744 = vpack.c.b16 %v732, %v731
    %v745 = vpack.c.b16 %v734, %v733
    %v746 = vpack.c.b16 %v736, %v735
    %v747 = vpack.c.b16 %v738, %v737
    %v748 = vpack.c.b16 %v740, %v739
    %757 = vmatprep.subr.bf16.mxu0 0
    %758 = vmatpush1.bf16.msra.mxu0 %v741
    %759 = vmatprep.subr.bf16.mxu0 0
    %760 = vmatpush1.bf16.msra.mxu0 %v742
    %761 = vmatprep.subr.bf16.mxu0 0
    %762 = vmatpush1.bf16.msra.mxu0 %v743
    %763 = vmatprep.subr.bf16.mxu0 0
    %764 = vmatpush1.bf16.msra.mxu0 %v744
    %765 = vmatprep.subr.bf16.mxu0 0
    %766 = vmatpush1.bf16.msra.mxu0 %v745
    %767 = vmatprep.subr.bf16.mxu0 0
    %768 = vmatpush1.bf16.msra.mxu0 %v746
    %769 = vmatprep.subr.bf16.mxu0 0
    %770 = vmatpush1.bf16.msra.mxu0 %v747
    %771 = vmatprep.subr.bf16.mxu0 0
    %772 = vmatpush1.bf16.msra.mxu0 %v748
    %773 = vmatprep.subr.bf16.mxu0 0
    %774 = vmatpush1.bf16.msra.mxu0 0
    %775 = vmatprep.subr.bf16.mxu0 0
    %776 = vmatpush1.bf16.msra.mxu0 0
    %777 = vmatprep.subr.bf16.mxu0 0
    %778 = vmatpush1.bf16.msra.mxu0 0
    %779 = vmatprep.subr.bf16.mxu0 0
    %780 = vmatpush1.bf16.msra.mxu0 0
    %781 = vmatprep.subr.bf16.mxu0 0
    %782 = vmatpush1.bf16.msra.mxu0 0
    %783 = vmatprep.subr.bf16.mxu0 0
    %784 = vmatpush1.bf16.msra.mxu0 0
    %785 = vmatprep.subr.bf16.mxu0 0
    %786 = vmatpush1.bf16.msra.mxu0 0
    %787 = vmatprep.subr.bf16.mxu0 0
    %788 = vmatpush1.bf16.msra.mxu0 0
    %789 = vmatprep.mubr.bf16.mxu0 0
    %790 = vmatmul.mubr.bf16.gmra.mrb[0].mxu0 %v707
    %v791 = vpop.f32.mrb[0].mxu0
    %v792 = vadd.f32 %v701, %v791
    %v793 = vpop.f32.mrb[0].mxu0
    %v794 = vpop.f32.mrb[0].mxu0
    %v795 = vadd.f32 %v701, %v794
    %v796 = vpop.f32.mrb[0].mxu0
    %797 = vdwg.mxu0
    %vm798 = vcmp.gt.f32.partialorder %v792, 0.0
    %vm799 = vcmp.gt.f32.partialorder %v795, 0.0
    %v800 = vmin.f32 %v792, 0.0
    %v801 = vmin.f32 %v795, 0.0
    %v802 = vmul.f32 %v800, 1.442695
    %v803 = vpow.pop %v802
    %v804 = vmul.f32 %v801, 1.442695
    %v805 = vpow.pop %v804
    %v806 = vsub.f32 %v803, 1.0
    %v807 = vsub.f32 %v805, 1.0
    %v808 = vsel %vm798, %v792, %v806
    %v809 = vsel %vm799, %v795, %v807
    %v810 = vpack.c.bf16 %v809, %v808
    %v812 = vlaneseq
    %v813 = vshrl.u32 %v812, 7
    %v814 = vsub.s32 0, %v813
    %v815 = vrot.slane %v696, %v814
    %v833 = vunpack.c.l.b16 %v680
    %v834 = vunpack.c.l.b16 %v681
    %v835 = vunpack.c.l.b16 %v682
    %v836 = vunpack.c.l.b16 %v683
    %v837 = vunpack.c.l.b16 %v684
    %v838 = vunpack.c.l.b16 %v685
    %v839 = vunpack.c.l.b16 %v686
    %v840 = vunpack.c.l.b16 %v687
    %v841 = vunpack.c.l.b16 %v688
    %v842 = vunpack.c.l.b16 %v689
    %v843 = vunpack.c.l.b16 %v690
    %v844 = vunpack.c.l.b16 %v691
    %v845 = vunpack.c.l.b16 %v692
    %v846 = vunpack.c.l.b16 %v693
    %v847 = vunpack.c.l.b16 %v694
    %v848 = vunpack.c.l.b16 %v695
    %v849 = vpack.c.b16 %v834, %v833
    %v850 = vpack.c.b16 %v836, %v835
    %v851 = vpack.c.b16 %v838, %v837
    %v852 = vpack.c.b16 %v840, %v839
    %v853 = vpack.c.b16 %v842, %v841
    %v854 = vpack.c.b16 %v844, %v843
    %v855 = vpack.c.b16 %v846, %v845
    %v856 = vpack.c.b16 %v848, %v847
    %865 = vmatprep.subr.bf16.mxu0 0
    %866 = vmatpush1.bf16.msra.mxu0 %v849
    %867 = vmatprep.subr.bf16.mxu0 0
    %868 = vmatpush1.bf16.msra.mxu0 %v850
    %869 = vmatprep.subr.bf16.mxu0 0
    %870 = vmatpush1.bf16.msra.mxu0 %v851
    %871 = vmatprep.subr.bf16.mxu0 0
    %872 = vmatpush1.bf16.msra.mxu0 %v852
    %873 = vmatprep.subr.bf16.mxu0 0
    %874 = vmatpush1.bf16.msra.mxu0 %v853
    %875 = vmatprep.subr.bf16.mxu0 0
    %876 = vmatpush1.bf16.msra.mxu0 %v854
    %877 = vmatprep.subr.bf16.mxu0 0
    %878 = vmatpush1.bf16.msra.mxu0 %v855
    %879 = vmatprep.subr.bf16.mxu0 0
    %880 = vmatpush1.bf16.msra.mxu0 %v856
    %881 = vmatprep.subr.bf16.mxu0 0
    %882 = vmatpush1.bf16.msra.mxu0 0
    %883 = vmatprep.subr.bf16.mxu0 0
    %884 = vmatpush1.bf16.msra.mxu0 0
    %885 = vmatprep.subr.bf16.mxu0 0
    %886 = vmatpush1.bf16.msra.mxu0 0
    %887 = vmatprep.subr.bf16.mxu0 0
    %888 = vmatpush1.bf16.msra.mxu0 0
    %889 = vmatprep.subr.bf16.mxu0 0
    %890 = vmatpush1.bf16.msra.mxu0 0
    %891 = vmatprep.subr.bf16.mxu0 0
    %892 = vmatpush1.bf16.msra.mxu0 0
    %893 = vmatprep.subr.bf16.mxu0 0
    %894 = vmatpush1.bf16.msra.mxu0 0
    %895 = vmatprep.subr.bf16.mxu0 0
    %896 = vmatpush1.bf16.msra.mxu0 0
    %897 = vmatprep.mubr.bf16.mxu0 0
    %898 = vmatmul.mubr.bf16.gmra.mrb[0].mxu0 %v810
    %v899 = vpop.f32.mrb[0].mxu0
    %v900 = vadd.f32 %v815, %v899
    %v901 = vpop.f32.mrb[0].mxu0
    %v902 = vpop.f32.mrb[0].mxu0
    %v903 = vadd.f32 %v815, %v902
    %v904 = vpop.f32.mrb[0].mxu0
    %905 = vdwg.mxu0
    %vm906 = vcmp.gt.f32.partialorder %v900, 0.0
    %vm907 = vcmp.gt.f32.partialorder %v903, 0.0
    %v908 = vmin.f32 %v900, 0.0
    %v909 = vmin.f32 %v903, 0.0
    %v910 = vmul.f32 %v908, 1.442695
    %v911 = vpow.pop %v910
    %v912 = vmul.f32 %v909, 1.442695
    %v913 = vpow.pop %v912
    %v914 = vsub.f32 %v911, 1.0
    %v915 = vsub.f32 %v913, 1.0
    %v916 = vsel %vm906, %v900, %v914
    %v917 = vsel %vm907, %v903, %v915
    %v918 = vld [vmem:[%s1] sm:$0xf]
    %v919 = vld [vmem:[%s1 + $0x4] sm:$0xf]
    %v920 = vld [vmem:[%s17] sm:$0xf]
    %v921 = vld [vmem:[%s17 + $0x4] sm:$0xf]
    %v922 = vld [vmem:[%s17 + $0x8] sm:$0xf]
    %v923 = vld [vmem:[%s17 + $0xc] sm:$0xf]
    %v924 = vld [vmem:[%s17 + $0x10] sm:$0xf]
    %v925 = vld [vmem:[%s17 + $0x14] sm:$0xf]
    %v926 = vld [vmem:[%s17 + $0x18] sm:$0xf]
    %v927 = vld [vmem:[%s17 + $0x1c] sm:$0xf]
    %v928 = vld [vmem:[%s17 + $0x20] sm:$0xf]
    %v929 = vld [vmem:[%s17 + $0x24] sm:$0xf]
    %v930 = vld [vmem:[%s17 + $0x28] sm:$0xf]
    %v931 = vld [vmem:[%s17 + $0x2c] sm:$0xf]
    %v932 = vld [vmem:[%s17 + $0x30] sm:$0xf]
    %v933 = vld [vmem:[%s17 + $0x34] sm:$0xf]
    %v934 = vld [vmem:[%s17 + $0x38] sm:$0xf]
    %v935 = vld [vmem:[%s17 + $0x3c] sm:$0xf]
    %v936 = vld [vmem:[%s18] sm:$0x1]
    %v937 = vld [vmem:[%s19] sm:$0xf]
    %v938 = vld [vmem:[%s19 + $0x4] sm:$0xf]
    %v939 = vld [vmem:[%s19 + $0x8] sm:$0xf]
    %v940 = vld [vmem:[%s19 + $0xc] sm:$0xf]
    %v941 = vld [vmem:[%s19 + $0x10] sm:$0xf]
    %v942 = vld [vmem:[%s19 + $0x14] sm:$0xf]
    %v943 = vld [vmem:[%s19 + $0x18] sm:$0xf]
    %v944 = vld [vmem:[%s19 + $0x1c] sm:$0xf]
    %v945 = vld [vmem:[%s19 + $0x20] sm:$0xf]
    %v946 = vld [vmem:[%s19 + $0x24] sm:$0xf]
    %v947 = vld [vmem:[%s19 + $0x28] sm:$0xf]
    %v948 = vld [vmem:[%s19 + $0x2c] sm:$0xf]
    %v949 = vld [vmem:[%s19 + $0x30] sm:$0xf]
    %v950 = vld [vmem:[%s19 + $0x34] sm:$0xf]
    %v951 = vld [vmem:[%s19 + $0x38] sm:$0xf]
    %v952 = vld [vmem:[%s19 + $0x3c] sm:$0xf]
    %v953 = vld [vmem:[%s20] sm:$0x1]
    %v955 = vlaneseq
    %v956 = vshrl.u32 %v955, 7
    %v957 = vsub.s32 0, %v956
    %v958 = vrot.slane %v936, %v957
    %v962 = vunpack.c.l.b16 %v918
    %v963 = vunpack.c.l.b16 %v919
    %v964 = vpack.c.b16 %v963, %v962
    %v982 = vunpack.c.l.b16 %v920
    %v983 = vunpack.c.l.b16 %v921
    %v984 = vunpack.c.l.b16 %v922
    %v985 = vunpack.c.l.b16 %v923
    %v986 = vunpack.c.l.b16 %v924
    %v987 = vunpack.c.l.b16 %v925
    %v988 = vunpack.c.l.b16 %v926
    %v989 = vunpack.c.l.b16 %v927
    %v990 = vunpack.c.l.b16 %v928
    %v991 = vunpack.c.l.b16 %v929
    %v992 = vunpack.c.l.b16 %v930
    %v993 = vunpack.c.l.b16 %v931
    %v994 = vunpack.c.l.b16 %v932
    %v995 = vunpack.c.l.b16 %v933
    %v996 = vunpack.c.l.b16 %v934
    %v997 = vunpack.c.l.b16 %v935
    %v998 = vpack.c.b16 %v983, %v982
    %v999 = vpack.c.b16 %v985, %v984
    %v1000 = vpack.c.b16 %v987, %v986
    %v1001 = vpack.c.b16 %v989, %v988
    %v1002 = vpack.c.b16 %v991, %v990
    %v1003 = vpack.c.b16 %v993, %v992
    %v1004 = vpack.c.b16 %v995, %v994
    %v1005 = vpack.c.b16 %v997, %v996
    %1014 = vmatprep.subr.bf16.mxu0 0
    %1015 = vmatpush1.bf16.msra.mxu0 %v998
    %1016 = vmatprep.subr.bf16.mxu0 0
    %1017 = vmatpush1.bf16.msra.mxu0 %v999
    %1018 = vmatprep.subr.bf16.mxu0 0
    %1019 = vmatpush1.bf16.msra.mxu0 %v1000
    %1020 = vmatprep.subr.bf16.mxu0 0
    %1021 = vmatpush1.bf16.msra.mxu0 %v1001
    %1022 = vmatprep.subr.bf16.mxu0 0
    %1023 = vmatpush1.bf16.msra.mxu0 %v1002
    %1024 = vmatprep.subr.bf16.mxu0 0
    %1025 = vmatpush1.bf16.msra.mxu0 %v1003
    %1026 = vmatprep.subr.bf16.mxu0 0
    %1027 = vmatpush1.bf16.msra.mxu0 %v1004
    %1028 = vmatprep.subr.bf16.mxu0 0
    %1029 = vmatpush1.bf16.msra.mxu0 %v1005
    %1030 = vmatprep.subr.bf16.mxu0 0
    %1031 = vmatpush1.bf16.msra.mxu0 0
    %1032 = vmatprep.subr.bf16.mxu0 0
    %1033 = vmatpush1.bf16.msra.mxu0 0
    %1034 = vmatprep.subr.bf16.mxu0 0
    %1035 = vmatpush1.bf16.msra.mxu0 0
    %1036 = vmatprep.subr.bf16.mxu0 0
    %1037 = vmatpush1.bf16.msra.mxu0 0
    %1038 = vmatprep.subr.bf16.mxu0 0
    %1039 = vmatpush1.bf16.msra.mxu0 0
    %1040 = vmatprep.subr.bf16.mxu0 0
    %1041 = vmatpush1.bf16.msra.mxu0 0
    %1042 = vmatprep.subr.bf16.mxu0 0
    %1043 = vmatpush1.bf16.msra.mxu0 0
    %1044 = vmatprep.subr.bf16.mxu0 0
    %1045 = vmatpush1.bf16.msra.mxu0 0
    %1046 = vmatprep.mubr.bf16.mxu0 0
    %1047 = vmatmul.mubr.bf16.gmra.mrb[0].mxu0 %v964
    %v1048 = vpop.f32.mrb[0].mxu0
    %v1049 = vadd.f32 %v958, %v1048
    %v1050 = vpop.f32.mrb[0].mxu0
    %v1051 = vpop.f32.mrb[0].mxu0
    %v1052 = vadd.f32 %v958, %v1051
    %v1053 = vpop.f32.mrb[0].mxu0
    %1054 = vdwg.mxu0
    %vm1055 = vcmp.gt.f32.partialorder %v1049, 0.0
    %vm1056 = vcmp.gt.f32.partialorder %v1052, 0.0
    %v1057 = vmin.f32 %v1049, 0.0
    %v1058 = vmin.f32 %v1052, 0.0
    %v1059 = vmul.f32 %v1057, 1.442695
    %v1060 = vpow.pop %v1059
    %v1061 = vmul.f32 %v1058, 1.442695
    %v1062 = vpow.pop %v1061
    %v1063 = vsub.f32 %v1060, 1.0
    %v1064 = vsub.f32 %v1062, 1.0
    %v1065 = vsel %vm1055, %v1049, %v1063
    %v1066 = vsel %vm1056, %v1052, %v1064
    %v1067 = vpack.c.bf16 %v1066, %v1065
    %v1069 = vlaneseq
    %v1070 = vshrl.u32 %v1069, 7
    %v1071 = vsub.s32 0, %v1070
    %v1072 = vrot.slane %v953, %v1071
    %v1090 = vunpack.c.l.b16 %v937
    %v1091 = vunpack.c.l.b16 %v938
    %v1092 = vunpack.c.l.b16 %v939
    %v1093 = vunpack.c.l.b16 %v940
    %v1094 = vunpack.c.l.b16 %v941
    %v1095 = vunpack.c.l.b16 %v942
    %v1096 = vunpack.c.l.b16 %v943
    %v1097 = vunpack.c.l.b16 %v944
    %v1098 = vunpack.c.l.b16 %v945
    %v1099 = vunpack.c.l.b16 %v946
    %v1100 = vunpack.c.l.b16 %v947
    %v1101 = vunpack.c.l.b16 %v948
    %v1102 = vunpack.c.l.b16 %v949
    %v1103 = vunpack.c.l.b16 %v950
    %v1104 = vunpack.c.l.b16 %v951
    %v1105 = vunpack.c.l.b16 %v952
    %v1106 = vpack.c.b16 %v1091, %v1090
    %v1107 = vpack.c.b16 %v1093, %v1092
    %v1108 = vpack.c.b16 %v1095, %v1094
    %v1109 = vpack.c.b16 %v1097, %v1096
    %v1110 = vpack.c.b16 %v1099, %v1098
    %v1111 = vpack.c.b16 %v1101, %v1100
    %v1112 = vpack.c.b16 %v1103, %v1102
    %v1113 = vpack.c.b16 %v1105, %v1104
    %1122 = vmatprep.subr.bf16.mxu0 0
    %1123 = vmatpush1.bf16.msra.mxu0 %v1106
    %1124 = vmatprep.subr.bf16.mxu0 0
    %1125 = vmatpush1.bf16.msra.mxu0 %v1107
    %1126 = vmatprep.subr.bf16.mxu0 0
    %1127 = vmatpush1.bf16.msra.mxu0 %v1108
    %1128 = vmatprep.subr.bf16.mxu0 0
    %1129 = vmatpush1.bf16.msra.mxu0 %v1109
    %1130 = vmatprep.subr.bf16.mxu0 0
    %1131 = vmatpush1.bf16.msra.mxu0 %v1110
    %1132 = vmatprep.subr.bf16.mxu0 0
    %1133 = vmatpush1.bf16.msra.mxu0 %v1111
    %1134 = vmatprep.subr.bf16.mxu0 0
    %1135 = vmatpush1.bf16.msra.mxu0 %v1112
    %1136 = vmatprep.subr.bf16.mxu0 0
    %1137 = vmatpush1.bf16.msra.mxu0 %v1113
    %1138 = vmatprep.subr.bf16.mxu0 0
    %1139 = vmatpush1.bf16.msra.mxu0 0
    %1140 = vmatprep.subr.bf16.mxu0 0
    %1141 = vmatpush1.bf16.msra.mxu0 0
    %1142 = vmatprep.subr.bf16.mxu0 0
    %1143 = vmatpush1.bf16.msra.mxu0 0
    %1144 = vmatprep.subr.bf16.mxu0 0
    %1145 = vmatpush1.bf16.msra.mxu0 0
    %1146 = vmatprep.subr.bf16.mxu0 0
    %1147 = vmatpush1.bf16.msra.mxu0 0
    %1148 = vmatprep.subr.bf16.mxu0 0
    %1149 = vmatpush1.bf16.msra.mxu0 0
    %1150 = vmatprep.subr.bf16.mxu0 0
    %1151 = vmatpush1.bf16.msra.mxu0 0
    %1152 = vmatprep.subr.bf16.mxu0 0
    %1153 = vmatpush1.bf16.msra.mxu0 0
    %1154 = vmatprep.mubr.bf16.mxu0 0
    %1155 = vmatmul.mubr.bf16.gmra.mrb[0].mxu0 %v1067
    %v1156 = vpop.f32.mrb[0].mxu0
    %v1157 = vadd.f32 %v1072, %v1156
    %v1158 = vpop.f32.mrb[0].mxu0
    %v1159 = vpop.f32.mrb[0].mxu0
    %v1160 = vadd.f32 %v1072, %v1159
    %v1161 = vpop.f32.mrb[0].mxu0
    %1162 = vdwg.mxu0
    %vm1163 = vcmp.gt.f32.partialorder %v1157, 0.0
    %vm1164 = vcmp.gt.f32.partialorder %v1160, 0.0
    %v1165 = vmin.f32 %v1157, 0.0
    %v1166 = vmin.f32 %v1160, 0.0
    %v1167 = vmul.f32 %v1165, 1.442695
    %v1168 = vpow.pop %v1167
    %v1169 = vmul.f32 %v1166, 1.442695
    %v1170 = vpow.pop %v1169
    %v1171 = vsub.f32 %v1168, 1.0
    %v1172 = vsub.f32 %v1170, 1.0
    %v1173 = vsel %vm1163, %v1157, %v1171
    %v1174 = vsel %vm1164, %v1160, %v1172
    %v1175 = vadd.f32 %v659, %v916
    %v1176 = vadd.f32 %v660, %v917
    %v1177 = vadd.f32 %v1175, %v1173
    %v1178 = vadd.f32 %v1176, %v1174
    %v1179 = vsub.f32 0.0, %v1177
    %v1180 = vsub.f32 0.0, %v1178
    %v1181 = vmax.f32 %v1179, 0.0
    %v1182 = vmax.f32 %v1180, 0.0
    %v1183 = vand.u32 2147483647, %v1179
    %v1184 = vand.u32 2147483647, %v1180
    %v1185 = vsub.f32 0.0, %v1183
    %v1186 = vsub.f32 0.0, %v1184
    %v1187 = vmul.f32 %v1185, 1.442695
    %v1188 = vpow.pop %v1187
    %v1189 = vmul.f32 %v1186, 1.442695
    %v1190 = vpow.pop %v1189
    %v1191 = vadd.f32 %v1188, 1.0
    %v1192 = vadd.f32 %v1190, 1.0
    %v1193 = vlog2.pop %v1191
    %v1194 = vmul.f32 %v1193, 0.6931472
    %v1195 = vlog2.pop %v1192
    %v1196 = vmul.f32 %v1195, 0.6931472
    %v1197 = vadd.f32 %v1181, %v1194
    %v1198 = vadd.f32 %v1182, %v1196
    %v1199 = vsub.f32 0.0, %v1197
    %v1200 = vsub.f32 0.0, %v1198
    %v1201 = vmul.f32 %v1199, 1.442695
    %v1202 = vpow.pop %v1201
    %v1203 = vmul.f32 %v1200, 1.442695
    %v1204 = vpow.pop %v1203
    %v1205 = vadd.f32 %v1202, 1e-08
    %v1206 = vadd.f32 %v1204, 1e-08
    %v1207 = vlog2.pop %v1205
    %v1208 = vmul.f32 %v1207, 0.6931472
    %v1209 = vlog2.pop %v1206
    %v1210 = vmul.f32 %v1209, 0.6931472
    %s1211 = sld [smem:[#allocation2]]
    %s1212 = smul.f32 %s1211, 2.0
    %v1213 = vstv %s1212
    %v1214 = vadd.f32 %v659, %v1213
    %v1215 = vadd.f32 %v660, %v1213
    %v1216 = vsub.f32 0.0, %v1214
    %v1217 = vsub.f32 0.0, %v1215
    %v1218 = vmax.f32 %v1216, 0.0
    %v1219 = vmax.f32 %v1217, 0.0
    %v1220 = vand.u32 2147483647, %v1216
    %v1221 = vand.u32 2147483647, %v1217
    %v1222 = vsub.f32 0.0, %v1220
    %v1223 = vsub.f32 0.0, %v1221
    %v1224 = vmul.f32 %v1222, 1.442695
    %v1225 = vpow.pop %v1224
    %v1226 = vmul.f32 %v1223, 1.442695
    %v1227 = vpow.pop %v1226
    %v1228 = vadd.f32 %v1225, 1.0
    %v1229 = vadd.f32 %v1227, 1.0
    %v1230 = vlog2.pop %v1228
    %v1231 = vmul.f32 %v1230, 0.6931472
    %v1232 = vlog2.pop %v1229
    %v1233 = vmul.f32 %v1232, 0.6931472
    %v1234 = vadd.f32 %v1218, %v1231
    %v1235 = vadd.f32 %v1219, %v1233
    %v1236 = vsub.f32 0.0, %v1234
    %v1237 = vsub.f32 0.0, %v1235
    %v1238 = vmul.f32 %v1236, 1.442695
    %v1239 = vpow.pop %v1238
    %v1240 = vmul.f32 %v1237, 1.442695
    %v1241 = vpow.pop %v1240
    %v1242 = vadd.f32 %v1239, 1e-08
    %v1243 = vadd.f32 %v1241, 1e-08
    %v1244 = vlog2.pop %v1242
    %v1245 = vmul.f32 %v1244, 0.6931472
    %v1246 = vlog2.pop %v1243
    %v1247 = vmul.f32 %v1246, 0.6931472
    %v1248 = vsub.f32 %v1208, %v1245
    %v1249 = vsub.f32 %v1210, %v1247
    %1252 = vrot.lane.b32.xlu0 %v916, 8
    %v1253 = vpop.permute.xlu0 %1252
    %1254 = vrot.lane.b32.xlu0 %v917, 8
    %v1255 = vpop.permute.xlu0 %1254
    %1260 = vrot.lane.b32.xlu0 %v1208, 16
    %v1261 = vpop.permute.xlu0 %1260
    %1262 = vrot.lane.b32.xlu0 %v1210, 16
    %v1263 = vpop.permute.xlu0 %1262
    %1268 = vrot.lane.b32.xlu0 %v1245, 24
    %v1269 = vpop.permute.xlu0 %1268
    %1270 = vrot.lane.b32.xlu0 %v1247, 24
    %v1271 = vpop.permute.xlu0 %1270
    %1276 = vrot.lane.b32.xlu0 %v1248, 32
    %v1277 = vpop.permute.xlu0 %1276
    %1278 = vrot.lane.b32.xlu0 %v1249, 32
    %v1279 = vpop.permute.xlu0 %1278
    %v1282 = vsel %vm244, %v659, %v1253
    %v1283 = vsel %vm244, %v660, %v1255
    %vm1284 = vcmask 130048
    %v1285 = vsel %vm1284, %v1282, %v1261
    %v1286 = vsel %vm1284, %v1283, %v1263
    %vm1287 = vcmask 195584
    %v1288 = vsel %vm1287, %v1285, %v1269
    %v1289 = vsel %vm1287, %v1286, %v1271
    %vm1290 = vcmask 261120
    %v1291 = vsel %vm1290, %v1288, %v1277
    %v1292 = vsel %vm1290, %v1289, %v1279
    %vm1293 = vcmask 326656
    %v1294 = vsel %vm1293, %v1291, 0.0
    %v1295 = vsel %vm1293, %v1292, 0.0
    %1296 = vst [vmem:[#allocation3] sm:$0xff] %v1294
    %1297 = vst [vmem:[#allocation3 + $0x8] sm:$0xff] %v1295
    // Predicated region
    $region90: #{tpu_custom_call.1} parent=1 // pred_check
      _
    $region91: #{tpu_custom_call.1} parent=1 // pred_check_branch
      %1299 = sbr.rel (0) target = $region93
    $region92: #{tpu_custom_call.1} parent=1 // pred_region
      %s1301 = ssub.s32 256, 256
      %1302 = vsyncadd [#allocation4], %s1301
      %s1303 = sshll.u32 [#allocation3], 4
      %s1304 = int_to_ptr.vmem [resolvable:$true] %s1303
      %1309 = dma.vmem_to_hbm [thread:$0]  %s1304, 256, %s22, [#allocation4], 128, 128, 8
    $region93: #{tpu_custom_call.1} parent=1 // pred_fallthru
      _
    // Predicated region
    $region94: #{tpu_custom_call.1} parent=1 // pred_check
      _
    $region95: #{tpu_custom_call.1} parent=1 // pred_check_branch
      %1311 = sbr.rel (0) target = $region97
    $region96: #{tpu_custom_call.1} parent=1 // pred_region
      %1312 = dma.done [#allocation4], 256
    $region97: #{tpu_custom_call.1} parent=1 // pred_fallthru
      _
    %1313 = vsyncpa [#allocation4], 1

</llo_original>
